<compile_context>
chip_gen: v6e
topology: v6e:2x2x1
jax: 0.10.0
libtpu: 0.0.40
codegen_flags: <defaults>
</compile_context>

<pallas_src>
import numpy as np
import jax
import jax.numpy as jnp
from jax import lax
from jax.experimental import pallas as pl
from jax.experimental.pallas import tpu as pltpu

_EPS = 1e-5


@jax.jit
def basic_block_forward(x_nchw, w1, w2):
    """Forward of BasicBlock (residual forces in_channels == out_channels).

    x_nchw : (N, C, H, W)   float32
    w1, w2 : (C, C, 3, 3)   Conv2d weights (PyTorch layout, bias=False)
    returns: (N, C, H, W)   float32
    """
    N, C, H, W = x_nchw.shape
    assert w1.shape == (C, C, 3, 3) and w2.shape == (C, C, 3, 3)
    HW = H * W

    # NCHW -> NHWC (channels on lanes).  No jnp.pad: the reflect halo is built in-kernel,
    # so the input makes exactly one HBM->VMEM trip.
    x_nhwc = jnp.transpose(x_nchw, (0, 2, 3, 1)).astype(jnp.float32)

    # (C_out, C_in, kh, kw) -> (kh, kw, C_in, C_out) -> (9*C_in, C_out), bf16.
    # Row block t = kh*3 + kw matches the tap order of the in-kernel lane concat.
    w1_cat = jnp.transpose(w1, (2, 3, 1, 0)).reshape(9 * C, C).astype(jnp.bfloat16)
    w2_cat = jnp.transpose(w2, (2, 3, 1, 0)).reshape(9 * C, C).astype(jnp.bfloat16)

    def kernel(x_ref, w1_ref, w2_ref, o_ref):
        # x_ref : (1, H, W, C)   unpadded sample, f32 (also the residual)
        # w*_ref: (9*C, C)       K-concatenated tap weights, bf16
        # o_ref : (1, H*W, C)    lane-dense output slab, f32
        x = x_ref[0]                                                   # (H, W, C) f32

        def conv3x3(a, w_ref):
            # 3x3 reflect-pad conv as ONE bf16 MXU matmul with K = 9*C.
            # Vertical reflect halo: leading-axis concat (untiled dim) -> cheap.
            av = jnp.concatenate([a[1:2], a, a[H - 2:H - 1]], axis=0)  # (H+2, W, C)
            # Only two sublane-shifted slabs (kw=0 / kw=2); center (kw=1) is `av` itself.
            lf = jnp.concatenate([av[:, 1:2], av[:, :W - 1]], axis=1)  # kw = 0
            rt = jnp.concatenate([av[:, 1:], av[:, W - 2:W - 1]], axis=1)  # kw = 2
            slabs = (lf, av, rt)
            # kh shifts are leading-axis views (free); (H,W,C)->(HW,C) is a free collapse
            # (W multiple of 8, C multiple of 128).  Lane-dim concat is 128-aligned.
            xcat = jnp.concatenate(
                [slabs[kw][kh:kh + H].reshape(HW, C).astype(jnp.bfloat16)
                 for kh in range(3) for kw in range(3)],
                axis=-1)                                               # (HW, 9*C) bf16
            return jnp.dot(xcat, w_ref[...],
                           preferred_element_type=jnp.float32)        # (HW, C) f32

        def inst_norm(y):
            # One-pass stats (biased var, eps=1e-5, affine=False) in f32.
            m = jnp.mean(y, axis=0, keepdims=True)
            m2 = jnp.mean(y * y, axis=0, keepdims=True)
            return (y - m) * lax.rsqrt(m2 - m * m + _EPS)

        # conv_block1: conv + IN + ReLU
        h1 = jnp.maximum(inst_norm(conv3x3(x, w1_ref)), 0.0)          # (HW, C) f32
        # conv_block2: conv + IN
        y = inst_norm(conv3x3(h1.reshape(H, W, C), w2_ref))           # (HW, C) f32
        # residual add + ReLU; residual is an aligned view of the unpadded input block.
        o_ref[0] = jnp.maximum(y + x.reshape(HW, C), 0.0)
        # Dropout(0.5) is identity at inference.
        # TODO(synk): training-mode dropout (pltpu.prng_seed + pltpu.stateful_bernoulli, 2x scale).

    out_flat = pl.pallas_call(
        kernel,
        out_shape=jax.ShapeDtypeStruct((N, HW, C), jnp.float32),
        grid=(N,),
        in_specs=[
            pl.BlockSpec((1, H, W, C), lambda n: (n, 0, 0, 0)),   # per-sample, unpadded
            pl.BlockSpec((9 * C, C), lambda n: (0, 0)),           # conv1 weights (constant)
            pl.BlockSpec((9 * C, C), lambda n: (0, 0)),           # conv2 weights (constant)
        ],
        out_specs=pl.BlockSpec((1, HW, C), lambda n: (n, 0, 0)),  # lane-dense store
        compiler_params=pltpu.CompilerParams(
            dimension_semantics=("parallel",)),                   # megacore on v7x
    )(x_nhwc, w1_cat, w2_cat)

    return jnp.transpose(out_flat.reshape(N, H, W, C), (0, 3, 1, 2))


# ------------------------------ numpy reference --------------------------------

def _reference_numpy(x, w1, w2, eps=_EPS):
    """Pure-numpy PyTorch-semantics reference (f32, eval-mode dropout)."""
    x = np.asarray(x, np.float32)

    def conv3x3_reflect(a, w):
        n, ci, h, wdt = a.shape
        co = w.shape[0]
        ap = np.pad(a, ((0, 0), (0, 0), (1, 1), (1, 1)), mode="reflect")
        out = np.zeros((n, co, h, wdt), np.float32)
        for kh in range(3):
            for kw in range(3):
                patch = ap[:, :, kh:kh + h, kw:kw + wdt]          # (n, ci, h, w)
                wk = np.asarray(w[:, :, kh, kw], np.float32)      # (co, ci)
                out += np.tensordot(wk, patch, axes=([1], [1])).transpose(1, 0, 2, 3)
        return out

    def inst_norm(a):
        mean = a.mean(axis=(2, 3), keepdims=True)
        var = a.var(axis=(2, 3), keepdims=True)                   # biased, like PyTorch
        return (a - mean) / np.sqrt(var + eps)

    h = np.maximum(inst_norm(conv3x3_reflect(x, np.asarray(w1))), 0.0)
    y = inst_norm(conv3x3_reflect(h, np.asarray(w2))) + x
    return np.maximum(y, 0.0)                                     # Dropout: identity (eval)


# ---------------------------------- main ----------------------------------------

if __name__ == "__main__":
    # Residual requires in_channels == out_channels; C=128 keeps the channel (lane)
    # dimension fully dense on every load/store while staying small overall.
    N, C, H, W = 2, 128, 16, 16

    key = jax.random.PRNGKey(0)
    kx, k1, k2 = jax.random.split(key, 3)
    x = jax.random.normal(kx, (N, C, H, W), jnp.float32)
    w1 = 0.05 * jax.random.normal(k1, (C, C, 3, 3), jnp.float32)
    w2 = 0.05 * jax.random.normal(k2, (C, C, 3, 3), jnp.float32)

    out = jax.block_until_ready(basic_block_forward(x, w1, w2))

    ref = _reference_numpy(x, w1, w2)
    # Tolerance covers the explicit bf16 MXU operands (f32 accumulation); values are
    # O(1) after InstanceNorm + residual + ReLU.
    np.testing.assert_allclose(np.asarray(out), ref, rtol=5e-2, atol=5e-2)

    print("KERNEL_OK")
</pallas_src>

<mosaic_0001>
module attributes {stable_mosaic.version = 11 : i64} {
  func.func @kernel(%arg0: i32, %arg1: memref<1x16x16x128xf32, #tpu.memory_space<vmem>>, %arg2: memref<1152x128xbf16, #tpu.memory_space<vmem>>, %arg3: memref<1152x128xbf16, #tpu.memory_space<vmem>>, %arg4: memref<1x256x128xf32, #tpu.memory_space<vmem>>) attributes {dimension_semantics = [#tpu.dimension_semantics<parallel>], iteration_bounds = array<i64: 2>, scalar_prefetch = 0 : i64, scratch_operands = 0 : i64, tpu.core_type = #tpu.core_type<tc>, window_params = [{transform_indices = @transform_0, window_bounds = array<i64: 1, 16, 16, 128>}, {pipeline_mode = #tpu.pipeline_mode<synchronous>, transform_indices = @transform_1, window_bounds = array<i64: 1152, 128>}, {pipeline_mode = #tpu.pipeline_mode<synchronous>, transform_indices = @transform_2, window_bounds = array<i64: 1152, 128>}, {transform_indices = @transform_3, window_bounds = array<i64: 1, 256, 128>}]} {
    %c0 = arith.constant 0 : index
    %c0_0 = arith.constant 0 : index
    %c0_1 = arith.constant 0 : index
    %c0_2 = arith.constant 0 : index
    %0 = vector.load %arg1[%c0, %c0_0, %c0_1, %c0_2] : memref<1x16x16x128xf32, #tpu.memory_space<vmem>>, vector<1x16x16x128xf32>
    %1 = vector.shape_cast %0 : vector<1x16x16x128xf32> to vector<16x16x128xf32>
    %2 = vector.extract_strided_slice %1 {offsets = [1, 0, 0], sizes = [1, 16, 128], strides = [1, 1, 1]} : vector<16x16x128xf32> to vector<1x16x128xf32>
    %3 = vector.extract_strided_slice %1 {offsets = [14, 0, 0], sizes = [1, 16, 128], strides = [1, 1, 1]} : vector<16x16x128xf32> to vector<1x16x128xf32>
    %4 = tpu.concatenate %2, %1, %3 in 0 : vector<1x16x128xf32>, vector<16x16x128xf32>, vector<1x16x128xf32> -> vector<18x16x128xf32>
    %5 = vector.extract_strided_slice %4 {offsets = [0, 1, 0], sizes = [18, 1, 128], strides = [1, 1, 1]} : vector<18x16x128xf32> to vector<18x1x128xf32>
    %6 = vector.extract_strided_slice %4 {offsets = [0, 0, 0], sizes = [18, 15, 128], strides = [1, 1, 1]} : vector<18x16x128xf32> to vector<18x15x128xf32>
    %7 = tpu.concatenate %5, %6 in 1 : vector<18x1x128xf32>, vector<18x15x128xf32> -> vector<18x16x128xf32>
    %8 = vector.extract_strided_slice %4 {offsets = [0, 1, 0], sizes = [18, 15, 128], strides = [1, 1, 1]} : vector<18x16x128xf32> to vector<18x15x128xf32>
    %9 = vector.extract_strided_slice %4 {offsets = [0, 14, 0], sizes = [18, 1, 128], strides = [1, 1, 1]} : vector<18x16x128xf32> to vector<18x1x128xf32>
    %10 = tpu.concatenate %8, %9 in 1 : vector<18x15x128xf32>, vector<18x1x128xf32> -> vector<18x16x128xf32>
    %11 = vector.extract_strided_slice %7 {offsets = [0, 0, 0], sizes = [16, 16, 128], strides = [1, 1, 1]} : vector<18x16x128xf32> to vector<16x16x128xf32>
    %12 = vector.shape_cast %11 : vector<16x16x128xf32> to vector<256x128xf32>
    %13 = arith.truncf %12 : vector<256x128xf32> to vector<256x128xbf16>
    %14 = vector.extract_strided_slice %4 {offsets = [0, 0, 0], sizes = [16, 16, 128], strides = [1, 1, 1]} : vector<18x16x128xf32> to vector<16x16x128xf32>
    %15 = vector.shape_cast %14 : vector<16x16x128xf32> to vector<256x128xf32>
    %16 = arith.truncf %15 : vector<256x128xf32> to vector<256x128xbf16>
    %17 = vector.extract_strided_slice %10 {offsets = [0, 0, 0], sizes = [16, 16, 128], strides = [1, 1, 1]} : vector<18x16x128xf32> to vector<16x16x128xf32>
    %18 = vector.shape_cast %17 : vector<16x16x128xf32> to vector<256x128xf32>
    %19 = arith.truncf %18 : vector<256x128xf32> to vector<256x128xbf16>
    %20 = vector.extract_strided_slice %7 {offsets = [1, 0, 0], sizes = [16, 16, 128], strides = [1, 1, 1]} : vector<18x16x128xf32> to vector<16x16x128xf32>
    %21 = vector.shape_cast %20 : vector<16x16x128xf32> to vector<256x128xf32>
    %22 = arith.truncf %21 : vector<256x128xf32> to vector<256x128xbf16>
    %23 = vector.extract_strided_slice %4 {offsets = [1, 0, 0], sizes = [16, 16, 128], strides = [1, 1, 1]} : vector<18x16x128xf32> to vector<16x16x128xf32>
    %24 = vector.shape_cast %23 : vector<16x16x128xf32> to vector<256x128xf32>
    %25 = arith.truncf %24 : vector<256x128xf32> to vector<256x128xbf16>
    %26 = vector.extract_strided_slice %10 {offsets = [1, 0, 0], sizes = [16, 16, 128], strides = [1, 1, 1]} : vector<18x16x128xf32> to vector<16x16x128xf32>
    %27 = vector.shape_cast %26 : vector<16x16x128xf32> to vector<256x128xf32>
    %28 = arith.truncf %27 : vector<256x128xf32> to vector<256x128xbf16>
    %29 = vector.extract_strided_slice %7 {offsets = [2, 0, 0], sizes = [16, 16, 128], strides = [1, 1, 1]} : vector<18x16x128xf32> to vector<16x16x128xf32>
    %30 = vector.shape_cast %29 : vector<16x16x128xf32> to vector<256x128xf32>
    %31 = arith.truncf %30 : vector<256x128xf32> to vector<256x128xbf16>
    %32 = vector.extract_strided_slice %4 {offsets = [2, 0, 0], sizes = [16, 16, 128], strides = [1, 1, 1]} : vector<18x16x128xf32> to vector<16x16x128xf32>
    %33 = vector.shape_cast %32 : vector<16x16x128xf32> to vector<256x128xf32>
    %34 = arith.truncf %33 : vector<256x128xf32> to vector<256x128xbf16>
    %35 = vector.extract_strided_slice %10 {offsets = [2, 0, 0], sizes = [16, 16, 128], strides = [1, 1, 1]} : vector<18x16x128xf32> to vector<16x16x128xf32>
    %36 = vector.shape_cast %35 : vector<16x16x128xf32> to vector<256x128xf32>
    %37 = arith.truncf %36 : vector<256x128xf32> to vector<256x128xbf16>
    %38 = tpu.concatenate %13, %16, %19, %22, %25, %28, %31, %34, %37 in 1 : vector<256x128xbf16>, vector<256x128xbf16>, vector<256x128xbf16>, vector<256x128xbf16>, vector<256x128xbf16>, vector<256x128xbf16>, vector<256x128xbf16>, vector<256x128xbf16>, vector<256x128xbf16> -> vector<256x1152xbf16>
    %c0_3 = arith.constant 0 : index
    %c0_4 = arith.constant 0 : index
    %39 = vector.load %arg2[%c0_3, %c0_4] : memref<1152x128xbf16, #tpu.memory_space<vmem>>, vector<1152x128xbf16>
    %cst = arith.constant dense<0.000000e+00> : vector<256x128xf32>
    %40 = tpu.matmul %38, %39, %cst {dimension_numbers = #tpu.dot_dimension_numbers<[1], [0], [0], [1], [0, 0, 1, 1], [], []>} : vector<256x1152xbf16>, vector<1152x128xbf16>, vector<256x128xf32> -> vector<256x128xf32>
    %cst_5 = arith.constant dense<0.000000e+00> : vector<128xf32>
    %41 = vector.multi_reduction <add>, %40, %cst_5 [0] : vector<256x128xf32> to vector<128xf32>
    %42 = vector.shape_cast %41 : vector<128xf32> to vector<1x128xf32>
    %cst_6 = arith.constant 2.560000e+02 : f32
    %43 = vector.broadcast %cst_6 : f32 to vector<1x128xf32>
    %44 = arith.divf %42, %43 : vector<1x128xf32>
    %45 = arith.mulf %40, %40 : vector<256x128xf32>
    %cst_7 = arith.constant dense<0.000000e+00> : vector<128xf32>
    %46 = vector.multi_reduction <add>, %45, %cst_7 [0] : vector<256x128xf32> to vector<128xf32>
    %47 = vector.shape_cast %46 : vector<128xf32> to vector<1x128xf32>
    %cst_8 = arith.constant 2.560000e+02 : f32
    %48 = vector.broadcast %cst_8 : f32 to vector<1x128xf32>
    %49 = arith.divf %47, %48 : vector<1x128xf32>
    %50 = vector.broadcast %44 : vector<1x128xf32> to vector<256x128xf32>
    %51 = arith.subf %40, %50 : vector<256x128xf32>
    %52 = arith.mulf %44, %44 : vector<1x128xf32>
    %53 = arith.subf %49, %52 : vector<1x128xf32>
    %cst_9 = arith.constant 9.99999974E-6 : f32
    %54 = vector.broadcast %cst_9 : f32 to vector<1x128xf32>
    %55 = arith.addf %53, %54 : vector<1x128xf32>
    %56 = math.rsqrt %55 : vector<1x128xf32>
    %57 = vector.broadcast %56 : vector<1x128xf32> to vector<256x128xf32>
    %58 = arith.mulf %51, %57 : vector<256x128xf32>
    %cst_10 = arith.constant 0.000000e+00 : f32
    %59 = vector.broadcast %cst_10 : f32 to vector<256x128xf32>
    %60 = arith.maximumf %58, %59 : vector<256x128xf32>
    %61 = vector.shape_cast %60 : vector<256x128xf32> to vector<16x16x128xf32>
    %62 = vector.extract_strided_slice %61 {offsets = [1, 0, 0], sizes = [1, 16, 128], strides = [1, 1, 1]} : vector<16x16x128xf32> to vector<1x16x128xf32>
    %63 = vector.extract_strided_slice %61 {offsets = [14, 0, 0], sizes = [1, 16, 128], strides = [1, 1, 1]} : vector<16x16x128xf32> to vector<1x16x128xf32>
    %64 = tpu.concatenate %62, %61, %63 in 0 : vector<1x16x128xf32>, vector<16x16x128xf32>, vector<1x16x128xf32> -> vector<18x16x128xf32>
    %65 = vector.extract_strided_slice %64 {offsets = [0, 1, 0], sizes = [18, 1, 128], strides = [1, 1, 1]} : vector<18x16x128xf32> to vector<18x1x128xf32>
    %66 = vector.extract_strided_slice %64 {offsets = [0, 0, 0], sizes = [18, 15, 128], strides = [1, 1, 1]} : vector<18x16x128xf32> to vector<18x15x128xf32>
    %67 = tpu.concatenate %65, %66 in 1 : vector<18x1x128xf32>, vector<18x15x128xf32> -> vector<18x16x128xf32>
    %68 = vector.extract_strided_slice %64 {offsets = [0, 1, 0], sizes = [18, 15, 128], strides = [1, 1, 1]} : vector<18x16x128xf32> to vector<18x15x128xf32>
    %69 = vector.extract_strided_slice %64 {offsets = [0, 14, 0], sizes = [18, 1, 128], strides = [1, 1, 1]} : vector<18x16x128xf32> to vector<18x1x128xf32>
    %70 = tpu.concatenate %68, %69 in 1 : vector<18x15x128xf32>, vector<18x1x128xf32> -> vector<18x16x128xf32>
    %71 = vector.extract_strided_slice %67 {offsets = [0, 0, 0], sizes = [16, 16, 128], strides = [1, 1, 1]} : vector<18x16x128xf32> to vector<16x16x128xf32>
    %72 = vector.shape_cast %71 : vector<16x16x128xf32> to vector<256x128xf32>
    %73 = arith.truncf %72 : vector<256x128xf32> to vector<256x128xbf16>
    %74 = vector.extract_strided_slice %64 {offsets = [0, 0, 0], sizes = [16, 16, 128], strides = [1, 1, 1]} : vector<18x16x128xf32> to vector<16x16x128xf32>
    %75 = vector.shape_cast %74 : vector<16x16x128xf32> to vector<256x128xf32>
    %76 = arith.truncf %75 : vector<256x128xf32> to vector<256x128xbf16>
    %77 = vector.extract_strided_slice %70 {offsets = [0, 0, 0], sizes = [16, 16, 128], strides = [1, 1, 1]} : vector<18x16x128xf32> to vector<16x16x128xf32>
    %78 = vector.shape_cast %77 : vector<16x16x128xf32> to vector<256x128xf32>
    %79 = arith.truncf %78 : vector<256x128xf32> to vector<256x128xbf16>
    %80 = vector.extract_strided_slice %67 {offsets = [1, 0, 0], sizes = [16, 16, 128], strides = [1, 1, 1]} : vector<18x16x128xf32> to vector<16x16x128xf32>
    %81 = vector.shape_cast %80 : vector<16x16x128xf32> to vector<256x128xf32>
    %82 = arith.truncf %81 : vector<256x128xf32> to vector<256x128xbf16>
    %83 = vector.extract_strided_slice %64 {offsets = [1, 0, 0], sizes = [16, 16, 128], strides = [1, 1, 1]} : vector<18x16x128xf32> to vector<16x16x128xf32>
    %84 = vector.shape_cast %83 : vector<16x16x128xf32> to vector<256x128xf32>
    %85 = arith.truncf %84 : vector<256x128xf32> to vector<256x128xbf16>
    %86 = vector.extract_strided_slice %70 {offsets = [1, 0, 0], sizes = [16, 16, 128], strides = [1, 1, 1]} : vector<18x16x128xf32> to vector<16x16x128xf32>
    %87 = vector.shape_cast %86 : vector<16x16x128xf32> to vector<256x128xf32>
    %88 = arith.truncf %87 : vector<256x128xf32> to vector<256x128xbf16>
    %89 = vector.extract_strided_slice %67 {offsets = [2, 0, 0], sizes = [16, 16, 128], strides = [1, 1, 1]} : vector<18x16x128xf32> to vector<16x16x128xf32>
    %90 = vector.shape_cast %89 : vector<16x16x128xf32> to vector<256x128xf32>
    %91 = arith.truncf %90 : vector<256x128xf32> to vector<256x128xbf16>
    %92 = vector.extract_strided_slice %64 {offsets = [2, 0, 0], sizes = [16, 16, 128], strides = [1, 1, 1]} : vector<18x16x128xf32> to vector<16x16x128xf32>
    %93 = vector.shape_cast %92 : vector<16x16x128xf32> to vector<256x128xf32>
    %94 = arith.truncf %93 : vector<256x128xf32> to vector<256x128xbf16>
    %95 = vector.extract_strided_slice %70 {offsets = [2, 0, 0], sizes = [16, 16, 128], strides = [1, 1, 1]} : vector<18x16x128xf32> to vector<16x16x128xf32>
    %96 = vector.shape_cast %95 : vector<16x16x128xf32> to vector<256x128xf32>
    %97 = arith.truncf %96 : vector<256x128xf32> to vector<256x128xbf16>
    %98 = tpu.concatenate %73, %76, %79, %82, %85, %88, %91, %94, %97 in 1 : vector<256x128xbf16>, vector<256x128xbf16>, vector<256x128xbf16>, vector<256x128xbf16>, vector<256x128xbf16>, vector<256x128xbf16>, vector<256x128xbf16>, vector<256x128xbf16>, vector<256x128xbf16> -> vector<256x1152xbf16>
    %c0_11 = arith.constant 0 : index
    %c0_12 = arith.constant 0 : index
    %99 = vector.load %arg3[%c0_11, %c0_12] : memref<1152x128xbf16, #tpu.memory_space<vmem>>, vector<1152x128xbf16>
    %cst_13 = arith.constant dense<0.000000e+00> : vector<256x128xf32>
    %100 = tpu.matmul %98, %99, %cst_13 {dimension_numbers = #tpu.dot_dimension_numbers<[1], [0], [0], [1], [0, 0, 1, 1], [], []>} : vector<256x1152xbf16>, vector<1152x128xbf16>, vector<256x128xf32> -> vector<256x128xf32>
    %cst_14 = arith.constant dense<0.000000e+00> : vector<128xf32>
    %101 = vector.multi_reduction <add>, %100, %cst_14 [0] : vector<256x128xf32> to vector<128xf32>
    %102 = vector.shape_cast %101 : vector<128xf32> to vector<1x128xf32>
    %cst_15 = arith.constant 2.560000e+02 : f32
    %103 = vector.broadcast %cst_15 : f32 to vector<1x128xf32>
    %104 = arith.divf %102, %103 : vector<1x128xf32>
    %105 = arith.mulf %100, %100 : vector<256x128xf32>
    %cst_16 = arith.constant dense<0.000000e+00> : vector<128xf32>
    %106 = vector.multi_reduction <add>, %105, %cst_16 [0] : vector<256x128xf32> to vector<128xf32>
    %107 = vector.shape_cast %106 : vector<128xf32> to vector<1x128xf32>
    %cst_17 = arith.constant 2.560000e+02 : f32
    %108 = vector.broadcast %cst_17 : f32 to vector<1x128xf32>
    %109 = arith.divf %107, %108 : vector<1x128xf32>
    %110 = vector.broadcast %104 : vector<1x128xf32> to vector<256x128xf32>
    %111 = arith.subf %100, %110 : vector<256x128xf32>
    %112 = arith.mulf %104, %104 : vector<1x128xf32>
    %113 = arith.subf %109, %112 : vector<1x128xf32>
    %cst_18 = arith.constant 9.99999974E-6 : f32
    %114 = vector.broadcast %cst_18 : f32 to vector<1x128xf32>
    %115 = arith.addf %113, %114 : vector<1x128xf32>
    %116 = math.rsqrt %115 : vector<1x128xf32>
    %117 = vector.broadcast %116 : vector<1x128xf32> to vector<256x128xf32>
    %118 = arith.mulf %111, %117 : vector<256x128xf32>
    %119 = vector.shape_cast %1 : vector<16x16x128xf32> to vector<256x128xf32>
    %120 = arith.addf %118, %119 : vector<256x128xf32>
    %cst_19 = arith.constant 0.000000e+00 : f32
    %121 = vector.broadcast %cst_19 : f32 to vector<256x128xf32>
    %122 = arith.maximumf %120, %121 : vector<256x128xf32>
    %c0_20 = arith.constant 0 : index
    %c0_21 = arith.constant 0 : index
    %c0_22 = arith.constant 0 : index
    %123 = vector.load %arg4[%c0_20, %c0_21, %c0_22] : memref<1x256x128xf32, #tpu.memory_space<vmem>>, vector<1x256x128xf32>
    %124 = vector.shape_cast %123 : vector<1x256x128xf32> to vector<256x128xf32>
    %125 = vector.shape_cast %122 : vector<256x128xf32> to vector<1x256x128xf32>
    tpu.vector_store %arg4[%c0_20, %c0_21, %c0_22], %125 {strides = array<i32>} : memref<1x256x128xf32, #tpu.memory_space<vmem>>, vector<1x256x128xf32>,
    return
  }
  func.func @transform_0(%arg0: i32) -> (i32, i32, i32, i32) {
    %c0_i32 = arith.constant 0 : i32
    %c0_i32_0 = arith.constant 0 : i32
    %c0_i32_1 = arith.constant 0 : i32
    %c0_i32_2 = arith.constant 0 : i32
    return %arg0, %c0_i32, %c0_i32_0, %c0_i32_1 : i32, i32, i32, i32
  }
  func.func @transform_1(%arg0: i32) -> (i32, i32) {
    %c0_i32 = arith.constant 0 : i32
    %c0_i32_0 = arith.constant 0 : i32
    %c0_i32_1 = arith.constant 0 : i32
    return %c0_i32, %c0_i32_0 : i32, i32
  }
  func.func @transform_2(%arg0: i32) -> (i32, i32) {
    %c0_i32 = arith.constant 0 : i32
    %c0_i32_0 = arith.constant 0 : i32
    %c0_i32_1 = arith.constant 0 : i32
    return %c0_i32, %c0_i32_0 : i32, i32
  }
  func.func @transform_3(%arg0: i32) -> (i32, i32, i32) {
    %c0_i32 = arith.constant 0 : i32
    %c0_i32_0 = arith.constant 0 : i32
    %c0_i32_1 = arith.constant 0 : i32
    return %arg0, %c0_i32, %c0_i32_0 : i32, i32, i32
  }
}

</mosaic_0001>

<llo_original>
// kernel: basic_block_forward.1
$region0: #{basic_block_forward.1}
  #allocation0 [shape = 'u32[]', space=smem, size = 0x4, offset = 0x4, fixed_abs, tag = 'smem constant byte address 0x4 - core index']
  #allocation1 [shape = 'u32[144,128]{1,0:T(1,128)}', space=vmem, size = 0x12000, scoped, tag = 'internal scratch']
  %s0 = inlined_call_operand.vmem [shape: f32[2,16,16,128], index: 0, kind: input, shape index: {}]
  %s1 = inlined_call_operand.vmem [shape: bf16[1152,128], index: 1, kind: input, shape index: {}]
  %s2 = inlined_call_operand.vmem [shape: bf16[1152,128], index: 2, kind: input, shape index: {}]
  %s3 = inlined_call_operand.hbm [shape: f32[2,256,128], index: 3, kind: output, shape index: {}]
  %s4 = sld [smem:[#allocation0]]
  $region45: #{basic_block_forward.1} parent=0
    _
  %s6 = ssub.s32 1, %s4
  %s7 = scalar_select 0, %s6, %s4
  $region1: #{basic_block_forward.1} parent=0
    #allocation2 [shape = 'u8[262144]{0}', space=vmem, size = 0x40000, scoped, tag = 'output window, operand 0']
    #allocation3 [shape = 's32[2]{0}', space=sflag, size = 0x8, scoped, tag = 'scoped memory for basic_block_forward.1']
    %8 = vsyncpa [#allocation3], 0
    %s9 = scalar_lea.sflag [#allocation3], 1
    %10 = vsyncpa %s9, 0
    loop: start=0, step=1, limit=4
    $region2: #{basic_block_forward.1} parent=1 // loop_pre_header
      _
    $region3: #{basic_block_forward.1} parent=1 // loop_header
      %s12 = sphi 0, %s16
      %p13 = scmp.ge.s32.totalorder %s12, 4
      %s22 = sphi 0, %s24
      %s25 = sphi 0, %s22
      %s26 = sphi 0, %s25
      %s42 = sphi 0, %s26
      %s46 = sphi 0, %s46
      %s48 = sphi 0, %s46
      %s49 = sphi 0, %s48
      %s63 = sphi 0, %s49
      %s67 = sphi 0, %s67
      %s69 = sphi 0, %s67
      %s70 = sphi 0, %s69
      %s84 = sphi 0, %s70
      %s90 = sphi 0, %s92
      %s93 = sphi 0, %s90
      %s94 = sphi 0, %s93
      %s110 = sphi 0, %s94
    $region4: #{basic_block_forward.1} parent=1 // loop_header_branch
      %15 = sbr.rel (%p13) target = $region8
    $region5: #{basic_block_forward.1} parent=1 // loop_body
      %s17 = ssub.s32 %s12, 1
      %s18 = ssub.s32 %s12, 2
      %s19 = sadd.s32 %s12, 1
      %s20 = ssub.s32 %s12, %s19
      %p21 = scmp.eq.s32.totalorder %s20, 0
      %s23 = sadd.s32 %s22, 1
      %s24 = scalar_select %p21, %s22, %s23
      %p27 = pneg %p21
      %p28 = scmp.eq.s32.totalorder %s12, 1
      %p29 = por %p27, %p28
      %p30 = scmp.ne.s32.totalorder %s22, %s25
      %p31 = scmp.eq.s32.totalorder %s12, 0
      %p32 = por %p30, %p31
      %p33 = scmp.ne.s32.totalorder %s22, %s25
      %p34 = scmp.eq.s32.totalorder %s17, 1
      %p35 = por %p33, %p34
      %p36 = scmp.ne.s32.totalorder %s25, %s26
      %p37 = scmp.eq.s32.totalorder %s17, 0
      %p38 = por %p36, %p37
      %p39 = scmp.ne.s32.totalorder %s25, %s26
      %p40 = scmp.eq.s32.totalorder %s18, 1
      %p41 = por %p39, %p40
      %p43 = scmp.ne.s32.totalorder %s26, %s42
      %p44 = scmp.eq.s32.totalorder %s18, 0
      %p45 = por %p43, %p44
      %s47 = sadd.s32 %s46, 1
      %p50 = scmp.eq.s32.totalorder %s12, 1
      %p51 = scmp.ne.s32.totalorder %s46, %s48
      %p52 = scmp.eq.s32.totalorder %s12, 0
      %p53 = por %p51, %p52
      %p54 = scmp.ne.s32.totalorder %s46, %s48
      %p55 = scmp.eq.s32.totalorder %s17, 1
      %p56 = por %p54, %p55
      %p57 = scmp.ne.s32.totalorder %s48, %s49
      %p58 = scmp.eq.s32.totalorder %s17, 0
      %p59 = por %p57, %p58
      %p60 = scmp.ne.s32.totalorder %s48, %s49
      %p61 = scmp.eq.s32.totalorder %s18, 1
      %p62 = por %p60, %p61
      %p64 = scmp.ne.s32.totalorder %s49, %s63
      %p65 = scmp.eq.s32.totalorder %s18, 0
      %p66 = por %p64, %p65
      %s68 = sadd.s32 %s67, 1
      %p71 = scmp.eq.s32.totalorder %s12, 1
      %p72 = scmp.ne.s32.totalorder %s67, %s69
      %p73 = scmp.eq.s32.totalorder %s12, 0
      %p74 = por %p72, %p73
      %p75 = scmp.ne.s32.totalorder %s67, %s69
      %p76 = scmp.eq.s32.totalorder %s17, 1
      %p77 = por %p75, %p76
      %p78 = scmp.ne.s32.totalorder %s69, %s70
      %p79 = scmp.eq.s32.totalorder %s17, 0
      %p80 = por %p78, %p79
      %p81 = scmp.ne.s32.totalorder %s69, %s70
      %p82 = scmp.eq.s32.totalorder %s18, 1
      %p83 = por %p81, %p82
      %p85 = scmp.ne.s32.totalorder %s70, %s84
      %p86 = scmp.eq.s32.totalorder %s18, 0
      %p87 = por %p85, %p86
      %s88 = ssub.s32 %s12, %s19
      %p89 = scmp.eq.s32.totalorder %s88, 0
      %s91 = sadd.s32 %s90, 1
      %s92 = scalar_select %p89, %s90, %s91
      %p95 = pneg %p89
      %p96 = scmp.eq.s32.totalorder %s12, 1
      %p97 = por %p95, %p96
      %p98 = scmp.ne.s32.totalorder %s90, %s93
      %p99 = scmp.eq.s32.totalorder %s12, 0
      %p100 = por %p98, %p99
      %p101 = scmp.ne.s32.totalorder %s90, %s93
      %p102 = scmp.eq.s32.totalorder %s17, 1
      %p103 = por %p101, %p102
      %p104 = scmp.ne.s32.totalorder %s93, %s94
      %p105 = scmp.eq.s32.totalorder %s17, 0
      %p106 = por %p104, %p105
      %p107 = scmp.ne.s32.totalorder %s93, %s94
      %p108 = scmp.eq.s32.totalorder %s18, 1
      %p109 = por %p107, %p108
      %p111 = scmp.ne.s32.totalorder %s94, %s110
      %p112 = scmp.eq.s32.totalorder %s18, 0
      %p113 = por %p111, %p112
      %p114 = scmp.le.s32.totalorder 1, %s12
      %p115 = scmp.lt.s32.totalorder %s12, 3
      %p116 = pnand %p114, %p115
      %p117 = pneg %p116
      // Predicated region
      $region9: #{basic_block_forward.1} parent=5 // pred_check
        _
      $region10: #{basic_block_forward.1} parent=5 // pred_check_branch
        %119 = sbr.rel (%p116) target = $region12
      $region11: #{basic_block_forward.1} parent=5 // pred_region
        %s120 = ssub.s32 %s12, 1
        // Predicated region
        $region13: #{basic_block_forward.1} parent=11 // pred_check
          %p121 = pneg %p59
        $region14: #{basic_block_forward.1} parent=11 // pred_check_branch
          %123 = sbr.rel (%p121) target = $region16
        $region15: #{basic_block_forward.1} parent=11 // pred_region
          _
        $region16: #{basic_block_forward.1} parent=11 // pred_fallthru
          _
        // Predicated region
        $region17: #{basic_block_forward.1} parent=11 // pred_check
          %p124 = pneg %p80
        $region18: #{basic_block_forward.1} parent=11 // pred_check_branch
          %126 = sbr.rel (%p124) target = $region20
        $region19: #{basic_block_forward.1} parent=11 // pred_region
          _
        $region20: #{basic_block_forward.1} parent=11 // pred_fallthru
          _
      $region12: #{basic_block_forward.1} parent=5 // pred_fallthru
        _
      %p127 = scmp.lt.s32.totalorder %s12, 2
      // Predicated region
      $region21: #{basic_block_forward.1} parent=5 // pred_check
        %p128 = pneg %p127
      $region22: #{basic_block_forward.1} parent=5 // pred_check_branch
        %130 = sbr.rel (%p128) target = $region24
      $region23: #{basic_block_forward.1} parent=5 // pred_region
        // Predicated region
        $region25: #{basic_block_forward.1} parent=23 // pred_check
          %p131 = pneg %p32
        $region26: #{basic_block_forward.1} parent=23 // pred_check_branch
          %133 = sbr.rel (%p131) target = $region28
        $region27: #{basic_block_forward.1} parent=23 // pred_region
          %p134 = scmp.lt.s32.totalorder %s12, 1
          %s135 = scalar_select %p134, %s12, 1
          %s136 = smul.addr %s135, 32
          %s137 = smul.addr %s136, 8
          %s138 = scalar_lea.vmem %s0, %s137
        $region28: #{basic_block_forward.1} parent=23 // pred_fallthru
          _
      $region24: #{basic_block_forward.1} parent=5 // pred_fallthru
        _
      %p139 = scmp.le.s32.totalorder 1, %s12
      %p140 = scmp.lt.s32.totalorder %s12, 3
      %p141 = pnand %p139, %p140
      %p142 = pneg %p141
      // Predicated region
      $region29: #{basic_block_forward.1} parent=5 // pred_check
        _
      $region30: #{basic_block_forward.1} parent=5 // pred_check_branch
        %144 = sbr.rel (%p141) target = $region32
      $region31: #{basic_block_forward.1} parent=5 // pred_region
        %s145 = ssub.s32 %s12, 1
        %p146 = scmp.lt.s32.totalorder %s17, 1
        %s147 = scalar_select %p146, %s17, 1
        %s148 = smul.addr %s147, 32
        %s149 = smul.addr %s148, 8
        %s150 = scalar_lea.vmem %s0, %s149
        %p151 = pneg %p38
        %p152 = pneg %p35
        %p153 = pneg %p59
        %p154 = pneg %p56
        %p155 = pneg %p80
        %p156 = pneg %p77
        %p157 = pneg %p106
        %p158 = pneg %p103
        %s159 = sand.u32 %s93, 1
        %s160 = scalar_lea.sflag [#allocation3], %s159
        %s161 = sand.u32 %s93, 1
        %s162 = smul.addr %s161, 256
        %s163 = scalar_lea.vmem [#allocation2], %s162
        %p164 = scmp.lt.s32.totalorder %s17, 1
        %s165 = scalar_select %p164, %s17, 1
        %s166 = smul.addr %s165, 32
        %s167 = smul.addr %s166, 8
        %s168 = scalar_lea.vmem %s0, %s167
        %v170 = vld [vmem:[%s168] sm:$0xff]
        %v171 = vld [vmem:[%s168 + $0x8] sm:$0xff]
        %v172 = vld [vmem:[%s168 + $0x10] sm:$0xff]
        %v173 = vld [vmem:[%s168 + $0x18] sm:$0xff]
        %v174 = vld [vmem:[%s168 + $0x20] sm:$0xff]
        %v175 = vld [vmem:[%s168 + $0x28] sm:$0xff]
        %v176 = vld [vmem:[%s168 + $0x30] sm:$0xff]
        %v177 = vld [vmem:[%s168 + $0x38] sm:$0xff]
        %v178 = vld [vmem:[%s168 + $0x40] sm:$0xff]
        %v179 = vld [vmem:[%s168 + $0x48] sm:$0xff]
        %v180 = vld [vmem:[%s168 + $0x50] sm:$0xff]
        %v181 = vld [vmem:[%s168 + $0x58] sm:$0xff]
        %v182 = vld [vmem:[%s168 + $0x60] sm:$0xff]
        %v183 = vld [vmem:[%s168 + $0x68] sm:$0xff]
        %v184 = vld [vmem:[%s168 + $0x70] sm:$0xff]
        %v185 = vld [vmem:[%s168 + $0x78] sm:$0xff]
        %v186 = vld [vmem:[%s168 + $0x80] sm:$0xff]
        %v187 = vld [vmem:[%s168 + $0x88] sm:$0xff]
        %v188 = vld [vmem:[%s168 + $0x90] sm:$0xff]
        %v189 = vld [vmem:[%s168 + $0x98] sm:$0xff]
        %v190 = vld [vmem:[%s168 + $0xa0] sm:$0xff]
        %v191 = vld [vmem:[%s168 + $0xa8] sm:$0xff]
        %v192 = vld [vmem:[%s168 + $0xb0] sm:$0xff]
        %v193 = vld [vmem:[%s168 + $0xb8] sm:$0xff]
        %v194 = vld [vmem:[%s168 + $0xc0] sm:$0xff]
        %v195 = vld [vmem:[%s168 + $0xc8] sm:$0xff]
        %v196 = vld [vmem:[%s168 + $0xd0] sm:$0xff]
        %v197 = vld [vmem:[%s168 + $0xd8] sm:$0xff]
        %v198 = vld [vmem:[%s168 + $0xe0] sm:$0xff]
        %v199 = vld [vmem:[%s168 + $0xe8] sm:$0xff]
        %v200 = vld [vmem:[%s168 + $0xf0] sm:$0xff]
        %v201 = vld [vmem:[%s168 + $0xf8] sm:$0xff]
        %v218 = vrot.slane %v172, 1
        %v219 = vrot.slane %v170, 1
        %v220 = vrot.slane %v174, 1
        %v221 = vrot.slane %v176, 1
        %v222 = vrot.slane %v178, 1
        %v223 = vrot.slane %v180, 1
        %v224 = vrot.slane %v182, 1
        %v225 = vrot.slane %v184, 1
        %v226 = vrot.slane %v186, 1
        %v227 = vrot.slane %v188, 1
        %v228 = vrot.slane %v190, 1
        %v229 = vrot.slane %v192, 1
        %v230 = vrot.slane %v194, 1
        %v231 = vrot.slane %v196, 1
        %v232 = vrot.slane %v198, 1
        %v233 = vrot.slane %v200, 1
        %vm266 = vcmask 1040384
        %v267 = vrot.slane %v172, 7
        %v268 = vrot.slane %v173, 7
        %v269 = vsel %vm266, %v267, %v268
        %v270 = vrot.slane %v170, 7
        %v271 = vrot.slane %v171, 7
        %v272 = vsel %vm266, %v270, %v271
        %v273 = vrot.slane %v174, 7
        %v274 = vrot.slane %v175, 7
        %v275 = vsel %vm266, %v273, %v274
        %v276 = vrot.slane %v176, 7
        %v277 = vrot.slane %v177, 7
        %v278 = vsel %vm266, %v276, %v277
        %v279 = vrot.slane %v178, 7
        %v280 = vrot.slane %v179, 7
        %v281 = vsel %vm266, %v279, %v280
        %v282 = vrot.slane %v180, 7
        %v283 = vrot.slane %v181, 7
        %v284 = vsel %vm266, %v282, %v283
        %v285 = vrot.slane %v182, 7
        %v286 = vrot.slane %v183, 7
        %v287 = vsel %vm266, %v285, %v286
        %v288 = vrot.slane %v184, 7
        %v289 = vrot.slane %v185, 7
        %v290 = vsel %vm266, %v288, %v289
        %v291 = vrot.slane %v186, 7
        %v292 = vrot.slane %v187, 7
        %v293 = vsel %vm266, %v291, %v292
        %v294 = vrot.slane %v188, 7
        %v295 = vrot.slane %v189, 7
        %v296 = vsel %vm266, %v294, %v295
        %v297 = vrot.slane %v190, 7
        %v298 = vrot.slane %v191, 7
        %v299 = vsel %vm266, %v297, %v298
        %v300 = vrot.slane %v192, 7
        %v301 = vrot.slane %v193, 7
        %v302 = vsel %vm266, %v300, %v301
        %v303 = vrot.slane %v194, 7
        %v304 = vrot.slane %v195, 7
        %v305 = vsel %vm266, %v303, %v304
        %v306 = vrot.slane %v196, 7
        %v307 = vrot.slane %v197, 7
        %v308 = vsel %vm266, %v306, %v307
        %v309 = vrot.slane %v198, 7
        %v310 = vrot.slane %v199, 7
        %v311 = vsel %vm266, %v309, %v310
        %v312 = vrot.slane %v200, 7
        %v313 = vrot.slane %v201, 7
        %v314 = vsel %vm266, %v312, %v313
        %v347 = vsel %vm266, %v218, %v267
        %v348 = vsel %vm266, %v219, %v270
        %v349 = vsel %vm266, %v220, %v273
        %v350 = vsel %vm266, %v221, %v276
        %v351 = vsel %vm266, %v222, %v279
        %v352 = vsel %vm266, %v223, %v282
        %v353 = vsel %vm266, %v224, %v285
        %v354 = vsel %vm266, %v225, %v288
        %v355 = vsel %vm266, %v226, %v291
        %v356 = vsel %vm266, %v227, %v294
        %v357 = vsel %vm266, %v228, %v297
        %v358 = vsel %vm266, %v229, %v300
        %v359 = vsel %vm266, %v230, %v303
        %v360 = vsel %vm266, %v231, %v306
        %v361 = vsel %vm266, %v232, %v309
        %v362 = vsel %vm266, %v233, %v312
        %vm363 = vcmask 1046528
        %v364 = vrot.slane %v173, 1
        %v365 = vsel %vm363, %v218, %v364
        %v366 = vrot.slane %v171, 1
        %v367 = vsel %vm363, %v219, %v366
        %v368 = vrot.slane %v175, 1
        %v369 = vsel %vm363, %v220, %v368
        %v370 = vrot.slane %v177, 1
        %v371 = vsel %vm363, %v221, %v370
        %v372 = vrot.slane %v179, 1
        %v373 = vsel %vm363, %v222, %v372
        %v374 = vrot.slane %v181, 1
        %v375 = vsel %vm363, %v223, %v374
        %v376 = vrot.slane %v183, 1
        %v377 = vsel %vm363, %v224, %v376
        %v378 = vrot.slane %v185, 1
        %v379 = vsel %vm363, %v225, %v378
        %v380 = vrot.slane %v187, 1
        %v381 = vsel %vm363, %v226, %v380
        %v382 = vrot.slane %v189, 1
        %v383 = vsel %vm363, %v227, %v382
        %v384 = vrot.slane %v191, 1
        %v385 = vsel %vm363, %v228, %v384
        %v386 = vrot.slane %v193, 1
        %v387 = vsel %vm363, %v229, %v386
        %v388 = vrot.slane %v195, 1
        %v389 = vsel %vm363, %v230, %v388
        %v390 = vrot.slane %v197, 1
        %v391 = vsel %vm363, %v231, %v390
        %v392 = vrot.slane %v199, 1
        %v393 = vsel %vm363, %v232, %v392
        %v394 = vrot.slane %v201, 1
        %v395 = vsel %vm363, %v233, %v394
        %v444 = vsel %vm363, %v364, %v268
        %v445 = vsel %vm363, %v366, %v271
        %v446 = vsel %vm363, %v368, %v274
        %v447 = vsel %vm363, %v370, %v277
        %v448 = vsel %vm363, %v372, %v280
        %v449 = vsel %vm363, %v374, %v283
        %v450 = vsel %vm363, %v376, %v286
        %v451 = vsel %vm363, %v378, %v289
        %v452 = vsel %vm363, %v380, %v292
        %v453 = vsel %vm363, %v382, %v295
        %v454 = vsel %vm363, %v384, %v298
        %v455 = vsel %vm363, %v386, %v301
        %v456 = vsel %vm363, %v388, %v304
        %v457 = vsel %vm363, %v390, %v307
        %v458 = vsel %vm363, %v392, %v310
        %v459 = vsel %vm363, %v394, %v313
        %v460 = vpack.c.bf16 %v269, %v347
        %v461 = vpack.c.bf16 %v272, %v348
        %v462 = vpack.c.bf16 %v275, %v349
        %v463 = vpack.c.bf16 %v278, %v350
        %v464 = vpack.c.bf16 %v281, %v351
        %v465 = vpack.c.bf16 %v284, %v352
        %v466 = vpack.c.bf16 %v287, %v353
        %v467 = vpack.c.bf16 %v290, %v354
        %v468 = vpack.c.bf16 %v293, %v355
        %v469 = vpack.c.bf16 %v296, %v356
        %v470 = vpack.c.bf16 %v299, %v357
        %v471 = vpack.c.bf16 %v302, %v358
        %v472 = vpack.c.bf16 %v305, %v359
        %v473 = vpack.c.bf16 %v308, %v360
        %v474 = vpack.c.bf16 %v311, %v361
        %v475 = vpack.c.bf16 %v173, %v172
        %v476 = vpack.c.bf16 %v171, %v170
        %v477 = vpack.c.bf16 %v175, %v174
        %v478 = vpack.c.bf16 %v177, %v176
        %v479 = vpack.c.bf16 %v179, %v178
        %v480 = vpack.c.bf16 %v181, %v180
        %v481 = vpack.c.bf16 %v183, %v182
        %v482 = vpack.c.bf16 %v185, %v184
        %v483 = vpack.c.bf16 %v187, %v186
        %v484 = vpack.c.bf16 %v189, %v188
        %v485 = vpack.c.bf16 %v191, %v190
        %v486 = vpack.c.bf16 %v193, %v192
        %v487 = vpack.c.bf16 %v195, %v194
        %v488 = vpack.c.bf16 %v197, %v196
        %v489 = vpack.c.bf16 %v199, %v198
        %v490 = vpack.c.bf16 %v444, %v365
        %v491 = vpack.c.bf16 %v445, %v367
        %v492 = vpack.c.bf16 %v446, %v369
        %v493 = vpack.c.bf16 %v447, %v371
        %v494 = vpack.c.bf16 %v448, %v373
        %v495 = vpack.c.bf16 %v449, %v375
        %v496 = vpack.c.bf16 %v450, %v377
        %v497 = vpack.c.bf16 %v451, %v379
        %v498 = vpack.c.bf16 %v452, %v381
        %v499 = vpack.c.bf16 %v453, %v383
        %v500 = vpack.c.bf16 %v454, %v385
        %v501 = vpack.c.bf16 %v455, %v387
        %v502 = vpack.c.bf16 %v456, %v389
        %v503 = vpack.c.bf16 %v457, %v391
        %v504 = vpack.c.bf16 %v458, %v393
        %v505 = vpack.c.bf16 %v314, %v362
        %v506 = vpack.c.bf16 %v201, %v200
        %v507 = vpack.c.bf16 %v459, %v395
        %v508 = vld [vmem:[%s1] sm:$0xf]
        %v509 = vld [vmem:[%s1 + $0x4] sm:$0xf]
        %v510 = vld [vmem:[%s1 + $0x8] sm:$0xf]
        %v511 = vld [vmem:[%s1 + $0xc] sm:$0xf]
        %v512 = vld [vmem:[%s1 + $0x10] sm:$0xf]
        %v513 = vld [vmem:[%s1 + $0x14] sm:$0xf]
        %v514 = vld [vmem:[%s1 + $0x18] sm:$0xf]
        %v515 = vld [vmem:[%s1 + $0x1c] sm:$0xf]
        %v516 = vld [vmem:[%s1 + $0x20] sm:$0xf]
        %v517 = vld [vmem:[%s1 + $0x24] sm:$0xf]
        %v518 = vld [vmem:[%s1 + $0x28] sm:$0xf]
        %v519 = vld [vmem:[%s1 + $0x2c] sm:$0xf]
        %v520 = vld [vmem:[%s1 + $0x30] sm:$0xf]
        %v521 = vld [vmem:[%s1 + $0x34] sm:$0xf]
        %v522 = vld [vmem:[%s1 + $0x38] sm:$0xf]
        %v523 = vld [vmem:[%s1 + $0x3c] sm:$0xf]
        %v524 = vld [vmem:[%s1 + $0x40] sm:$0xf]
        %v525 = vld [vmem:[%s1 + $0x44] sm:$0xf]
        %v526 = vld [vmem:[%s1 + $0x48] sm:$0xf]
        %v527 = vld [vmem:[%s1 + $0x4c] sm:$0xf]
        %v528 = vld [vmem:[%s1 + $0x50] sm:$0xf]
        %v529 = vld [vmem:[%s1 + $0x54] sm:$0xf]
        %v530 = vld [vmem:[%s1 + $0x58] sm:$0xf]
        %v531 = vld [vmem:[%s1 + $0x5c] sm:$0xf]
        %v532 = vld [vmem:[%s1 + $0x60] sm:$0xf]
        %v533 = vld [vmem:[%s1 + $0x64] sm:$0xf]
        %v534 = vld [vmem:[%s1 + $0x68] sm:$0xf]
        %v535 = vld [vmem:[%s1 + $0x6c] sm:$0xf]
        %v536 = vld [vmem:[%s1 + $0x70] sm:$0xf]
        %v537 = vld [vmem:[%s1 + $0x74] sm:$0xf]
        %v538 = vld [vmem:[%s1 + $0x78] sm:$0xf]
        %v539 = vld [vmem:[%s1 + $0x7c] sm:$0xf]
        %v540 = vld [vmem:[%s1 + $0x80] sm:$0xf]
        %v541 = vld [vmem:[%s1 + $0x84] sm:$0xf]
        %v542 = vld [vmem:[%s1 + $0x88] sm:$0xf]
        %v543 = vld [vmem:[%s1 + $0x8c] sm:$0xf]
        %v544 = vld [vmem:[%s1 + $0x90] sm:$0xf]
        %v545 = vld [vmem:[%s1 + $0x94] sm:$0xf]
        %v546 = vld [vmem:[%s1 + $0x98] sm:$0xf]
        %v547 = vld [vmem:[%s1 + $0x9c] sm:$0xf]
        %v548 = vld [vmem:[%s1 + $0xa0] sm:$0xf]
        %v549 = vld [vmem:[%s1 + $0xa4] sm:$0xf]
        %v550 = vld [vmem:[%s1 + $0xa8] sm:$0xf]
        %v551 = vld [vmem:[%s1 + $0xac] sm:$0xf]
        %v552 = vld [vmem:[%s1 + $0xb0] sm:$0xf]
        %v553 = vld [vmem:[%s1 + $0xb4] sm:$0xf]
        %v554 = vld [vmem:[%s1 + $0xb8] sm:$0xf]
        %v555 = vld [vmem:[%s1 + $0xbc] sm:$0xf]
        %v556 = vld [vmem:[%s1 + $0xc0] sm:$0xf]
        %v557 = vld [vmem:[%s1 + $0xc4] sm:$0xf]
        %v558 = vld [vmem:[%s1 + $0xc8] sm:$0xf]
        %v559 = vld [vmem:[%s1 + $0xcc] sm:$0xf]
        %v560 = vld [vmem:[%s1 + $0xd0] sm:$0xf]
        %v561 = vld [vmem:[%s1 + $0xd4] sm:$0xf]
        %v562 = vld [vmem:[%s1 + $0xd8] sm:$0xf]
        %v563 = vld [vmem:[%s1 + $0xdc] sm:$0xf]
        %v564 = vld [vmem:[%s1 + $0xe0] sm:$0xf]
        %v565 = vld [vmem:[%s1 + $0xe4] sm:$0xf]
        %v566 = vld [vmem:[%s1 + $0xe8] sm:$0xf]
        %v567 = vld [vmem:[%s1 + $0xec] sm:$0xf]
        %v568 = vld [vmem:[%s1 + $0xf0] sm:$0xf]
        %v569 = vld [vmem:[%s1 + $0xf4] sm:$0xf]
        %v570 = vld [vmem:[%s1 + $0xf8] sm:$0xf]
        %v571 = vld [vmem:[%s1 + $0xfc] sm:$0xf]
        %v572 = vld [vmem:[%s1 + $0x100] sm:$0xf]
        %v573 = vld [vmem:[%s1 + $0x104] sm:$0xf]
        %v574 = vld [vmem:[%s1 + $0x108] sm:$0xf]
        %v575 = vld [vmem:[%s1 + $0x10c] sm:$0xf]
        %v576 = vld [vmem:[%s1 + $0x110] sm:$0xf]
        %v577 = vld [vmem:[%s1 + $0x114] sm:$0xf]
        %v578 = vld [vmem:[%s1 + $0x118] sm:$0xf]
        %v579 = vld [vmem:[%s1 + $0x11c] sm:$0xf]
        %v580 = vld [vmem:[%s1 + $0x120] sm:$0xf]
        %v581 = vld [vmem:[%s1 + $0x124] sm:$0xf]
        %v582 = vld [vmem:[%s1 + $0x128] sm:$0xf]
        %v583 = vld [vmem:[%s1 + $0x12c] sm:$0xf]
        %v584 = vld [vmem:[%s1 + $0x130] sm:$0xf]
        %v585 = vld [vmem:[%s1 + $0x134] sm:$0xf]
        %v586 = vld [vmem:[%s1 + $0x138] sm:$0xf]
        %v587 = vld [vmem:[%s1 + $0x13c] sm:$0xf]
        %v588 = vld [vmem:[%s1 + $0x140] sm:$0xf]
        %v589 = vld [vmem:[%s1 + $0x144] sm:$0xf]
        %v590 = vld [vmem:[%s1 + $0x148] sm:$0xf]
        %v591 = vld [vmem:[%s1 + $0x14c] sm:$0xf]
        %v592 = vld [vmem:[%s1 + $0x150] sm:$0xf]
        %v593 = vld [vmem:[%s1 + $0x154] sm:$0xf]
        %v594 = vld [vmem:[%s1 + $0x158] sm:$0xf]
        %v595 = vld [vmem:[%s1 + $0x15c] sm:$0xf]
        %v596 = vld [vmem:[%s1 + $0x160] sm:$0xf]
        %v597 = vld [vmem:[%s1 + $0x164] sm:$0xf]
        %v598 = vld [vmem:[%s1 + $0x168] sm:$0xf]
        %v599 = vld [vmem:[%s1 + $0x16c] sm:$0xf]
        %v600 = vld [vmem:[%s1 + $0x170] sm:$0xf]
        %v601 = vld [vmem:[%s1 + $0x174] sm:$0xf]
        %v602 = vld [vmem:[%s1 + $0x178] sm:$0xf]
        %v603 = vld [vmem:[%s1 + $0x17c] sm:$0xf]
        %v604 = vld [vmem:[%s1 + $0x180] sm:$0xf]
        %v605 = vld [vmem:[%s1 + $0x184] sm:$0xf]
        %v606 = vld [vmem:[%s1 + $0x188] sm:$0xf]
        %v607 = vld [vmem:[%s1 + $0x18c] sm:$0xf]
        %v608 = vld [vmem:[%s1 + $0x190] sm:$0xf]
        %v609 = vld [vmem:[%s1 + $0x194] sm:$0xf]
        %v610 = vld [vmem:[%s1 + $0x198] sm:$0xf]
        %v611 = vld [vmem:[%s1 + $0x19c] sm:$0xf]
        %v612 = vld [vmem:[%s1 + $0x1a0] sm:$0xf]
        %v613 = vld [vmem:[%s1 + $0x1a4] sm:$0xf]
        %v614 = vld [vmem:[%s1 + $0x1a8] sm:$0xf]
        %v615 = vld [vmem:[%s1 + $0x1ac] sm:$0xf]
        %v616 = vld [vmem:[%s1 + $0x1b0] sm:$0xf]
        %v617 = vld [vmem:[%s1 + $0x1b4] sm:$0xf]
        %v618 = vld [vmem:[%s1 + $0x1b8] sm:$0xf]
        %v619 = vld [vmem:[%s1 + $0x1bc] sm:$0xf]
        %v620 = vld [vmem:[%s1 + $0x1c0] sm:$0xf]
        %v621 = vld [vmem:[%s1 + $0x1c4] sm:$0xf]
        %v622 = vld [vmem:[%s1 + $0x1c8] sm:$0xf]
        %v623 = vld [vmem:[%s1 + $0x1cc] sm:$0xf]
        %v624 = vld [vmem:[%s1 + $0x1d0] sm:$0xf]
        %v625 = vld [vmem:[%s1 + $0x1d4] sm:$0xf]
        %v626 = vld [vmem:[%s1 + $0x1d8] sm:$0xf]
        %v627 = vld [vmem:[%s1 + $0x1dc] sm:$0xf]
        %v628 = vld [vmem:[%s1 + $0x1e0] sm:$0xf]
        %v629 = vld [vmem:[%s1 + $0x1e4] sm:$0xf]
        %v630 = vld [vmem:[%s1 + $0x1e8] sm:$0xf]
        %v631 = vld [vmem:[%s1 + $0x1ec] sm:$0xf]
        %v632 = vld [vmem:[%s1 + $0x1f0] sm:$0xf]
        %v633 = vld [vmem:[%s1 + $0x1f4] sm:$0xf]
        %v634 = vld [vmem:[%s1 + $0x1f8] sm:$0xf]
        %v635 = vld [vmem:[%s1 + $0x1fc] sm:$0xf]
        %v636 = vld [vmem:[%s1 + $0x200] sm:$0xf]
        %v637 = vld [vmem:[%s1 + $0x204] sm:$0xf]
        %v638 = vld [vmem:[%s1 + $0x208] sm:$0xf]
        %v639 = vld [vmem:[%s1 + $0x20c] sm:$0xf]
        %v640 = vld [vmem:[%s1 + $0x210] sm:$0xf]
        %v641 = vld [vmem:[%s1 + $0x214] sm:$0xf]
        %v642 = vld [vmem:[%s1 + $0x218] sm:$0xf]
        %v643 = vld [vmem:[%s1 + $0x21c] sm:$0xf]
        %v644 = vld [vmem:[%s1 + $0x220] sm:$0xf]
        %v645 = vld [vmem:[%s1 + $0x224] sm:$0xf]
        %v646 = vld [vmem:[%s1 + $0x228] sm:$0xf]
        %v647 = vld [vmem:[%s1 + $0x22c] sm:$0xf]
        %v648 = vld [vmem:[%s1 + $0x230] sm:$0xf]
        %v649 = vld [vmem:[%s1 + $0x234] sm:$0xf]
        %v650 = vld [vmem:[%s1 + $0x238] sm:$0xf]
        %v651 = vld [vmem:[%s1 + $0x23c] sm:$0xf]
        %v796 = vunpack.c.l.b16 %v508
        %v797 = vunpack.c.l.b16 %v509
        %v798 = vunpack.c.l.b16 %v510
        %v799 = vunpack.c.l.b16 %v511
        %v800 = vunpack.c.l.b16 %v512
        %v801 = vunpack.c.l.b16 %v513
        %v802 = vunpack.c.l.b16 %v514
        %v803 = vunpack.c.l.b16 %v515
        %v804 = vunpack.c.l.b16 %v516
        %v805 = vunpack.c.l.b16 %v517
        %v806 = vunpack.c.l.b16 %v518
        %v807 = vunpack.c.l.b16 %v519
        %v808 = vunpack.c.l.b16 %v520
        %v809 = vunpack.c.l.b16 %v521
        %v810 = vunpack.c.l.b16 %v522
        %v811 = vunpack.c.l.b16 %v523
        %v812 = vunpack.c.l.b16 %v524
        %v813 = vunpack.c.l.b16 %v525
        %v814 = vunpack.c.l.b16 %v526
        %v815 = vunpack.c.l.b16 %v527
        %v816 = vunpack.c.l.b16 %v528
        %v817 = vunpack.c.l.b16 %v529
        %v818 = vunpack.c.l.b16 %v530
        %v819 = vunpack.c.l.b16 %v531
        %v820 = vunpack.c.l.b16 %v532
        %v821 = vunpack.c.l.b16 %v533
        %v822 = vunpack.c.l.b16 %v534
        %v823 = vunpack.c.l.b16 %v535
        %v824 = vunpack.c.l.b16 %v536
        %v825 = vunpack.c.l.b16 %v537
        %v826 = vunpack.c.l.b16 %v538
        %v827 = vunpack.c.l.b16 %v539
        %v828 = vunpack.c.l.b16 %v540
        %v829 = vunpack.c.l.b16 %v541
        %v830 = vunpack.c.l.b16 %v542
        %v831 = vunpack.c.l.b16 %v543
        %v832 = vunpack.c.l.b16 %v544
        %v833 = vunpack.c.l.b16 %v545
        %v834 = vunpack.c.l.b16 %v546
        %v835 = vunpack.c.l.b16 %v547
        %v836 = vunpack.c.l.b16 %v548
        %v837 = vunpack.c.l.b16 %v549
        %v838 = vunpack.c.l.b16 %v550
        %v839 = vunpack.c.l.b16 %v551
        %v840 = vunpack.c.l.b16 %v552
        %v841 = vunpack.c.l.b16 %v553
        %v842 = vunpack.c.l.b16 %v554
        %v843 = vunpack.c.l.b16 %v555
        %v844 = vunpack.c.l.b16 %v556
        %v845 = vunpack.c.l.b16 %v557
        %v846 = vunpack.c.l.b16 %v558
        %v847 = vunpack.c.l.b16 %v559
        %v848 = vunpack.c.l.b16 %v560
        %v849 = vunpack.c.l.b16 %v561
        %v850 = vunpack.c.l.b16 %v562
        %v851 = vunpack.c.l.b16 %v563
        %v852 = vunpack.c.l.b16 %v564
        %v853 = vunpack.c.l.b16 %v565
        %v854 = vunpack.c.l.b16 %v566
        %v855 = vunpack.c.l.b16 %v567
        %v856 = vunpack.c.l.b16 %v568
        %v857 = vunpack.c.l.b16 %v569
        %v858 = vunpack.c.l.b16 %v570
        %v859 = vunpack.c.l.b16 %v571
        %v860 = vunpack.c.l.b16 %v572
        %v861 = vunpack.c.l.b16 %v573
        %v862 = vunpack.c.l.b16 %v574
        %v863 = vunpack.c.l.b16 %v575
        %v864 = vunpack.c.l.b16 %v576
        %v865 = vunpack.c.l.b16 %v577
        %v866 = vunpack.c.l.b16 %v578
        %v867 = vunpack.c.l.b16 %v579
        %v868 = vunpack.c.l.b16 %v580
        %v869 = vunpack.c.l.b16 %v581
        %v870 = vunpack.c.l.b16 %v582
        %v871 = vunpack.c.l.b16 %v583
        %v872 = vunpack.c.l.b16 %v584
        %v873 = vunpack.c.l.b16 %v585
        %v874 = vunpack.c.l.b16 %v586
        %v875 = vunpack.c.l.b16 %v587
        %v876 = vunpack.c.l.b16 %v588
        %v877 = vunpack.c.l.b16 %v589
        %v878 = vunpack.c.l.b16 %v590
        %v879 = vunpack.c.l.b16 %v591
        %v880 = vunpack.c.l.b16 %v592
        %v881 = vunpack.c.l.b16 %v593
        %v882 = vunpack.c.l.b16 %v594
        %v883 = vunpack.c.l.b16 %v595
        %v884 = vunpack.c.l.b16 %v596
        %v885 = vunpack.c.l.b16 %v597
        %v886 = vunpack.c.l.b16 %v598
        %v887 = vunpack.c.l.b16 %v599
        %v888 = vunpack.c.l.b16 %v600
        %v889 = vunpack.c.l.b16 %v601
        %v890 = vunpack.c.l.b16 %v602
        %v891 = vunpack.c.l.b16 %v603
        %v892 = vunpack.c.l.b16 %v604
        %v893 = vunpack.c.l.b16 %v605
        %v894 = vunpack.c.l.b16 %v606
        %v895 = vunpack.c.l.b16 %v607
        %v896 = vunpack.c.l.b16 %v608
        %v897 = vunpack.c.l.b16 %v609
        %v898 = vunpack.c.l.b16 %v610
        %v899 = vunpack.c.l.b16 %v611
        %v900 = vunpack.c.l.b16 %v612
        %v901 = vunpack.c.l.b16 %v613
        %v902 = vunpack.c.l.b16 %v614
        %v903 = vunpack.c.l.b16 %v615
        %v904 = vunpack.c.l.b16 %v616
        %v905 = vunpack.c.l.b16 %v617
        %v906 = vunpack.c.l.b16 %v618
        %v907 = vunpack.c.l.b16 %v619
        %v908 = vunpack.c.l.b16 %v620
        %v909 = vunpack.c.l.b16 %v621
        %v910 = vunpack.c.l.b16 %v622
        %v911 = vunpack.c.l.b16 %v623
        %v912 = vunpack.c.l.b16 %v624
        %v913 = vunpack.c.l.b16 %v625
        %v914 = vunpack.c.l.b16 %v626
        %v915 = vunpack.c.l.b16 %v627
        %v916 = vunpack.c.l.b16 %v628
        %v917 = vunpack.c.l.b16 %v629
        %v918 = vunpack.c.l.b16 %v630
        %v919 = vunpack.c.l.b16 %v631
        %v920 = vunpack.c.l.b16 %v632
        %v921 = vunpack.c.l.b16 %v633
        %v922 = vunpack.c.l.b16 %v634
        %v923 = vunpack.c.l.b16 %v635
        %v924 = vunpack.c.l.b16 %v636
        %v925 = vunpack.c.l.b16 %v637
        %v926 = vunpack.c.l.b16 %v638
        %v927 = vunpack.c.l.b16 %v639
        %v928 = vunpack.c.l.b16 %v640
        %v929 = vunpack.c.l.b16 %v641
        %v930 = vunpack.c.l.b16 %v642
        %v931 = vunpack.c.l.b16 %v643
        %v932 = vunpack.c.l.b16 %v644
        %v933 = vunpack.c.l.b16 %v645
        %v934 = vunpack.c.l.b16 %v646
        %v935 = vunpack.c.l.b16 %v647
        %v936 = vunpack.c.l.b16 %v648
        %v937 = vunpack.c.l.b16 %v649
        %v938 = vunpack.c.l.b16 %v650
        %v939 = vunpack.c.l.b16 %v651
        %v940 = vpack.c.b16 %v797, %v796
        %v941 = vpack.c.b16 %v799, %v798
        %v942 = vpack.c.b16 %v801, %v800
        %v943 = vpack.c.b16 %v803, %v802
        %v944 = vpack.c.b16 %v805, %v804
        %v945 = vpack.c.b16 %v807, %v806
        %v946 = vpack.c.b16 %v809, %v808
        %v947 = vpack.c.b16 %v811, %v810
        %v948 = vpack.c.b16 %v813, %v812
        %v949 = vpack.c.b16 %v815, %v814
        %v950 = vpack.c.b16 %v817, %v816
        %v951 = vpack.c.b16 %v819, %v818
        %v952 = vpack.c.b16 %v821, %v820
        %v953 = vpack.c.b16 %v823, %v822
        %v954 = vpack.c.b16 %v825, %v824
        %v955 = vpack.c.b16 %v827, %v826
        %v956 = vpack.c.b16 %v829, %v828
        %v957 = vpack.c.b16 %v831, %v830
        %v958 = vpack.c.b16 %v833, %v832
        %v959 = vpack.c.b16 %v835, %v834
        %v960 = vpack.c.b16 %v837, %v836
        %v961 = vpack.c.b16 %v839, %v838
        %v962 = vpack.c.b16 %v841, %v840
        %v963 = vpack.c.b16 %v843, %v842
        %v964 = vpack.c.b16 %v845, %v844
        %v965 = vpack.c.b16 %v847, %v846
        %v966 = vpack.c.b16 %v849, %v848
        %v967 = vpack.c.b16 %v851, %v850
        %v968 = vpack.c.b16 %v853, %v852
        %v969 = vpack.c.b16 %v855, %v854
        %v970 = vpack.c.b16 %v857, %v856
        %v971 = vpack.c.b16 %v859, %v858
        %v972 = vpack.c.b16 %v861, %v860
        %v973 = vpack.c.b16 %v863, %v862
        %v974 = vpack.c.b16 %v865, %v864
        %v975 = vpack.c.b16 %v867, %v866
        %v976 = vpack.c.b16 %v869, %v868
        %v977 = vpack.c.b16 %v871, %v870
        %v978 = vpack.c.b16 %v873, %v872
        %v979 = vpack.c.b16 %v875, %v874
        %v980 = vpack.c.b16 %v877, %v876
        %v981 = vpack.c.b16 %v879, %v878
        %v982 = vpack.c.b16 %v881, %v880
        %v983 = vpack.c.b16 %v883, %v882
        %v984 = vpack.c.b16 %v885, %v884
        %v985 = vpack.c.b16 %v887, %v886
        %v986 = vpack.c.b16 %v889, %v888
        %v987 = vpack.c.b16 %v891, %v890
        %v988 = vpack.c.b16 %v893, %v892
        %v989 = vpack.c.b16 %v895, %v894
        %v990 = vpack.c.b16 %v897, %v896
        %v991 = vpack.c.b16 %v899, %v898
        %v992 = vpack.c.b16 %v901, %v900
        %v993 = vpack.c.b16 %v903, %v902
        %v994 = vpack.c.b16 %v905, %v904
        %v995 = vpack.c.b16 %v907, %v906
        %v996 = vpack.c.b16 %v909, %v908
        %v997 = vpack.c.b16 %v911, %v910
        %v998 = vpack.c.b16 %v913, %v912
        %v999 = vpack.c.b16 %v915, %v914
        %v1000 = vpack.c.b16 %v917, %v916
        %v1001 = vpack.c.b16 %v919, %v918
        %v1002 = vpack.c.b16 %v921, %v920
        %v1003 = vpack.c.b16 %v923, %v922
        %v1004 = vpack.c.b16 %v925, %v924
        %v1005 = vpack.c.b16 %v927, %v926
        %v1006 = vpack.c.b16 %v929, %v928
        %v1007 = vpack.c.b16 %v931, %v930
        %v1008 = vpack.c.b16 %v933, %v932
        %v1009 = vpack.c.b16 %v935, %v934
        %v1010 = vpack.c.b16 %v937, %v936
        %v1011 = vpack.c.b16 %v939, %v938
        %1084 = vmatprep.subr.bf16.mxu0 0
        %1085 = vmatpush1.bf16.msra.mxu0 %v947
        %1086 = vmatprep.subr.bf16.mxu0 0
        %1087 = vmatpush1.bf16.msra.mxu0 %v946
        %1088 = vmatprep.subr.bf16.mxu0 0
        %1089 = vmatpush1.bf16.msra.mxu0 %v945
        %1090 = vmatprep.subr.bf16.mxu0 0
        %1091 = vmatpush1.bf16.msra.mxu0 %v944
        %1092 = vmatprep.subr.bf16.mxu0 0
        %1093 = vmatpush1.bf16.msra.mxu0 %v943
        %1094 = vmatprep.subr.bf16.mxu0 0
        %1095 = vmatpush1.bf16.msra.mxu0 %v942
        %1096 = vmatprep.subr.bf16.mxu0 0
        %1097 = vmatpush1.bf16.msra.mxu0 %v941
        %1098 = vmatprep.subr.bf16.mxu0 0
        %1099 = vmatpush1.bf16.msra.mxu0 %v940
        %1100 = vmatprep.subr.bf16.mxu0 0
        %1101 = vmatpush2.bf16.msra.mxu0 %v955
        %1102 = vmatprep.subr.bf16.mxu0 0
        %1103 = vmatpush2.bf16.msra.mxu0 %v954
        %1104 = vmatprep.subr.bf16.mxu0 0
        %1105 = vmatpush2.bf16.msra.mxu0 %v953
        %1106 = vmatprep.subr.bf16.mxu0 0
        %1107 = vmatpush2.bf16.msra.mxu0 %v952
        %1108 = vmatprep.subr.bf16.mxu0 0
        %1109 = vmatpush2.bf16.msra.mxu0 %v951
        %1110 = vmatprep.subr.bf16.mxu0 0
        %1111 = vmatpush2.bf16.msra.mxu0 %v950
        %1112 = vmatprep.subr.bf16.mxu0 0
        %1113 = vmatpush2.bf16.msra.mxu0 %v949
        %1114 = vmatprep.subr.bf16.mxu0 0
        %1115 = vmatpush2.bf16.msra.mxu0 %v948
        %1116 = vmatprep.mubr.bf16.mxu0 %v475
        %1117 = vmatmul.mubr.bf16.gmra.mxu0 %v460
        %v1118 = vpop.f32.mrf.mxu0
        %v1119 = vadd.f32 0.0, %v1118
        %v1120 = vpop.f32.mrf.mxu0
        %v1121 = vpop.f32.mrf.mxu0
        %v1122 = vadd.f32 0.0, %v1121
        %v1123 = vpop.f32.mrf.mxu0
        %1124 = vmatprep.mubr.bf16.mxu0 %v476
        %1125 = vmatmul.mubr.bf16.gmra.mxu0 %v461
        %v1126 = vpop.f32.mrf.mxu0
        %v1127 = vadd.f32 0.0, %v1126
        %v1128 = vpop.f32.mrf.mxu0
        %v1129 = vpop.f32.mrf.mxu0
        %v1130 = vadd.f32 0.0, %v1129
        %v1131 = vpop.f32.mrf.mxu0
        %1132 = vmatprep.mubr.bf16.mxu0 %v475
        %1133 = vmatmul.mubr.bf16.gmra.mxu0 %v460
        %v1134 = vpop.f32.mrf.mxu0
        %v1135 = vadd.f32 0.0, %v1134
        %v1136 = vpop.f32.mrf.mxu0
        %v1137 = vpop.f32.mrf.mxu0
        %v1138 = vadd.f32 0.0, %v1137
        %v1139 = vpop.f32.mrf.mxu0
        %1140 = vmatprep.mubr.bf16.mxu0 %v477
        %1141 = vmatmul.mubr.bf16.gmra.mxu0 %v462
        %v1142 = vpop.f32.mrf.mxu0
        %v1143 = vadd.f32 0.0, %v1142
        %v1144 = vpop.f32.mrf.mxu0
        %v1145 = vpop.f32.mrf.mxu0
        %v1146 = vadd.f32 0.0, %v1145
        %v1147 = vpop.f32.mrf.mxu0
        %1148 = vmatprep.mubr.bf16.mxu0 %v478
        %1149 = vmatmul.mubr.bf16.gmra.mxu0 %v463
        %v1150 = vpop.f32.mrf.mxu0
        %v1151 = vadd.f32 0.0, %v1150
        %v1152 = vpop.f32.mrf.mxu0
        %v1153 = vpop.f32.mrf.mxu0
        %v1154 = vadd.f32 0.0, %v1153
        %v1155 = vpop.f32.mrf.mxu0
        %1156 = vmatprep.mubr.bf16.mxu0 %v479
        %1157 = vmatmul.mubr.bf16.gmra.mxu0 %v464
        %v1158 = vpop.f32.mrf.mxu0
        %v1159 = vadd.f32 0.0, %v1158
        %v1160 = vpop.f32.mrf.mxu0
        %v1161 = vpop.f32.mrf.mxu0
        %v1162 = vadd.f32 0.0, %v1161
        %v1163 = vpop.f32.mrf.mxu0
        %1164 = vmatprep.mubr.bf16.mxu0 %v480
        %1165 = vmatmul.mubr.bf16.gmra.mxu0 %v465
        %v1166 = vpop.f32.mrf.mxu0
        %v1167 = vadd.f32 0.0, %v1166
        %v1168 = vpop.f32.mrf.mxu0
        %v1169 = vpop.f32.mrf.mxu0
        %v1170 = vadd.f32 0.0, %v1169
        %v1171 = vpop.f32.mrf.mxu0
        %1172 = vmatprep.mubr.bf16.mxu0 %v481
        %1173 = vmatmul.mubr.bf16.gmra.mxu0 %v466
        %v1174 = vpop.f32.mrf.mxu0
        %v1175 = vadd.f32 0.0, %v1174
        %v1176 = vpop.f32.mrf.mxu0
        %v1177 = vpop.f32.mrf.mxu0
        %v1178 = vadd.f32 0.0, %v1177
        %v1179 = vpop.f32.mrf.mxu0
        %1180 = vmatprep.mubr.bf16.mxu0 %v482
        %1181 = vmatmul.mubr.bf16.gmra.mxu0 %v467
        %v1182 = vpop.f32.mrf.mxu0
        %v1183 = vadd.f32 0.0, %v1182
        %v1184 = vpop.f32.mrf.mxu0
        %v1185 = vpop.f32.mrf.mxu0
        %v1186 = vadd.f32 0.0, %v1185
        %v1187 = vpop.f32.mrf.mxu0
        %1188 = vmatprep.mubr.bf16.mxu0 %v483
        %1189 = vmatmul.mubr.bf16.gmra.mxu0 %v468
        %v1190 = vpop.f32.mrf.mxu0
        %v1191 = vadd.f32 0.0, %v1190
        %v1192 = vpop.f32.mrf.mxu0
        %v1193 = vpop.f32.mrf.mxu0
        %v1194 = vadd.f32 0.0, %v1193
        %v1195 = vpop.f32.mrf.mxu0
        %1196 = vmatprep.mubr.bf16.mxu0 %v484
        %1197 = vmatmul.mubr.bf16.gmra.mxu0 %v469
        %v1198 = vpop.f32.mrf.mxu0
        %v1199 = vadd.f32 0.0, %v1198
        %v1200 = vpop.f32.mrf.mxu0
        %v1201 = vpop.f32.mrf.mxu0
        %v1202 = vadd.f32 0.0, %v1201
        %v1203 = vpop.f32.mrf.mxu0
        %1204 = vmatprep.mubr.bf16.mxu0 %v485
        %1205 = vmatmul.mubr.bf16.gmra.mxu0 %v470
        %v1206 = vpop.f32.mrf.mxu0
        %v1207 = vadd.f32 0.0, %v1206
        %v1208 = vpop.f32.mrf.mxu0
        %v1209 = vpop.f32.mrf.mxu0
        %v1210 = vadd.f32 0.0, %v1209
        %v1211 = vpop.f32.mrf.mxu0
        %1212 = vmatprep.mubr.bf16.mxu0 %v486
        %1213 = vmatmul.mubr.bf16.gmra.mxu0 %v471
        %v1214 = vpop.f32.mrf.mxu0
        %v1215 = vadd.f32 0.0, %v1214
        %v1216 = vpop.f32.mrf.mxu0
        %v1217 = vpop.f32.mrf.mxu0
        %v1218 = vadd.f32 0.0, %v1217
        %v1219 = vpop.f32.mrf.mxu0
        %1220 = vmatprep.mubr.bf16.mxu0 %v487
        %1221 = vmatmul.mubr.bf16.gmra.mxu0 %v472
        %v1222 = vpop.f32.mrf.mxu0
        %v1223 = vadd.f32 0.0, %v1222
        %v1224 = vpop.f32.mrf.mxu0
        %v1225 = vpop.f32.mrf.mxu0
        %v1226 = vadd.f32 0.0, %v1225
        %v1227 = vpop.f32.mrf.mxu0
        %1228 = vmatprep.mubr.bf16.mxu0 %v488
        %1229 = vmatmul.mubr.bf16.gmra.mxu0 %v473
        %v1230 = vpop.f32.mrf.mxu0
        %v1231 = vadd.f32 0.0, %v1230
        %v1232 = vpop.f32.mrf.mxu0
        %v1233 = vpop.f32.mrf.mxu0
        %v1234 = vadd.f32 0.0, %v1233
        %v1235 = vpop.f32.mrf.mxu0
        %1236 = vmatprep.mubr.bf16.mxu0 %v489
        %1237 = vmatmul.mubr.bf16.gmra.mxu0 %v474
        %v1238 = vpop.f32.mrf.mxu0
        %v1239 = vadd.f32 0.0, %v1238
        %v1240 = vpop.f32.mrf.mxu0
        %v1241 = vpop.f32.mrf.mxu0
        %v1242 = vadd.f32 0.0, %v1241
        %v1243 = vpop.f32.mrf.mxu0
        %1244 = vdwg.mxu0
        %1245 = vmatprep.subr.bf16.mxu0 0
        %1246 = vmatpush1.bf16.msra.mxu0 %v963
        %1247 = vmatprep.subr.bf16.mxu0 0
        %1248 = vmatpush1.bf16.msra.mxu0 %v962
        %1249 = vmatprep.subr.bf16.mxu0 0
        %1250 = vmatpush1.bf16.msra.mxu0 %v961
        %1251 = vmatprep.subr.bf16.mxu0 0
        %1252 = vmatpush1.bf16.msra.mxu0 %v960
        %1253 = vmatprep.subr.bf16.mxu0 0
        %1254 = vmatpush1.bf16.msra.mxu0 %v959
        %1255 = vmatprep.subr.bf16.mxu0 0
        %1256 = vmatpush1.bf16.msra.mxu0 %v958
        %1257 = vmatprep.subr.bf16.mxu0 0
        %1258 = vmatpush1.bf16.msra.mxu0 %v957
        %1259 = vmatprep.subr.bf16.mxu0 0
        %1260 = vmatpush1.bf16.msra.mxu0 %v956
        %1261 = vmatprep.subr.bf16.mxu0 0
        %1262 = vmatpush2.bf16.msra.mxu0 %v971
        %1263 = vmatprep.subr.bf16.mxu0 0
        %1264 = vmatpush2.bf16.msra.mxu0 %v970
        %1265 = vmatprep.subr.bf16.mxu0 0
        %1266 = vmatpush2.bf16.msra.mxu0 %v969
        %1267 = vmatprep.subr.bf16.mxu0 0
        %1268 = vmatpush2.bf16.msra.mxu0 %v968
        %1269 = vmatprep.subr.bf16.mxu0 0
        %1270 = vmatpush2.bf16.msra.mxu0 %v967
        %1271 = vmatprep.subr.bf16.mxu0 0
        %1272 = vmatpush2.bf16.msra.mxu0 %v966
        %1273 = vmatprep.subr.bf16.mxu0 0
        %1274 = vmatpush2.bf16.msra.mxu0 %v965
        %1275 = vmatprep.subr.bf16.mxu0 0
        %1276 = vmatpush2.bf16.msra.mxu0 %v964
        %1277 = vmatprep.mubr.bf16.mxu0 %v461
        %1278 = vmatmul.mubr.bf16.gmra.mxu0 %v490
        %v1279 = vpop.f32.mrf.mxu0
        %v1280 = vadd.f32 %v1119, %v1279
        %v1281 = vpop.f32.mrf.mxu0
        %v1282 = vpop.f32.mrf.mxu0
        %v1283 = vadd.f32 %v1122, %v1282
        %v1284 = vpop.f32.mrf.mxu0
        %1285 = vmatprep.mubr.bf16.mxu0 %v460
        %1286 = vmatmul.mubr.bf16.gmra.mxu0 %v491
        %v1287 = vpop.f32.mrf.mxu0
        %v1288 = vadd.f32 %v1127, %v1287
        %v1289 = vpop.f32.mrf.mxu0
        %v1290 = vpop.f32.mrf.mxu0
        %v1291 = vadd.f32 %v1130, %v1290
        %v1292 = vpop.f32.mrf.mxu0
        %1293 = vmatprep.mubr.bf16.mxu0 %v462
        %1294 = vmatmul.mubr.bf16.gmra.mxu0 %v490
        %v1295 = vpop.f32.mrf.mxu0
        %v1296 = vadd.f32 %v1135, %v1295
        %v1297 = vpop.f32.mrf.mxu0
        %v1298 = vpop.f32.mrf.mxu0
        %v1299 = vadd.f32 %v1138, %v1298
        %v1300 = vpop.f32.mrf.mxu0
        %1301 = vmatprep.mubr.bf16.mxu0 %v463
        %1302 = vmatmul.mubr.bf16.gmra.mxu0 %v492
        %v1303 = vpop.f32.mrf.mxu0
        %v1304 = vadd.f32 %v1143, %v1303
        %v1305 = vpop.f32.mrf.mxu0
        %v1306 = vpop.f32.mrf.mxu0
        %v1307 = vadd.f32 %v1146, %v1306
        %v1308 = vpop.f32.mrf.mxu0
        %1309 = vmatprep.mubr.bf16.mxu0 %v464
        %1310 = vmatmul.mubr.bf16.gmra.mxu0 %v493
        %v1311 = vpop.f32.mrf.mxu0
        %v1312 = vadd.f32 %v1151, %v1311
        %v1313 = vpop.f32.mrf.mxu0
        %v1314 = vpop.f32.mrf.mxu0
        %v1315 = vadd.f32 %v1154, %v1314
        %v1316 = vpop.f32.mrf.mxu0
        %1317 = vmatprep.mubr.bf16.mxu0 %v465
        %1318 = vmatmul.mubr.bf16.gmra.mxu0 %v494
        %v1319 = vpop.f32.mrf.mxu0
        %v1320 = vadd.f32 %v1159, %v1319
        %v1321 = vpop.f32.mrf.mxu0
        %v1322 = vpop.f32.mrf.mxu0
        %v1323 = vadd.f32 %v1162, %v1322
        %v1324 = vpop.f32.mrf.mxu0
        %1325 = vmatprep.mubr.bf16.mxu0 %v466
        %1326 = vmatmul.mubr.bf16.gmra.mxu0 %v495
        %v1327 = vpop.f32.mrf.mxu0
        %v1328 = vadd.f32 %v1167, %v1327
        %v1329 = vpop.f32.mrf.mxu0
        %v1330 = vpop.f32.mrf.mxu0
        %v1331 = vadd.f32 %v1170, %v1330
        %v1332 = vpop.f32.mrf.mxu0
        %1333 = vmatprep.mubr.bf16.mxu0 %v467
        %1334 = vmatmul.mubr.bf16.gmra.mxu0 %v496
        %v1335 = vpop.f32.mrf.mxu0
        %v1336 = vadd.f32 %v1175, %v1335
        %v1337 = vpop.f32.mrf.mxu0
        %v1338 = vpop.f32.mrf.mxu0
        %v1339 = vadd.f32 %v1178, %v1338
        %v1340 = vpop.f32.mrf.mxu0
        %1341 = vmatprep.mubr.bf16.mxu0 %v468
        %1342 = vmatmul.mubr.bf16.gmra.mxu0 %v497
        %v1343 = vpop.f32.mrf.mxu0
        %v1344 = vadd.f32 %v1183, %v1343
        %v1345 = vpop.f32.mrf.mxu0
        %v1346 = vpop.f32.mrf.mxu0
        %v1347 = vadd.f32 %v1186, %v1346
        %v1348 = vpop.f32.mrf.mxu0
        %1349 = vmatprep.mubr.bf16.mxu0 %v469
        %1350 = vmatmul.mubr.bf16.gmra.mxu0 %v498
        %v1351 = vpop.f32.mrf.mxu0
        %v1352 = vadd.f32 %v1191, %v1351
        %v1353 = vpop.f32.mrf.mxu0
        %v1354 = vpop.f32.mrf.mxu0
        %v1355 = vadd.f32 %v1194, %v1354
        %v1356 = vpop.f32.mrf.mxu0
        %1357 = vmatprep.mubr.bf16.mxu0 %v470
        %1358 = vmatmul.mubr.bf16.gmra.mxu0 %v499
        %v1359 = vpop.f32.mrf.mxu0
        %v1360 = vadd.f32 %v1199, %v1359
        %v1361 = vpop.f32.mrf.mxu0
        %v1362 = vpop.f32.mrf.mxu0
        %v1363 = vadd.f32 %v1202, %v1362
        %v1364 = vpop.f32.mrf.mxu0
        %1365 = vmatprep.mubr.bf16.mxu0 %v471
        %1366 = vmatmul.mubr.bf16.gmra.mxu0 %v500
        %v1367 = vpop.f32.mrf.mxu0
        %v1368 = vadd.f32 %v1207, %v1367
        %v1369 = vpop.f32.mrf.mxu0
        %v1370 = vpop.f32.mrf.mxu0
        %v1371 = vadd.f32 %v1210, %v1370
        %v1372 = vpop.f32.mrf.mxu0
        %1373 = vmatprep.mubr.bf16.mxu0 %v472
        %1374 = vmatmul.mubr.bf16.gmra.mxu0 %v501
        %v1375 = vpop.f32.mrf.mxu0
        %v1376 = vadd.f32 %v1215, %v1375
        %v1377 = vpop.f32.mrf.mxu0
        %v1378 = vpop.f32.mrf.mxu0
        %v1379 = vadd.f32 %v1218, %v1378
        %v1380 = vpop.f32.mrf.mxu0
        %1381 = vmatprep.mubr.bf16.mxu0 %v473
        %1382 = vmatmul.mubr.bf16.gmra.mxu0 %v502
        %v1383 = vpop.f32.mrf.mxu0
        %v1384 = vadd.f32 %v1223, %v1383
        %v1385 = vpop.f32.mrf.mxu0
        %v1386 = vpop.f32.mrf.mxu0
        %v1387 = vadd.f32 %v1226, %v1386
        %v1388 = vpop.f32.mrf.mxu0
        %1389 = vmatprep.mubr.bf16.mxu0 %v474
        %1390 = vmatmul.mubr.bf16.gmra.mxu0 %v503
        %v1391 = vpop.f32.mrf.mxu0
        %v1392 = vadd.f32 %v1231, %v1391
        %v1393 = vpop.f32.mrf.mxu0
        %v1394 = vpop.f32.mrf.mxu0
        %v1395 = vadd.f32 %v1234, %v1394
        %v1396 = vpop.f32.mrf.mxu0
        %1397 = vmatprep.mubr.bf16.mxu0 %v505
        %1398 = vmatmul.mubr.bf16.gmra.mxu0 %v504
        %v1399 = vpop.f32.mrf.mxu0
        %v1400 = vadd.f32 %v1239, %v1399
        %v1401 = vpop.f32.mrf.mxu0
        %v1402 = vpop.f32.mrf.mxu0
        %v1403 = vadd.f32 %v1242, %v1402
        %v1404 = vpop.f32.mrf.mxu0
        %1405 = vdwg.mxu0
        %1406 = vmatprep.subr.bf16.mxu0 0
        %1407 = vmatpush1.bf16.msra.mxu0 %v979
        %1408 = vmatprep.subr.bf16.mxu0 0
        %1409 = vmatpush1.bf16.msra.mxu0 %v978
        %1410 = vmatprep.subr.bf16.mxu0 0
        %1411 = vmatpush1.bf16.msra.mxu0 %v977
        %1412 = vmatprep.subr.bf16.mxu0 0
        %1413 = vmatpush1.bf16.msra.mxu0 %v976
        %1414 = vmatprep.subr.bf16.mxu0 0
        %1415 = vmatpush1.bf16.msra.mxu0 %v975
        %1416 = vmatprep.subr.bf16.mxu0 0
        %1417 = vmatpush1.bf16.msra.mxu0 %v974
        %1418 = vmatprep.subr.bf16.mxu0 0
        %1419 = vmatpush1.bf16.msra.mxu0 %v973
        %1420 = vmatprep.subr.bf16.mxu0 0
        %1421 = vmatpush1.bf16.msra.mxu0 %v972
        %1422 = vmatprep.subr.bf16.mxu0 0
        %1423 = vmatpush2.bf16.msra.mxu0 %v987
        %1424 = vmatprep.subr.bf16.mxu0 0
        %1425 = vmatpush2.bf16.msra.mxu0 %v986
        %1426 = vmatprep.subr.bf16.mxu0 0
        %1427 = vmatpush2.bf16.msra.mxu0 %v985
        %1428 = vmatprep.subr.bf16.mxu0 0
        %1429 = vmatpush2.bf16.msra.mxu0 %v984
        %1430 = vmatprep.subr.bf16.mxu0 0
        %1431 = vmatpush2.bf16.msra.mxu0 %v983
        %1432 = vmatprep.subr.bf16.mxu0 0
        %1433 = vmatpush2.bf16.msra.mxu0 %v982
        %1434 = vmatprep.subr.bf16.mxu0 0
        %1435 = vmatpush2.bf16.msra.mxu0 %v981
        %1436 = vmatprep.subr.bf16.mxu0 0
        %1437 = vmatpush2.bf16.msra.mxu0 %v980
        %1438 = vmatprep.mubr.bf16.mxu0 %v491
        %1439 = vmatmul.mubr.bf16.gmra.mxu0 %v476
        %v1440 = vpop.f32.mrf.mxu0
        %v1441 = vadd.f32 %v1280, %v1440
        %v1442 = vpop.f32.mrf.mxu0
        %v1443 = vpop.f32.mrf.mxu0
        %v1444 = vadd.f32 %v1283, %v1443
        %v1445 = vpop.f32.mrf.mxu0
        %1446 = vmatprep.mubr.bf16.mxu0 %v490
        %1447 = vmatmul.mubr.bf16.gmra.mxu0 %v475
        %v1448 = vpop.f32.mrf.mxu0
        %v1449 = vadd.f32 %v1288, %v1448
        %v1450 = vpop.f32.mrf.mxu0
        %v1451 = vpop.f32.mrf.mxu0
        %v1452 = vadd.f32 %v1291, %v1451
        %v1453 = vpop.f32.mrf.mxu0
        %1454 = vmatprep.mubr.bf16.mxu0 %v492
        %1455 = vmatmul.mubr.bf16.gmra.mxu0 %v477
        %v1456 = vpop.f32.mrf.mxu0
        %v1457 = vadd.f32 %v1296, %v1456
        %v1458 = vpop.f32.mrf.mxu0
        %v1459 = vpop.f32.mrf.mxu0
        %v1460 = vadd.f32 %v1299, %v1459
        %v1461 = vpop.f32.mrf.mxu0
        %1462 = vmatprep.mubr.bf16.mxu0 %v493
        %1463 = vmatmul.mubr.bf16.gmra.mxu0 %v478
        %v1464 = vpop.f32.mrf.mxu0
        %v1465 = vadd.f32 %v1304, %v1464
        %v1466 = vpop.f32.mrf.mxu0
        %v1467 = vpop.f32.mrf.mxu0
        %v1468 = vadd.f32 %v1307, %v1467
        %v1469 = vpop.f32.mrf.mxu0
        %1470 = vmatprep.mubr.bf16.mxu0 %v494
        %1471 = vmatmul.mubr.bf16.gmra.mxu0 %v479
        %v1472 = vpop.f32.mrf.mxu0
        %v1473 = vadd.f32 %v1312, %v1472
        %v1474 = vpop.f32.mrf.mxu0
        %v1475 = vpop.f32.mrf.mxu0
        %v1476 = vadd.f32 %v1315, %v1475
        %v1477 = vpop.f32.mrf.mxu0
        %1478 = vmatprep.mubr.bf16.mxu0 %v495
        %1479 = vmatmul.mubr.bf16.gmra.mxu0 %v480
        %v1480 = vpop.f32.mrf.mxu0
        %v1481 = vadd.f32 %v1320, %v1480
        %v1482 = vpop.f32.mrf.mxu0
        %v1483 = vpop.f32.mrf.mxu0
        %v1484 = vadd.f32 %v1323, %v1483
        %v1485 = vpop.f32.mrf.mxu0
        %1486 = vmatprep.mubr.bf16.mxu0 %v496
        %1487 = vmatmul.mubr.bf16.gmra.mxu0 %v481
        %v1488 = vpop.f32.mrf.mxu0
        %v1489 = vadd.f32 %v1328, %v1488
        %v1490 = vpop.f32.mrf.mxu0
        %v1491 = vpop.f32.mrf.mxu0
        %v1492 = vadd.f32 %v1331, %v1491
        %v1493 = vpop.f32.mrf.mxu0
        %1494 = vmatprep.mubr.bf16.mxu0 %v497
        %1495 = vmatmul.mubr.bf16.gmra.mxu0 %v482
        %v1496 = vpop.f32.mrf.mxu0
        %v1497 = vadd.f32 %v1336, %v1496
        %v1498 = vpop.f32.mrf.mxu0
        %v1499 = vpop.f32.mrf.mxu0
        %v1500 = vadd.f32 %v1339, %v1499
        %v1501 = vpop.f32.mrf.mxu0
        %1502 = vmatprep.mubr.bf16.mxu0 %v498
        %1503 = vmatmul.mubr.bf16.gmra.mxu0 %v483
        %v1504 = vpop.f32.mrf.mxu0
        %v1505 = vadd.f32 %v1344, %v1504
        %v1506 = vpop.f32.mrf.mxu0
        %v1507 = vpop.f32.mrf.mxu0
        %v1508 = vadd.f32 %v1347, %v1507
        %v1509 = vpop.f32.mrf.mxu0
        %1510 = vmatprep.mubr.bf16.mxu0 %v499
        %1511 = vmatmul.mubr.bf16.gmra.mxu0 %v484
        %v1512 = vpop.f32.mrf.mxu0
        %v1513 = vadd.f32 %v1352, %v1512
        %v1514 = vpop.f32.mrf.mxu0
        %v1515 = vpop.f32.mrf.mxu0
        %v1516 = vadd.f32 %v1355, %v1515
        %v1517 = vpop.f32.mrf.mxu0
        %1518 = vmatprep.mubr.bf16.mxu0 %v500
        %1519 = vmatmul.mubr.bf16.gmra.mxu0 %v485
        %v1520 = vpop.f32.mrf.mxu0
        %v1521 = vadd.f32 %v1360, %v1520
        %v1522 = vpop.f32.mrf.mxu0
        %v1523 = vpop.f32.mrf.mxu0
        %v1524 = vadd.f32 %v1363, %v1523
        %v1525 = vpop.f32.mrf.mxu0
        %1526 = vmatprep.mubr.bf16.mxu0 %v501
        %1527 = vmatmul.mubr.bf16.gmra.mxu0 %v486
        %v1528 = vpop.f32.mrf.mxu0
        %v1529 = vadd.f32 %v1368, %v1528
        %v1530 = vpop.f32.mrf.mxu0
        %v1531 = vpop.f32.mrf.mxu0
        %v1532 = vadd.f32 %v1371, %v1531
        %v1533 = vpop.f32.mrf.mxu0
        %1534 = vmatprep.mubr.bf16.mxu0 %v502
        %1535 = vmatmul.mubr.bf16.gmra.mxu0 %v487
        %v1536 = vpop.f32.mrf.mxu0
        %v1537 = vadd.f32 %v1376, %v1536
        %v1538 = vpop.f32.mrf.mxu0
        %v1539 = vpop.f32.mrf.mxu0
        %v1540 = vadd.f32 %v1379, %v1539
        %v1541 = vpop.f32.mrf.mxu0
        %1542 = vmatprep.mubr.bf16.mxu0 %v503
        %1543 = vmatmul.mubr.bf16.gmra.mxu0 %v488
        %v1544 = vpop.f32.mrf.mxu0
        %v1545 = vadd.f32 %v1384, %v1544
        %v1546 = vpop.f32.mrf.mxu0
        %v1547 = vpop.f32.mrf.mxu0
        %v1548 = vadd.f32 %v1387, %v1547
        %v1549 = vpop.f32.mrf.mxu0
        %1550 = vmatprep.mubr.bf16.mxu0 %v504
        %1551 = vmatmul.mubr.bf16.gmra.mxu0 %v489
        %v1552 = vpop.f32.mrf.mxu0
        %v1553 = vadd.f32 %v1392, %v1552
        %v1554 = vpop.f32.mrf.mxu0
        %v1555 = vpop.f32.mrf.mxu0
        %v1556 = vadd.f32 %v1395, %v1555
        %v1557 = vpop.f32.mrf.mxu0
        %1558 = vmatprep.mubr.bf16.mxu0 %v507
        %1559 = vmatmul.mubr.bf16.gmra.mxu0 %v506
        %v1560 = vpop.f32.mrf.mxu0
        %v1561 = vadd.f32 %v1400, %v1560
        %v1562 = vpop.f32.mrf.mxu0
        %v1563 = vpop.f32.mrf.mxu0
        %v1564 = vadd.f32 %v1403, %v1563
        %v1565 = vpop.f32.mrf.mxu0
        %1566 = vdwg.mxu0
        %1567 = vmatprep.subr.bf16.mxu0 0
        %1568 = vmatpush1.bf16.msra.mxu0 %v995
        %1569 = vmatprep.subr.bf16.mxu0 0
        %1570 = vmatpush1.bf16.msra.mxu0 %v994
        %1571 = vmatprep.subr.bf16.mxu0 0
        %1572 = vmatpush1.bf16.msra.mxu0 %v993
        %1573 = vmatprep.subr.bf16.mxu0 0
        %1574 = vmatpush1.bf16.msra.mxu0 %v992
        %1575 = vmatprep.subr.bf16.mxu0 0
        %1576 = vmatpush1.bf16.msra.mxu0 %v991
        %1577 = vmatprep.subr.bf16.mxu0 0
        %1578 = vmatpush1.bf16.msra.mxu0 %v990
        %1579 = vmatprep.subr.bf16.mxu0 0
        %1580 = vmatpush1.bf16.msra.mxu0 %v989
        %1581 = vmatprep.subr.bf16.mxu0 0
        %1582 = vmatpush1.bf16.msra.mxu0 %v988
        %1583 = vmatprep.subr.bf16.mxu0 0
        %1584 = vmatpush2.bf16.msra.mxu0 %v1003
        %1585 = vmatprep.subr.bf16.mxu0 0
        %1586 = vmatpush2.bf16.msra.mxu0 %v1002
        %1587 = vmatprep.subr.bf16.mxu0 0
        %1588 = vmatpush2.bf16.msra.mxu0 %v1001
        %1589 = vmatprep.subr.bf16.mxu0 0
        %1590 = vmatpush2.bf16.msra.mxu0 %v1000
        %1591 = vmatprep.subr.bf16.mxu0 0
        %1592 = vmatpush2.bf16.msra.mxu0 %v999
        %1593 = vmatprep.subr.bf16.mxu0 0
        %1594 = vmatpush2.bf16.msra.mxu0 %v998
        %1595 = vmatprep.subr.bf16.mxu0 0
        %1596 = vmatpush2.bf16.msra.mxu0 %v997
        %1597 = vmatprep.subr.bf16.mxu0 0
        %1598 = vmatpush2.bf16.msra.mxu0 %v996
        %1599 = vmatprep.mubr.bf16.mxu0 %v475
        %1600 = vmatmul.mubr.bf16.gmra.mxu0 %v460
        %v1601 = vpop.f32.mrf.mxu0
        %v1602 = vadd.f32 %v1441, %v1601
        %v1603 = vpop.f32.mrf.mxu0
        %v1604 = vpop.f32.mrf.mxu0
        %v1605 = vadd.f32 %v1444, %v1604
        %v1606 = vpop.f32.mrf.mxu0
        %1607 = vmatprep.mubr.bf16.mxu0 %v477
        %1608 = vmatmul.mubr.bf16.gmra.mxu0 %v462
        %v1609 = vpop.f32.mrf.mxu0
        %v1610 = vadd.f32 %v1449, %v1609
        %v1611 = vpop.f32.mrf.mxu0
        %v1612 = vpop.f32.mrf.mxu0
        %v1613 = vadd.f32 %v1452, %v1612
        %v1614 = vpop.f32.mrf.mxu0
        %1615 = vmatprep.mubr.bf16.mxu0 %v478
        %1616 = vmatmul.mubr.bf16.gmra.mxu0 %v463
        %v1617 = vpop.f32.mrf.mxu0
        %v1618 = vadd.f32 %v1457, %v1617
        %v1619 = vpop.f32.mrf.mxu0
        %v1620 = vpop.f32.mrf.mxu0
        %v1621 = vadd.f32 %v1460, %v1620
        %v1622 = vpop.f32.mrf.mxu0
        %1623 = vmatprep.mubr.bf16.mxu0 %v479
        %1624 = vmatmul.mubr.bf16.gmra.mxu0 %v464
        %v1625 = vpop.f32.mrf.mxu0
        %v1626 = vadd.f32 %v1465, %v1625
        %v1627 = vpop.f32.mrf.mxu0
        %v1628 = vpop.f32.mrf.mxu0
        %v1629 = vadd.f32 %v1468, %v1628
        %v1630 = vpop.f32.mrf.mxu0
        %1631 = vmatprep.mubr.bf16.mxu0 %v480
        %1632 = vmatmul.mubr.bf16.gmra.mxu0 %v465
        %v1633 = vpop.f32.mrf.mxu0
        %v1634 = vadd.f32 %v1473, %v1633
        %v1635 = vpop.f32.mrf.mxu0
        %v1636 = vpop.f32.mrf.mxu0
        %v1637 = vadd.f32 %v1476, %v1636
        %v1638 = vpop.f32.mrf.mxu0
        %1639 = vmatprep.mubr.bf16.mxu0 %v481
        %1640 = vmatmul.mubr.bf16.gmra.mxu0 %v466
        %v1641 = vpop.f32.mrf.mxu0
        %v1642 = vadd.f32 %v1481, %v1641
        %v1643 = vpop.f32.mrf.mxu0
        %v1644 = vpop.f32.mrf.mxu0
        %v1645 = vadd.f32 %v1484, %v1644
        %v1646 = vpop.f32.mrf.mxu0
        %1647 = vmatprep.mubr.bf16.mxu0 %v482
        %1648 = vmatmul.mubr.bf16.gmra.mxu0 %v467
        %v1649 = vpop.f32.mrf.mxu0
        %v1650 = vadd.f32 %v1489, %v1649
        %v1651 = vpop.f32.mrf.mxu0
        %v1652 = vpop.f32.mrf.mxu0
        %v1653 = vadd.f32 %v1492, %v1652
        %v1654 = vpop.f32.mrf.mxu0
        %1655 = vmatprep.mubr.bf16.mxu0 %v483
        %1656 = vmatmul.mubr.bf16.gmra.mxu0 %v468
        %v1657 = vpop.f32.mrf.mxu0
        %v1658 = vadd.f32 %v1497, %v1657
        %v1659 = vpop.f32.mrf.mxu0
        %v1660 = vpop.f32.mrf.mxu0
        %v1661 = vadd.f32 %v1500, %v1660
        %v1662 = vpop.f32.mrf.mxu0
        %1663 = vmatprep.mubr.bf16.mxu0 %v484
        %1664 = vmatmul.mubr.bf16.gmra.mxu0 %v469
        %v1665 = vpop.f32.mrf.mxu0
        %v1666 = vadd.f32 %v1505, %v1665
        %v1667 = vpop.f32.mrf.mxu0
        %v1668 = vpop.f32.mrf.mxu0
        %v1669 = vadd.f32 %v1508, %v1668
        %v1670 = vpop.f32.mrf.mxu0
        %1671 = vmatprep.mubr.bf16.mxu0 %v485
        %1672 = vmatmul.mubr.bf16.gmra.mxu0 %v470
        %v1673 = vpop.f32.mrf.mxu0
        %v1674 = vadd.f32 %v1513, %v1673
        %v1675 = vpop.f32.mrf.mxu0
        %v1676 = vpop.f32.mrf.mxu0
        %v1677 = vadd.f32 %v1516, %v1676
        %v1678 = vpop.f32.mrf.mxu0
        %1679 = vmatprep.mubr.bf16.mxu0 %v486
        %1680 = vmatmul.mubr.bf16.gmra.mxu0 %v471
        %v1681 = vpop.f32.mrf.mxu0
        %v1682 = vadd.f32 %v1521, %v1681
        %v1683 = vpop.f32.mrf.mxu0
        %v1684 = vpop.f32.mrf.mxu0
        %v1685 = vadd.f32 %v1524, %v1684
        %v1686 = vpop.f32.mrf.mxu0
        %1687 = vmatprep.mubr.bf16.mxu0 %v487
        %1688 = vmatmul.mubr.bf16.gmra.mxu0 %v472
        %v1689 = vpop.f32.mrf.mxu0
        %v1690 = vadd.f32 %v1529, %v1689
        %v1691 = vpop.f32.mrf.mxu0
        %v1692 = vpop.f32.mrf.mxu0
        %v1693 = vadd.f32 %v1532, %v1692
        %v1694 = vpop.f32.mrf.mxu0
        %1695 = vmatprep.mubr.bf16.mxu0 %v488
        %1696 = vmatmul.mubr.bf16.gmra.mxu0 %v473
        %v1697 = vpop.f32.mrf.mxu0
        %v1698 = vadd.f32 %v1537, %v1697
        %v1699 = vpop.f32.mrf.mxu0
        %v1700 = vpop.f32.mrf.mxu0
        %v1701 = vadd.f32 %v1540, %v1700
        %v1702 = vpop.f32.mrf.mxu0
        %1703 = vmatprep.mubr.bf16.mxu0 %v489
        %1704 = vmatmul.mubr.bf16.gmra.mxu0 %v474
        %v1705 = vpop.f32.mrf.mxu0
        %v1706 = vadd.f32 %v1545, %v1705
        %v1707 = vpop.f32.mrf.mxu0
        %v1708 = vpop.f32.mrf.mxu0
        %v1709 = vadd.f32 %v1548, %v1708
        %v1710 = vpop.f32.mrf.mxu0
        %1711 = vmatprep.mubr.bf16.mxu0 %v506
        %1712 = vmatmul.mubr.bf16.gmra.mxu0 %v505
        %v1713 = vpop.f32.mrf.mxu0
        %v1714 = vadd.f32 %v1553, %v1713
        %v1715 = vpop.f32.mrf.mxu0
        %v1716 = vpop.f32.mrf.mxu0
        %v1717 = vadd.f32 %v1556, %v1716
        %v1718 = vpop.f32.mrf.mxu0
        %1719 = vmatprep.mubr.bf16.mxu0 %v489
        %1720 = vmatmul.mubr.bf16.gmra.mxu0 %v474
        %v1721 = vpop.f32.mrf.mxu0
        %v1722 = vadd.f32 %v1561, %v1721
        %v1723 = vpop.f32.mrf.mxu0
        %v1724 = vpop.f32.mrf.mxu0
        %v1725 = vadd.f32 %v1564, %v1724
        %v1726 = vpop.f32.mrf.mxu0
        %1727 = vdwg.mxu0
        %1728 = vmatprep.subr.bf16.mxu0 0
        %1729 = vmatpush1.bf16.msra.mxu0 %v1011
        %1730 = vmatprep.subr.bf16.mxu0 0
        %1731 = vmatpush1.bf16.msra.mxu0 %v1010
        %1732 = vmatprep.subr.bf16.mxu0 0
        %1733 = vmatpush1.bf16.msra.mxu0 %v1009
        %1734 = vmatprep.subr.bf16.mxu0 0
        %1735 = vmatpush1.bf16.msra.mxu0 %v1008
        %1736 = vmatprep.subr.bf16.mxu0 0
        %1737 = vmatpush1.bf16.msra.mxu0 %v1007
        %1738 = vmatprep.subr.bf16.mxu0 0
        %1739 = vmatpush1.bf16.msra.mxu0 %v1006
        %1740 = vmatprep.subr.bf16.mxu0 0
        %1741 = vmatpush1.bf16.msra.mxu0 %v1005
        %1742 = vmatprep.subr.bf16.mxu0 0
        %1743 = vmatpush1.bf16.msra.mxu0 %v1004
        %1744 = vmatprep.subr.bf16.mxu0 0
        %1745 = vmatpush2.bf16.msra.mxu0 0
        %1746 = vmatprep.subr.bf16.mxu0 0
        %1747 = vmatpush2.bf16.msra.mxu0 0
        %1748 = vmatprep.subr.bf16.mxu0 0
        %1749 = vmatpush2.bf16.msra.mxu0 0
        %1750 = vmatprep.subr.bf16.mxu0 0
        %1751 = vmatpush2.bf16.msra.mxu0 0
        %1752 = vmatprep.subr.bf16.mxu0 0
        %1753 = vmatpush2.bf16.msra.mxu0 0
        %1754 = vmatprep.subr.bf16.mxu0 0
        %1755 = vmatpush2.bf16.msra.mxu0 0
        %1756 = vmatprep.subr.bf16.mxu0 0
        %1757 = vmatpush2.bf16.msra.mxu0 0
        %1758 = vmatprep.subr.bf16.mxu0 0
        %1759 = vmatpush2.bf16.msra.mxu0 0
        %1760 = vmatprep.mubr.bf16.mxu0 0
        %1761 = vmatmul.mubr.bf16.gmra.mxu0 %v490
        %v1762 = vpop.f32.mrf.mxu0
        %v1763 = vadd.f32 %v1602, %v1762
        %v1764 = vpop.f32.mrf.mxu0
        %v1765 = vpop.f32.mrf.mxu0
        %v1766 = vadd.f32 %v1605, %v1765
        %v1767 = vpop.f32.mrf.mxu0
        %1768 = vmatprep.mubr.bf16.mxu0 0
        %1769 = vmatmul.mubr.bf16.gmra.mxu0 %v492
        %v1770 = vpop.f32.mrf.mxu0
        %v1771 = vadd.f32 %v1610, %v1770
        %v1772 = vpop.f32.mrf.mxu0
        %v1773 = vpop.f32.mrf.mxu0
        %v1774 = vadd.f32 %v1613, %v1773
        %v1775 = vpop.f32.mrf.mxu0
        %1776 = vmatprep.mubr.bf16.mxu0 0
        %1777 = vmatmul.mubr.bf16.gmra.mxu0 %v493
        %v1778 = vpop.f32.mrf.mxu0
        %v1779 = vadd.f32 %v1618, %v1778
        %v1780 = vpop.f32.mrf.mxu0
        %v1781 = vpop.f32.mrf.mxu0
        %v1782 = vadd.f32 %v1621, %v1781
        %v1783 = vpop.f32.mrf.mxu0
        %1784 = vmatprep.mubr.bf16.mxu0 0
        %1785 = vmatmul.mubr.bf16.gmra.mxu0 %v494
        %v1786 = vpop.f32.mrf.mxu0
        %v1787 = vadd.f32 %v1626, %v1786
        %v1788 = vpop.f32.mrf.mxu0
        %v1789 = vpop.f32.mrf.mxu0
        %v1790 = vadd.f32 %v1629, %v1789
        %v1791 = vpop.f32.mrf.mxu0
        %1792 = vmatprep.mubr.bf16.mxu0 0
        %1793 = vmatmul.mubr.bf16.gmra.mxu0 %v495
        %v1794 = vpop.f32.mrf.mxu0
        %v1795 = vadd.f32 %v1634, %v1794
        %v1796 = vpop.f32.mrf.mxu0
        %v1797 = vpop.f32.mrf.mxu0
        %v1798 = vadd.f32 %v1637, %v1797
        %v1799 = vpop.f32.mrf.mxu0
        %1800 = vmatprep.mubr.bf16.mxu0 0
        %1801 = vmatmul.mubr.bf16.gmra.mxu0 %v496
        %v1802 = vpop.f32.mrf.mxu0
        %v1803 = vadd.f32 %v1642, %v1802
        %v1804 = vpop.f32.mrf.mxu0
        %v1805 = vpop.f32.mrf.mxu0
        %v1806 = vadd.f32 %v1645, %v1805
        %v1807 = vpop.f32.mrf.mxu0
        %1808 = vmatprep.mubr.bf16.mxu0 0
        %1809 = vmatmul.mubr.bf16.gmra.mxu0 %v497
        %v1810 = vpop.f32.mrf.mxu0
        %v1811 = vadd.f32 %v1650, %v1810
        %v1812 = vpop.f32.mrf.mxu0
        %v1813 = vpop.f32.mrf.mxu0
        %v1814 = vadd.f32 %v1653, %v1813
        %v1815 = vpop.f32.mrf.mxu0
        %1816 = vmatprep.mubr.bf16.mxu0 0
        %1817 = vmatmul.mubr.bf16.gmra.mxu0 %v498
        %v1818 = vpop.f32.mrf.mxu0
        %v1819 = vadd.f32 %v1658, %v1818
        %v1820 = vpop.f32.mrf.mxu0
        %v1821 = vpop.f32.mrf.mxu0
        %v1822 = vadd.f32 %v1661, %v1821
        %v1823 = vpop.f32.mrf.mxu0
        %1824 = vmatprep.mubr.bf16.mxu0 0
        %1825 = vmatmul.mubr.bf16.gmra.mxu0 %v499
        %v1826 = vpop.f32.mrf.mxu0
        %v1827 = vadd.f32 %v1666, %v1826
        %v1828 = vpop.f32.mrf.mxu0
        %v1829 = vpop.f32.mrf.mxu0
        %v1830 = vadd.f32 %v1669, %v1829
        %v1831 = vpop.f32.mrf.mxu0
        %1832 = vmatprep.mubr.bf16.mxu0 0
        %1833 = vmatmul.mubr.bf16.gmra.mxu0 %v500
        %v1834 = vpop.f32.mrf.mxu0
        %v1835 = vadd.f32 %v1674, %v1834
        %v1836 = vpop.f32.mrf.mxu0
        %v1837 = vpop.f32.mrf.mxu0
        %v1838 = vadd.f32 %v1677, %v1837
        %v1839 = vpop.f32.mrf.mxu0
        %1840 = vmatprep.mubr.bf16.mxu0 0
        %1841 = vmatmul.mubr.bf16.gmra.mxu0 %v501
        %v1842 = vpop.f32.mrf.mxu0
        %v1843 = vadd.f32 %v1682, %v1842
        %v1844 = vpop.f32.mrf.mxu0
        %v1845 = vpop.f32.mrf.mxu0
        %v1846 = vadd.f32 %v1685, %v1845
        %v1847 = vpop.f32.mrf.mxu0
        %1848 = vmatprep.mubr.bf16.mxu0 0
        %1849 = vmatmul.mubr.bf16.gmra.mxu0 %v502
        %v1850 = vpop.f32.mrf.mxu0
        %v1851 = vadd.f32 %v1690, %v1850
        %v1852 = vpop.f32.mrf.mxu0
        %v1853 = vpop.f32.mrf.mxu0
        %v1854 = vadd.f32 %v1693, %v1853
        %v1855 = vpop.f32.mrf.mxu0
        %1856 = vmatprep.mubr.bf16.mxu0 0
        %1857 = vmatmul.mubr.bf16.gmra.mxu0 %v503
        %v1858 = vpop.f32.mrf.mxu0
        %v1859 = vadd.f32 %v1698, %v1858
        %v1860 = vpop.f32.mrf.mxu0
        %v1861 = vpop.f32.mrf.mxu0
        %v1862 = vadd.f32 %v1701, %v1861
        %v1863 = vpop.f32.mrf.mxu0
        %1864 = vmatprep.mubr.bf16.mxu0 0
        %1865 = vmatmul.mubr.bf16.gmra.mxu0 %v504
        %v1866 = vpop.f32.mrf.mxu0
        %v1867 = vadd.f32 %v1706, %v1866
        %v1868 = vpop.f32.mrf.mxu0
        %v1869 = vpop.f32.mrf.mxu0
        %v1870 = vadd.f32 %v1709, %v1869
        %v1871 = vpop.f32.mrf.mxu0
        %1872 = vmatprep.mubr.bf16.mxu0 0
        %1873 = vmatmul.mubr.bf16.gmra.mxu0 %v507
        %v1874 = vpop.f32.mrf.mxu0
        %v1875 = vadd.f32 %v1714, %v1874
        %v1876 = vpop.f32.mrf.mxu0
        %v1877 = vpop.f32.mrf.mxu0
        %v1878 = vadd.f32 %v1717, %v1877
        %v1879 = vpop.f32.mrf.mxu0
        %1880 = vmatprep.mubr.bf16.mxu0 0
        %1881 = vmatmul.mubr.bf16.gmra.mxu0 %v504
        %v1882 = vpop.f32.mrf.mxu0
        %v1883 = vadd.f32 %v1722, %v1882
        %v1884 = vpop.f32.mrf.mxu0
        %v1885 = vpop.f32.mrf.mxu0
        %v1886 = vadd.f32 %v1725, %v1885
        %v1887 = vpop.f32.mrf.mxu0
        %1888 = vdwg.mxu0
        %v1889 = vadd.f32 %v1763, %v1766
        %v1890 = vadd.f32 %v1889, %v1771
        %v1891 = vadd.f32 %v1890, %v1774
        %v1892 = vadd.f32 %v1891, %v1779
        %v1893 = vadd.f32 %v1892, %v1782
        %v1894 = vadd.f32 %v1893, %v1787
        %v1895 = vadd.f32 %v1894, %v1790
        %v1896 = vadd.f32 %v1895, %v1795
        %v1897 = vadd.f32 %v1896, %v1798
        %v1898 = vadd.f32 %v1897, %v1803
        %v1899 = vadd.f32 %v1898, %v1806
        %v1900 = vadd.f32 %v1899, %v1811
        %v1901 = vadd.f32 %v1900, %v1814
        %v1902 = vadd.f32 %v1901, %v1819
        %v1903 = vadd.f32 %v1902, %v1822
        %v1904 = vadd.f32 %v1903, %v1827
        %v1905 = vadd.f32 %v1904, %v1830
        %v1906 = vadd.f32 %v1905, %v1835
        %v1907 = vadd.f32 %v1906, %v1838
        %v1908 = vadd.f32 %v1907, %v1843
        %v1909 = vadd.f32 %v1908, %v1846
        %v1910 = vadd.f32 %v1909, %v1851
        %v1911 = vadd.f32 %v1910, %v1854
        %v1912 = vadd.f32 %v1911, %v1859
        %v1913 = vadd.f32 %v1912, %v1862
        %v1914 = vadd.f32 %v1913, %v1867
        %v1915 = vadd.f32 %v1914, %v1870
        %v1916 = vadd.f32 %v1915, %v1875
        %v1917 = vadd.f32 %v1916, %v1878
        %v1918 = vadd.f32 %v1917, %v1883
        %v1919 = vadd.f32 %v1918, %v1886
        %v1920 = vrot.slane %v1919, 4
        %v1921 = vadd.f32 %v1919, %v1920
        %v1922 = vrot.slane %v1921, 2
        %v1923 = vadd.f32 %v1921, %v1922
        %v1924 = vrot.slane %v1923, 1
        %v1925 = vadd.f32 %v1923, %v1924
        %v1926 = vrcp.pop 256.0
        %v1927 = vmul.f32 %v1925, %v1926
        %v1928 = vmul.f32 %v1763, %v1763
        %v1929 = vmul.f32 %v1766, %v1766
        %v1930 = vmul.f32 %v1771, %v1771
        %v1931 = vmul.f32 %v1774, %v1774
        %v1932 = vmul.f32 %v1779, %v1779
        %v1933 = vmul.f32 %v1782, %v1782
        %v1934 = vmul.f32 %v1787, %v1787
        %v1935 = vmul.f32 %v1790, %v1790
        %v1936 = vmul.f32 %v1795, %v1795
        %v1937 = vmul.f32 %v1798, %v1798
        %v1938 = vmul.f32 %v1803, %v1803
        %v1939 = vmul.f32 %v1806, %v1806
        %v1940 = vmul.f32 %v1811, %v1811
        %v1941 = vmul.f32 %v1814, %v1814
        %v1942 = vmul.f32 %v1819, %v1819
        %v1943 = vmul.f32 %v1822, %v1822
        %v1944 = vmul.f32 %v1827, %v1827
        %v1945 = vmul.f32 %v1830, %v1830
        %v1946 = vmul.f32 %v1835, %v1835
        %v1947 = vmul.f32 %v1838, %v1838
        %v1948 = vmul.f32 %v1843, %v1843
        %v1949 = vmul.f32 %v1846, %v1846
        %v1950 = vmul.f32 %v1851, %v1851
        %v1951 = vmul.f32 %v1854, %v1854
        %v1952 = vmul.f32 %v1859, %v1859
        %v1953 = vmul.f32 %v1862, %v1862
        %v1954 = vmul.f32 %v1867, %v1867
        %v1955 = vmul.f32 %v1870, %v1870
        %v1956 = vmul.f32 %v1875, %v1875
        %v1957 = vmul.f32 %v1878, %v1878
        %v1958 = vmul.f32 %v1883, %v1883
        %v1959 = vmul.f32 %v1886, %v1886
        %v1960 = vadd.f32 %v1928, %v1929
        %v1961 = vadd.f32 %v1960, %v1930
        %v1962 = vadd.f32 %v1961, %v1931
        %v1963 = vadd.f32 %v1962, %v1932
        %v1964 = vadd.f32 %v1963, %v1933
        %v1965 = vadd.f32 %v1964, %v1934
        %v1966 = vadd.f32 %v1965, %v1935
        %v1967 = vadd.f32 %v1966, %v1936
        %v1968 = vadd.f32 %v1967, %v1937
        %v1969 = vadd.f32 %v1968, %v1938
        %v1970 = vadd.f32 %v1969, %v1939
        %v1971 = vadd.f32 %v1970, %v1940
        %v1972 = vadd.f32 %v1971, %v1941
        %v1973 = vadd.f32 %v1972, %v1942
        %v1974 = vadd.f32 %v1973, %v1943
        %v1975 = vadd.f32 %v1974, %v1944
        %v1976 = vadd.f32 %v1975, %v1945
        %v1977 = vadd.f32 %v1976, %v1946
        %v1978 = vadd.f32 %v1977, %v1947
        %v1979 = vadd.f32 %v1978, %v1948
        %v1980 = vadd.f32 %v1979, %v1949
        %v1981 = vadd.f32 %v1980, %v1950
        %v1982 = vadd.f32 %v1981, %v1951
        %v1983 = vadd.f32 %v1982, %v1952
        %v1984 = vadd.f32 %v1983, %v1953
        %v1985 = vadd.f32 %v1984, %v1954
        %v1986 = vadd.f32 %v1985, %v1955
        %v1987 = vadd.f32 %v1986, %v1956
        %v1988 = vadd.f32 %v1987, %v1957
        %v1989 = vadd.f32 %v1988, %v1958
        %v1990 = vadd.f32 %v1989, %v1959
        %v1991 = vrot.slane %v1990, 4
        %v1992 = vadd.f32 %v1990, %v1991
        %v1993 = vrot.slane %v1992, 2
        %v1994 = vadd.f32 %v1992, %v1993
        %v1995 = vrot.slane %v1994, 1
        %v1996 = vadd.f32 %v1994, %v1995
        %v1997 = vmul.f32 %v1996, %v1926
        %v1998 = vsub.f32 %v1763, %v1927
        %v1999 = vsub.f32 %v1766, %v1927
        %v2000 = vsub.f32 %v1771, %v1927
        %v2001 = vsub.f32 %v1774, %v1927
        %v2002 = vsub.f32 %v1779, %v1927
        %v2003 = vsub.f32 %v1782, %v1927
        %v2004 = vsub.f32 %v1787, %v1927
        %v2005 = vsub.f32 %v1790, %v1927
        %v2006 = vsub.f32 %v1795, %v1927
        %v2007 = vsub.f32 %v1798, %v1927
        %v2008 = vsub.f32 %v1803, %v1927
        %v2009 = vsub.f32 %v1806, %v1927
        %v2010 = vsub.f32 %v1811, %v1927
        %v2011 = vsub.f32 %v1814, %v1927
        %v2012 = vsub.f32 %v1819, %v1927
        %v2013 = vsub.f32 %v1822, %v1927
        %v2014 = vsub.f32 %v1827, %v1927
        %v2015 = vsub.f32 %v1830, %v1927
        %v2016 = vsub.f32 %v1835, %v1927
        %v2017 = vsub.f32 %v1838, %v1927
        %v2018 = vsub.f32 %v1843, %v1927
        %v2019 = vsub.f32 %v1846, %v1927
        %v2020 = vsub.f32 %v1851, %v1927
        %v2021 = vsub.f32 %v1854, %v1927
        %v2022 = vsub.f32 %v1859, %v1927
        %v2023 = vsub.f32 %v1862, %v1927
        %v2024 = vsub.f32 %v1867, %v1927
        %v2025 = vsub.f32 %v1870, %v1927
        %v2026 = vsub.f32 %v1875, %v1927
        %v2027 = vsub.f32 %v1878, %v1927
        %v2028 = vsub.f32 %v1883, %v1927
        %v2029 = vsub.f32 %v1886, %v1927
        %v2030 = vmul.f32 %v1927, %v1927
        %v2031 = vsub.f32 %v1997, %v2030
        %v2032 = vadd.f32 %v2031, 1e-05
        %v2033 = vrsqrt.pop %v2032
        %v2034 = vmul.f32 %v1998, %v2033
        %v2035 = vmul.f32 %v1999, %v2033
        %v2036 = vmul.f32 %v2000, %v2033
        %v2037 = vmul.f32 %v2001, %v2033
        %v2038 = vmul.f32 %v2002, %v2033
        %v2039 = vmul.f32 %v2003, %v2033
        %v2040 = vmul.f32 %v2004, %v2033
        %v2041 = vmul.f32 %v2005, %v2033
        %v2042 = vmul.f32 %v2006, %v2033
        %v2043 = vmul.f32 %v2007, %v2033
        %v2044 = vmul.f32 %v2008, %v2033
        %v2045 = vmul.f32 %v2009, %v2033
        %v2046 = vmul.f32 %v2010, %v2033
        %v2047 = vmul.f32 %v2011, %v2033
        %v2048 = vmul.f32 %v2012, %v2033
        %v2049 = vmul.f32 %v2013, %v2033
        %v2050 = vmul.f32 %v2014, %v2033
        %v2051 = vmul.f32 %v2015, %v2033
        %v2052 = vmul.f32 %v2016, %v2033
        %v2053 = vmul.f32 %v2017, %v2033
        %v2054 = vmul.f32 %v2018, %v2033
        %v2055 = vmul.f32 %v2019, %v2033
        %v2056 = vmul.f32 %v2020, %v2033
        %v2057 = vmul.f32 %v2021, %v2033
        %v2058 = vmul.f32 %v2022, %v2033
        %v2059 = vmul.f32 %v2023, %v2033
        %v2060 = vmul.f32 %v2024, %v2033
        %v2061 = vmul.f32 %v2025, %v2033
        %v2062 = vmul.f32 %v2026, %v2033
        %v2063 = vmul.f32 %v2027, %v2033
        %v2064 = vmul.f32 %v2028, %v2033
        %v2065 = vmul.f32 %v2029, %v2033
        %v2066 = vmax.f32 %v2034, 0.0
        %v2067 = vmax.f32 %v2035, 0.0
        %v2068 = vmax.f32 %v2036, 0.0
        %v2069 = vmax.f32 %v2037, 0.0
        %v2070 = vmax.f32 %v2038, 0.0
        %v2071 = vmax.f32 %v2039, 0.0
        %v2072 = vmax.f32 %v2040, 0.0
        %v2073 = vmax.f32 %v2041, 0.0
        %v2074 = vmax.f32 %v2042, 0.0
        %v2075 = vmax.f32 %v2043, 0.0
        %v2076 = vmax.f32 %v2044, 0.0
        %v2077 = vmax.f32 %v2045, 0.0
        %v2078 = vmax.f32 %v2046, 0.0
        %v2079 = vmax.f32 %v2047, 0.0
        %v2080 = vmax.f32 %v2048, 0.0
        %v2081 = vmax.f32 %v2049, 0.0
        %v2082 = vmax.f32 %v2050, 0.0
        %v2083 = vmax.f32 %v2051, 0.0
        %v2084 = vmax.f32 %v2052, 0.0
        %v2085 = vmax.f32 %v2053, 0.0
        %v2086 = vmax.f32 %v2054, 0.0
        %v2087 = vmax.f32 %v2055, 0.0
        %v2088 = vmax.f32 %v2056, 0.0
        %v2089 = vmax.f32 %v2057, 0.0
        %v2090 = vmax.f32 %v2058, 0.0
        %v2091 = vmax.f32 %v2059, 0.0
        %v2092 = vmax.f32 %v2060, 0.0
        %v2093 = vmax.f32 %v2061, 0.0
        %v2094 = vmax.f32 %v2062, 0.0
        %v2095 = vmax.f32 %v2063, 0.0
        %v2096 = vmax.f32 %v2064, 0.0
        %v2097 = vmax.f32 %v2065, 0.0
        %v2114 = vrot.slane %v2068, 1
        %v2115 = vrot.slane %v2066, 1
        %v2116 = vrot.slane %v2070, 1
        %v2117 = vrot.slane %v2072, 1
        %v2118 = vrot.slane %v2074, 1
        %v2119 = vrot.slane %v2076, 1
        %v2120 = vrot.slane %v2078, 1
        %v2121 = vrot.slane %v2080, 1
        %v2122 = vrot.slane %v2082, 1
        %v2123 = vrot.slane %v2084, 1
        %v2124 = vrot.slane %v2086, 1
        %v2125 = vrot.slane %v2088, 1
        %v2126 = vrot.slane %v2090, 1
        %v2127 = vrot.slane %v2092, 1
        %v2128 = vrot.slane %v2094, 1
        %v2129 = vrot.slane %v2096, 1
        %v2162 = vrot.slane %v2068, 7
        %v2163 = vrot.slane %v2069, 7
        %v2164 = vsel %vm266, %v2162, %v2163
        %v2165 = vrot.slane %v2066, 7
        %v2166 = vrot.slane %v2067, 7
        %v2167 = vsel %vm266, %v2165, %v2166
        %v2168 = vrot.slane %v2070, 7
        %v2169 = vrot.slane %v2071, 7
        %v2170 = vsel %vm266, %v2168, %v2169
        %v2171 = vrot.slane %v2072, 7
        %v2172 = vrot.slane %v2073, 7
        %v2173 = vsel %vm266, %v2171, %v2172
        %v2174 = vrot.slane %v2074, 7
        %v2175 = vrot.slane %v2075, 7
        %v2176 = vsel %vm266, %v2174, %v2175
        %v2177 = vrot.slane %v2076, 7
        %v2178 = vrot.slane %v2077, 7
        %v2179 = vsel %vm266, %v2177, %v2178
        %v2180 = vrot.slane %v2078, 7
        %v2181 = vrot.slane %v2079, 7
        %v2182 = vsel %vm266, %v2180, %v2181
        %v2183 = vrot.slane %v2080, 7
        %v2184 = vrot.slane %v2081, 7
        %v2185 = vsel %vm266, %v2183, %v2184
        %v2186 = vrot.slane %v2082, 7
        %v2187 = vrot.slane %v2083, 7
        %v2188 = vsel %vm266, %v2186, %v2187
        %v2189 = vrot.slane %v2084, 7
        %v2190 = vrot.slane %v2085, 7
        %v2191 = vsel %vm266, %v2189, %v2190
        %v2192 = vrot.slane %v2086, 7
        %v2193 = vrot.slane %v2087, 7
        %v2194 = vsel %vm266, %v2192, %v2193
        %v2195 = vrot.slane %v2088, 7
        %v2196 = vrot.slane %v2089, 7
        %v2197 = vsel %vm266, %v2195, %v2196
        %v2198 = vrot.slane %v2090, 7
        %v2199 = vrot.slane %v2091, 7
        %v2200 = vsel %vm266, %v2198, %v2199
        %v2201 = vrot.slane %v2092, 7
        %v2202 = vrot.slane %v2093, 7
        %v2203 = vsel %vm266, %v2201, %v2202
        %v2204 = vrot.slane %v2094, 7
        %v2205 = vrot.slane %v2095, 7
        %v2206 = vsel %vm266, %v2204, %v2205
        %v2207 = vrot.slane %v2096, 7
        %v2208 = vrot.slane %v2097, 7
        %v2209 = vsel %vm266, %v2207, %v2208
        %v2242 = vsel %vm266, %v2114, %v2162
        %v2243 = vsel %vm266, %v2115, %v2165
        %v2244 = vsel %vm266, %v2116, %v2168
        %v2245 = vsel %vm266, %v2117, %v2171
        %v2246 = vsel %vm266, %v2118, %v2174
        %v2247 = vsel %vm266, %v2119, %v2177
        %v2248 = vsel %vm266, %v2120, %v2180
        %v2249 = vsel %vm266, %v2121, %v2183
        %v2250 = vsel %vm266, %v2122, %v2186
        %v2251 = vsel %vm266, %v2123, %v2189
        %v2252 = vsel %vm266, %v2124, %v2192
        %v2253 = vsel %vm266, %v2125, %v2195
        %v2254 = vsel %vm266, %v2126, %v2198
        %v2255 = vsel %vm266, %v2127, %v2201
        %v2256 = vsel %vm266, %v2128, %v2204
        %v2257 = vsel %vm266, %v2129, %v2207
        %v2258 = vrot.slane %v2069, 1
        %v2259 = vsel %vm363, %v2114, %v2258
        %v2260 = vrot.slane %v2067, 1
        %v2261 = vsel %vm363, %v2115, %v2260
        %v2262 = vrot.slane %v2071, 1
        %v2263 = vsel %vm363, %v2116, %v2262
        %v2264 = vrot.slane %v2073, 1
        %v2265 = vsel %vm363, %v2117, %v2264
        %v2266 = vrot.slane %v2075, 1
        %v2267 = vsel %vm363, %v2118, %v2266
        %v2268 = vrot.slane %v2077, 1
        %v2269 = vsel %vm363, %v2119, %v2268
        %v2270 = vrot.slane %v2079, 1
        %v2271 = vsel %vm363, %v2120, %v2270
        %v2272 = vrot.slane %v2081, 1
        %v2273 = vsel %vm363, %v2121, %v2272
        %v2274 = vrot.slane %v2083, 1
        %v2275 = vsel %vm363, %v2122, %v2274
        %v2276 = vrot.slane %v2085, 1
        %v2277 = vsel %vm363, %v2123, %v2276
        %v2278 = vrot.slane %v2087, 1
        %v2279 = vsel %vm363, %v2124, %v2278
        %v2280 = vrot.slane %v2089, 1
        %v2281 = vsel %vm363, %v2125, %v2280
        %v2282 = vrot.slane %v2091, 1
        %v2283 = vsel %vm363, %v2126, %v2282
        %v2284 = vrot.slane %v2093, 1
        %v2285 = vsel %vm363, %v2127, %v2284
        %v2286 = vrot.slane %v2095, 1
        %v2287 = vsel %vm363, %v2128, %v2286
        %v2288 = vrot.slane %v2097, 1
        %v2289 = vsel %vm363, %v2129, %v2288
        %v2338 = vsel %vm363, %v2258, %v2163
        %v2339 = vsel %vm363, %v2260, %v2166
        %v2340 = vsel %vm363, %v2262, %v2169
        %v2341 = vsel %vm363, %v2264, %v2172
        %v2342 = vsel %vm363, %v2266, %v2175
        %v2343 = vsel %vm363, %v2268, %v2178
        %v2344 = vsel %vm363, %v2270, %v2181
        %v2345 = vsel %vm363, %v2272, %v2184
        %v2346 = vsel %vm363, %v2274, %v2187
        %v2347 = vsel %vm363, %v2276, %v2190
        %v2348 = vsel %vm363, %v2278, %v2193
        %v2349 = vsel %vm363, %v2280, %v2196
        %v2350 = vsel %vm363, %v2282, %v2199
        %v2351 = vsel %vm363, %v2284, %v2202
        %v2352 = vsel %vm363, %v2286, %v2205
        %v2353 = vsel %vm363, %v2288, %v2208
        %v2354 = vpack.c.bf16 %v2164, %v2242
        %v2355 = vpack.c.bf16 %v2167, %v2243
        %v2356 = vpack.c.bf16 %v2170, %v2244
        %v2357 = vpack.c.bf16 %v2173, %v2245
        %v2358 = vpack.c.bf16 %v2176, %v2246
        %v2359 = vpack.c.bf16 %v2179, %v2247
        %v2360 = vpack.c.bf16 %v2182, %v2248
        %v2361 = vpack.c.bf16 %v2185, %v2249
        %v2362 = vpack.c.bf16 %v2188, %v2250
        %v2363 = vpack.c.bf16 %v2191, %v2251
        %v2364 = vpack.c.bf16 %v2194, %v2252
        %v2365 = vpack.c.bf16 %v2197, %v2253
        %v2366 = vpack.c.bf16 %v2200, %v2254
        %v2367 = vpack.c.bf16 %v2203, %v2255
        %v2368 = vpack.c.bf16 %v2206, %v2256
        %v2369 = vpack.c.bf16 %v2069, %v2068
        %v2370 = vpack.c.bf16 %v2067, %v2066
        %v2371 = vpack.c.bf16 %v2071, %v2070
        %v2372 = vpack.c.bf16 %v2073, %v2072
        %v2373 = vpack.c.bf16 %v2075, %v2074
        %v2374 = vpack.c.bf16 %v2077, %v2076
        %v2375 = vpack.c.bf16 %v2079, %v2078
        %v2376 = vpack.c.bf16 %v2081, %v2080
        %v2377 = vpack.c.bf16 %v2083, %v2082
        %v2378 = vpack.c.bf16 %v2085, %v2084
        %v2379 = vpack.c.bf16 %v2087, %v2086
        %v2380 = vpack.c.bf16 %v2089, %v2088
        %v2381 = vpack.c.bf16 %v2091, %v2090
        %v2382 = vpack.c.bf16 %v2093, %v2092
        %v2383 = vpack.c.bf16 %v2095, %v2094
        %v2384 = vpack.c.bf16 %v2338, %v2259
        %v2385 = vpack.c.bf16 %v2339, %v2261
        %v2386 = vpack.c.bf16 %v2340, %v2263
        %v2387 = vpack.c.bf16 %v2341, %v2265
        %v2388 = vpack.c.bf16 %v2342, %v2267
        %v2389 = vpack.c.bf16 %v2343, %v2269
        %v2390 = vpack.c.bf16 %v2344, %v2271
        %v2391 = vpack.c.bf16 %v2345, %v2273
        %v2392 = vpack.c.bf16 %v2346, %v2275
        %v2393 = vpack.c.bf16 %v2347, %v2277
        %v2394 = vpack.c.bf16 %v2348, %v2279
        %v2395 = vpack.c.bf16 %v2349, %v2281
        %v2396 = vpack.c.bf16 %v2350, %v2283
        %v2397 = vpack.c.bf16 %v2351, %v2285
        %v2398 = vpack.c.bf16 %v2352, %v2287
        %v2399 = vpack.c.bf16 %v2209, %v2257
        %v2400 = vpack.c.bf16 %v2097, %v2096
        %v2401 = vpack.c.bf16 %v2353, %v2289
        %v2402 = vld [vmem:[%s2] sm:$0xf]
        %v2403 = vld [vmem:[%s2 + $0x4] sm:$0xf]
        %v2404 = vld [vmem:[%s2 + $0x8] sm:$0xf]
        %v2405 = vld [vmem:[%s2 + $0xc] sm:$0xf]
        %v2406 = vld [vmem:[%s2 + $0x10] sm:$0xf]
        %v2407 = vld [vmem:[%s2 + $0x14] sm:$0xf]
        %v2408 = vld [vmem:[%s2 + $0x18] sm:$0xf]
        %v2409 = vld [vmem:[%s2 + $0x1c] sm:$0xf]
        %v2410 = vld [vmem:[%s2 + $0x20] sm:$0xf]
        %v2411 = vld [vmem:[%s2 + $0x24] sm:$0xf]
        %v2412 = vld [vmem:[%s2 + $0x28] sm:$0xf]
        %v2413 = vld [vmem:[%s2 + $0x2c] sm:$0xf]
        %v2414 = vld [vmem:[%s2 + $0x30] sm:$0xf]
        %v2415 = vld [vmem:[%s2 + $0x34] sm:$0xf]
        %v2416 = vld [vmem:[%s2 + $0x38] sm:$0xf]
        %v2417 = vld [vmem:[%s2 + $0x3c] sm:$0xf]
        %v2418 = vld [vmem:[%s2 + $0x40] sm:$0xf]
        %v2419 = vld [vmem:[%s2 + $0x44] sm:$0xf]
        %v2420 = vld [vmem:[%s2 + $0x48] sm:$0xf]
        %v2421 = vld [vmem:[%s2 + $0x4c] sm:$0xf]
        %v2422 = vld [vmem:[%s2 + $0x50] sm:$0xf]
        %v2423 = vld [vmem:[%s2 + $0x54] sm:$0xf]
        %v2424 = vld [vmem:[%s2 + $0x58] sm:$0xf]
        %v2425 = vld [vmem:[%s2 + $0x5c] sm:$0xf]
        %v2426 = vld [vmem:[%s2 + $0x60] sm:$0xf]
        %v2427 = vld [vmem:[%s2 + $0x64] sm:$0xf]
        %v2428 = vld [vmem:[%s2 + $0x68] sm:$0xf]
        %v2429 = vld [vmem:[%s2 + $0x6c] sm:$0xf]
        %v2430 = vld [vmem:[%s2 + $0x70] sm:$0xf]
        %v2431 = vld [vmem:[%s2 + $0x74] sm:$0xf]
        %v2432 = vld [vmem:[%s2 + $0x78] sm:$0xf]
        %v2433 = vld [vmem:[%s2 + $0x7c] sm:$0xf]
        %v2434 = vld [vmem:[%s2 + $0x80] sm:$0xf]
        %v2435 = vld [vmem:[%s2 + $0x84] sm:$0xf]
        %v2436 = vld [vmem:[%s2 + $0x88] sm:$0xf]
        %v2437 = vld [vmem:[%s2 + $0x8c] sm:$0xf]
        %v2438 = vld [vmem:[%s2 + $0x90] sm:$0xf]
        %v2439 = vld [vmem:[%s2 + $0x94] sm:$0xf]
        %v2440 = vld [vmem:[%s2 + $0x98] sm:$0xf]
        %v2441 = vld [vmem:[%s2 + $0x9c] sm:$0xf]
        %v2442 = vld [vmem:[%s2 + $0xa0] sm:$0xf]
        %v2443 = vld [vmem:[%s2 + $0xa4] sm:$0xf]
        %v2444 = vld [vmem:[%s2 + $0xa8] sm:$0xf]
        %v2445 = vld [vmem:[%s2 + $0xac] sm:$0xf]
        %v2446 = vld [vmem:[%s2 + $0xb0] sm:$0xf]
        %v2447 = vld [vmem:[%s2 + $0xb4] sm:$0xf]
        %v2448 = vld [vmem:[%s2 + $0xb8] sm:$0xf]
        %v2449 = vld [vmem:[%s2 + $0xbc] sm:$0xf]
        %v2450 = vld [vmem:[%s2 + $0xc0] sm:$0xf]
        %v2451 = vld [vmem:[%s2 + $0xc4] sm:$0xf]
        %v2452 = vld [vmem:[%s2 + $0xc8] sm:$0xf]
        %v2453 = vld [vmem:[%s2 + $0xcc] sm:$0xf]
        %v2454 = vld [vmem:[%s2 + $0xd0] sm:$0xf]
        %v2455 = vld [vmem:[%s2 + $0xd4] sm:$0xf]
        %v2456 = vld [vmem:[%s2 + $0xd8] sm:$0xf]
        %v2457 = vld [vmem:[%s2 + $0xdc] sm:$0xf]
        %v2458 = vld [vmem:[%s2 + $0xe0] sm:$0xf]
        %v2459 = vld [vmem:[%s2 + $0xe4] sm:$0xf]
        %v2460 = vld [vmem:[%s2 + $0xe8] sm:$0xf]
        %v2461 = vld [vmem:[%s2 + $0xec] sm:$0xf]
        %v2462 = vld [vmem:[%s2 + $0xf0] sm:$0xf]
        %v2463 = vld [vmem:[%s2 + $0xf4] sm:$0xf]
        %v2464 = vld [vmem:[%s2 + $0xf8] sm:$0xf]
        %v2465 = vld [vmem:[%s2 + $0xfc] sm:$0xf]
        %v2466 = vld [vmem:[%s2 + $0x100] sm:$0xf]
        %v2467 = vld [vmem:[%s2 + $0x104] sm:$0xf]
        %v2468 = vld [vmem:[%s2 + $0x108] sm:$0xf]
        %v2469 = vld [vmem:[%s2 + $0x10c] sm:$0xf]
        %v2470 = vld [vmem:[%s2 + $0x110] sm:$0xf]
        %v2471 = vld [vmem:[%s2 + $0x114] sm:$0xf]
        %v2472 = vld [vmem:[%s2 + $0x118] sm:$0xf]
        %v2473 = vld [vmem:[%s2 + $0x11c] sm:$0xf]
        %v2474 = vld [vmem:[%s2 + $0x120] sm:$0xf]
        %v2475 = vld [vmem:[%s2 + $0x124] sm:$0xf]
        %v2476 = vld [vmem:[%s2 + $0x128] sm:$0xf]
        %v2477 = vld [vmem:[%s2 + $0x12c] sm:$0xf]
        %v2478 = vld [vmem:[%s2 + $0x130] sm:$0xf]
        %v2479 = vld [vmem:[%s2 + $0x134] sm:$0xf]
        %v2480 = vld [vmem:[%s2 + $0x138] sm:$0xf]
        %v2481 = vld [vmem:[%s2 + $0x13c] sm:$0xf]
        %v2482 = vld [vmem:[%s2 + $0x140] sm:$0xf]
        %v2483 = vld [vmem:[%s2 + $0x144] sm:$0xf]
        %v2484 = vld [vmem:[%s2 + $0x148] sm:$0xf]
        %v2485 = vld [vmem:[%s2 + $0x14c] sm:$0xf]
        %v2486 = vld [vmem:[%s2 + $0x150] sm:$0xf]
        %v2487 = vld [vmem:[%s2 + $0x154] sm:$0xf]
        %v2488 = vld [vmem:[%s2 + $0x158] sm:$0xf]
        %v2489 = vld [vmem:[%s2 + $0x15c] sm:$0xf]
        %v2490 = vld [vmem:[%s2 + $0x160] sm:$0xf]
        %v2491 = vld [vmem:[%s2 + $0x164] sm:$0xf]
        %v2492 = vld [vmem:[%s2 + $0x168] sm:$0xf]
        %v2493 = vld [vmem:[%s2 + $0x16c] sm:$0xf]
        %v2494 = vld [vmem:[%s2 + $0x170] sm:$0xf]
        %v2495 = vld [vmem:[%s2 + $0x174] sm:$0xf]
        %v2496 = vld [vmem:[%s2 + $0x178] sm:$0xf]
        %v2497 = vld [vmem:[%s2 + $0x17c] sm:$0xf]
        %v2498 = vld [vmem:[%s2 + $0x180] sm:$0xf]
        %v2499 = vld [vmem:[%s2 + $0x184] sm:$0xf]
        %v2500 = vld [vmem:[%s2 + $0x188] sm:$0xf]
        %v2501 = vld [vmem:[%s2 + $0x18c] sm:$0xf]
        %v2502 = vld [vmem:[%s2 + $0x190] sm:$0xf]
        %v2503 = vld [vmem:[%s2 + $0x194] sm:$0xf]
        %v2504 = vld [vmem:[%s2 + $0x198] sm:$0xf]
        %v2505 = vld [vmem:[%s2 + $0x19c] sm:$0xf]
        %v2506 = vld [vmem:[%s2 + $0x1a0] sm:$0xf]
        %v2507 = vld [vmem:[%s2 + $0x1a4] sm:$0xf]
        %v2508 = vld [vmem:[%s2 + $0x1a8] sm:$0xf]
        %v2509 = vld [vmem:[%s2 + $0x1ac] sm:$0xf]
        %v2510 = vld [vmem:[%s2 + $0x1b0] sm:$0xf]
        %v2511 = vld [vmem:[%s2 + $0x1b4] sm:$0xf]
        %v2512 = vld [vmem:[%s2 + $0x1b8] sm:$0xf]
        %v2513 = vld [vmem:[%s2 + $0x1bc] sm:$0xf]
        %v2514 = vld [vmem:[%s2 + $0x1c0] sm:$0xf]
        %v2515 = vld [vmem:[%s2 + $0x1c4] sm:$0xf]
        %v2516 = vld [vmem:[%s2 + $0x1c8] sm:$0xf]
        %v2517 = vld [vmem:[%s2 + $0x1cc] sm:$0xf]
        %v2518 = vld [vmem:[%s2 + $0x1d0] sm:$0xf]
        %v2519 = vld [vmem:[%s2 + $0x1d4] sm:$0xf]
        %v2520 = vld [vmem:[%s2 + $0x1d8] sm:$0xf]
        %v2521 = vld [vmem:[%s2 + $0x1dc] sm:$0xf]
        %v2522 = vld [vmem:[%s2 + $0x1e0] sm:$0xf]
        %v2523 = vld [vmem:[%s2 + $0x1e4] sm:$0xf]
        %v2524 = vld [vmem:[%s2 + $0x1e8] sm:$0xf]
        %v2525 = vld [vmem:[%s2 + $0x1ec] sm:$0xf]
        %v2526 = vld [vmem:[%s2 + $0x1f0] sm:$0xf]
        %v2527 = vld [vmem:[%s2 + $0x1f4] sm:$0xf]
        %v2528 = vld [vmem:[%s2 + $0x1f8] sm:$0xf]
        %v2529 = vld [vmem:[%s2 + $0x1fc] sm:$0xf]
        %v2530 = vld [vmem:[%s2 + $0x200] sm:$0xf]
        %v2531 = vld [vmem:[%s2 + $0x204] sm:$0xf]
        %v2532 = vld [vmem:[%s2 + $0x208] sm:$0xf]
        %v2533 = vld [vmem:[%s2 + $0x20c] sm:$0xf]
        %v2534 = vld [vmem:[%s2 + $0x210] sm:$0xf]
        %v2535 = vld [vmem:[%s2 + $0x214] sm:$0xf]
        %v2536 = vld [vmem:[%s2 + $0x218] sm:$0xf]
        %v2537 = vld [vmem:[%s2 + $0x21c] sm:$0xf]
        %v2538 = vld [vmem:[%s2 + $0x220] sm:$0xf]
        %v2539 = vld [vmem:[%s2 + $0x224] sm:$0xf]
        %v2540 = vld [vmem:[%s2 + $0x228] sm:$0xf]
        %v2541 = vld [vmem:[%s2 + $0x22c] sm:$0xf]
        %v2542 = vld [vmem:[%s2 + $0x230] sm:$0xf]
        %v2543 = vld [vmem:[%s2 + $0x234] sm:$0xf]
        %v2544 = vld [vmem:[%s2 + $0x238] sm:$0xf]
        %v2545 = vld [vmem:[%s2 + $0x23c] sm:$0xf]
        %v2690 = vunpack.c.l.b16 %v2402
        %v2691 = vunpack.c.l.b16 %v2403
        %v2692 = vunpack.c.l.b16 %v2404
        %v2693 = vunpack.c.l.b16 %v2405
        %v2694 = vunpack.c.l.b16 %v2406
        %v2695 = vunpack.c.l.b16 %v2407
        %v2696 = vunpack.c.l.b16 %v2408
        %v2697 = vunpack.c.l.b16 %v2409
        %v2698 = vunpack.c.l.b16 %v2410
        %v2699 = vunpack.c.l.b16 %v2411
        %v2700 = vunpack.c.l.b16 %v2412
        %v2701 = vunpack.c.l.b16 %v2413
        %v2702 = vunpack.c.l.b16 %v2414
        %v2703 = vunpack.c.l.b16 %v2415
        %v2704 = vunpack.c.l.b16 %v2416
        %v2705 = vunpack.c.l.b16 %v2417
        %v2706 = vunpack.c.l.b16 %v2418
        %v2707 = vunpack.c.l.b16 %v2419
        %v2708 = vunpack.c.l.b16 %v2420
        %v2709 = vunpack.c.l.b16 %v2421
        %v2710 = vunpack.c.l.b16 %v2422
        %v2711 = vunpack.c.l.b16 %v2423
        %v2712 = vunpack.c.l.b16 %v2424
        %v2713 = vunpack.c.l.b16 %v2425
        %v2714 = vunpack.c.l.b16 %v2426
        %v2715 = vunpack.c.l.b16 %v2427
        %v2716 = vunpack.c.l.b16 %v2428
        %v2717 = vunpack.c.l.b16 %v2429
        %v2718 = vunpack.c.l.b16 %v2430
        %v2719 = vunpack.c.l.b16 %v2431
        %v2720 = vunpack.c.l.b16 %v2432
        %v2721 = vunpack.c.l.b16 %v2433
        %v2722 = vunpack.c.l.b16 %v2434
        %v2723 = vunpack.c.l.b16 %v2435
        %v2724 = vunpack.c.l.b16 %v2436
        %v2725 = vunpack.c.l.b16 %v2437
        %v2726 = vunpack.c.l.b16 %v2438
        %v2727 = vunpack.c.l.b16 %v2439
        %v2728 = vunpack.c.l.b16 %v2440
        %v2729 = vunpack.c.l.b16 %v2441
        %v2730 = vunpack.c.l.b16 %v2442
        %v2731 = vunpack.c.l.b16 %v2443
        %v2732 = vunpack.c.l.b16 %v2444
        %v2733 = vunpack.c.l.b16 %v2445
        %v2734 = vunpack.c.l.b16 %v2446
        %v2735 = vunpack.c.l.b16 %v2447
        %v2736 = vunpack.c.l.b16 %v2448
        %v2737 = vunpack.c.l.b16 %v2449
        %v2738 = vunpack.c.l.b16 %v2450
        %v2739 = vunpack.c.l.b16 %v2451
        %v2740 = vunpack.c.l.b16 %v2452
        %v2741 = vunpack.c.l.b16 %v2453
        %v2742 = vunpack.c.l.b16 %v2454
        %v2743 = vunpack.c.l.b16 %v2455
        %v2744 = vunpack.c.l.b16 %v2456
        %v2745 = vunpack.c.l.b16 %v2457
        %v2746 = vunpack.c.l.b16 %v2458
        %v2747 = vunpack.c.l.b16 %v2459
        %v2748 = vunpack.c.l.b16 %v2460
        %v2749 = vunpack.c.l.b16 %v2461
        %v2750 = vunpack.c.l.b16 %v2462
        %v2751 = vunpack.c.l.b16 %v2463
        %v2752 = vunpack.c.l.b16 %v2464
        %v2753 = vunpack.c.l.b16 %v2465
        %v2754 = vunpack.c.l.b16 %v2466
        %v2755 = vunpack.c.l.b16 %v2467
        %v2756 = vunpack.c.l.b16 %v2468
        %v2757 = vunpack.c.l.b16 %v2469
        %v2758 = vunpack.c.l.b16 %v2470
        %v2759 = vunpack.c.l.b16 %v2471
        %v2760 = vunpack.c.l.b16 %v2472
        %v2761 = vunpack.c.l.b16 %v2473
        %v2762 = vunpack.c.l.b16 %v2474
        %v2763 = vunpack.c.l.b16 %v2475
        %v2764 = vunpack.c.l.b16 %v2476
        %v2765 = vunpack.c.l.b16 %v2477
        %v2766 = vunpack.c.l.b16 %v2478
        %v2767 = vunpack.c.l.b16 %v2479
        %v2768 = vunpack.c.l.b16 %v2480
        %v2769 = vunpack.c.l.b16 %v2481
        %v2770 = vunpack.c.l.b16 %v2482
        %v2771 = vunpack.c.l.b16 %v2483
        %v2772 = vunpack.c.l.b16 %v2484
        %v2773 = vunpack.c.l.b16 %v2485
        %v2774 = vunpack.c.l.b16 %v2486
        %v2775 = vunpack.c.l.b16 %v2487
        %v2776 = vunpack.c.l.b16 %v2488
        %v2777 = vunpack.c.l.b16 %v2489
        %v2778 = vunpack.c.l.b16 %v2490
        %v2779 = vunpack.c.l.b16 %v2491
        %v2780 = vunpack.c.l.b16 %v2492
        %v2781 = vunpack.c.l.b16 %v2493
        %v2782 = vunpack.c.l.b16 %v2494
        %v2783 = vunpack.c.l.b16 %v2495
        %v2784 = vunpack.c.l.b16 %v2496
        %v2785 = vunpack.c.l.b16 %v2497
        %v2786 = vunpack.c.l.b16 %v2498
        %v2787 = vunpack.c.l.b16 %v2499
        %v2788 = vunpack.c.l.b16 %v2500
        %v2789 = vunpack.c.l.b16 %v2501
        %v2790 = vunpack.c.l.b16 %v2502
        %v2791 = vunpack.c.l.b16 %v2503
        %v2792 = vunpack.c.l.b16 %v2504
        %v2793 = vunpack.c.l.b16 %v2505
        %v2794 = vunpack.c.l.b16 %v2506
        %v2795 = vunpack.c.l.b16 %v2507
        %v2796 = vunpack.c.l.b16 %v2508
        %v2797 = vunpack.c.l.b16 %v2509
        %v2798 = vunpack.c.l.b16 %v2510
        %v2799 = vunpack.c.l.b16 %v2511
        %v2800 = vunpack.c.l.b16 %v2512
        %v2801 = vunpack.c.l.b16 %v2513
        %v2802 = vunpack.c.l.b16 %v2514
        %v2803 = vunpack.c.l.b16 %v2515
        %v2804 = vunpack.c.l.b16 %v2516
        %v2805 = vunpack.c.l.b16 %v2517
        %v2806 = vunpack.c.l.b16 %v2518
        %v2807 = vunpack.c.l.b16 %v2519
        %v2808 = vunpack.c.l.b16 %v2520
        %v2809 = vunpack.c.l.b16 %v2521
        %v2810 = vunpack.c.l.b16 %v2522
        %v2811 = vunpack.c.l.b16 %v2523
        %v2812 = vunpack.c.l.b16 %v2524
        %v2813 = vunpack.c.l.b16 %v2525
        %v2814 = vunpack.c.l.b16 %v2526
        %v2815 = vunpack.c.l.b16 %v2527
        %v2816 = vunpack.c.l.b16 %v2528
        %v2817 = vunpack.c.l.b16 %v2529
        %v2818 = vunpack.c.l.b16 %v2530
        %v2819 = vunpack.c.l.b16 %v2531
        %v2820 = vunpack.c.l.b16 %v2532
        %v2821 = vunpack.c.l.b16 %v2533
        %v2822 = vunpack.c.l.b16 %v2534
        %v2823 = vunpack.c.l.b16 %v2535
        %v2824 = vunpack.c.l.b16 %v2536
        %v2825 = vunpack.c.l.b16 %v2537
        %v2826 = vunpack.c.l.b16 %v2538
        %v2827 = vunpack.c.l.b16 %v2539
        %v2828 = vunpack.c.l.b16 %v2540
        %v2829 = vunpack.c.l.b16 %v2541
        %v2830 = vunpack.c.l.b16 %v2542
        %v2831 = vunpack.c.l.b16 %v2543
        %v2832 = vunpack.c.l.b16 %v2544
        %v2833 = vunpack.c.l.b16 %v2545
        %v2834 = vpack.c.b16 %v2691, %v2690
        %v2835 = vpack.c.b16 %v2693, %v2692
        %v2836 = vpack.c.b16 %v2695, %v2694
        %v2837 = vpack.c.b16 %v2697, %v2696
        %v2838 = vpack.c.b16 %v2699, %v2698
        %v2839 = vpack.c.b16 %v2701, %v2700
        %v2840 = vpack.c.b16 %v2703, %v2702
        %v2841 = vpack.c.b16 %v2705, %v2704
        %v2842 = vpack.c.b16 %v2707, %v2706
        %v2843 = vpack.c.b16 %v2709, %v2708
        %v2844 = vpack.c.b16 %v2711, %v2710
        %v2845 = vpack.c.b16 %v2713, %v2712
        %v2846 = vpack.c.b16 %v2715, %v2714
        %v2847 = vpack.c.b16 %v2717, %v2716
        %v2848 = vpack.c.b16 %v2719, %v2718
        %v2849 = vpack.c.b16 %v2721, %v2720
        %v2850 = vpack.c.b16 %v2723, %v2722
        %v2851 = vpack.c.b16 %v2725, %v2724
        %v2852 = vpack.c.b16 %v2727, %v2726
        %v2853 = vpack.c.b16 %v2729, %v2728
        %v2854 = vpack.c.b16 %v2731, %v2730
        %v2855 = vpack.c.b16 %v2733, %v2732
        %v2856 = vpack.c.b16 %v2735, %v2734
        %v2857 = vpack.c.b16 %v2737, %v2736
        %v2858 = vpack.c.b16 %v2739, %v2738
        %v2859 = vpack.c.b16 %v2741, %v2740
        %v2860 = vpack.c.b16 %v2743, %v2742
        %v2861 = vpack.c.b16 %v2745, %v2744
        %v2862 = vpack.c.b16 %v2747, %v2746
        %v2863 = vpack.c.b16 %v2749, %v2748
        %v2864 = vpack.c.b16 %v2751, %v2750
        %v2865 = vpack.c.b16 %v2753, %v2752
        %v2866 = vpack.c.b16 %v2755, %v2754
        %v2867 = vpack.c.b16 %v2757, %v2756
        %v2868 = vpack.c.b16 %v2759, %v2758
        %v2869 = vpack.c.b16 %v2761, %v2760
        %v2870 = vpack.c.b16 %v2763, %v2762
        %v2871 = vpack.c.b16 %v2765, %v2764
        %v2872 = vpack.c.b16 %v2767, %v2766
        %v2873 = vpack.c.b16 %v2769, %v2768
        %v2874 = vpack.c.b16 %v2771, %v2770
        %v2875 = vpack.c.b16 %v2773, %v2772
        %v2876 = vpack.c.b16 %v2775, %v2774
        %v2877 = vpack.c.b16 %v2777, %v2776
        %v2878 = vpack.c.b16 %v2779, %v2778
        %v2879 = vpack.c.b16 %v2781, %v2780
        %v2880 = vpack.c.b16 %v2783, %v2782
        %v2881 = vpack.c.b16 %v2785, %v2784
        %v2882 = vpack.c.b16 %v2787, %v2786
        %v2883 = vpack.c.b16 %v2789, %v2788
        %v2884 = vpack.c.b16 %v2791, %v2790
        %v2885 = vpack.c.b16 %v2793, %v2792
        %v2886 = vpack.c.b16 %v2795, %v2794
        %v2887 = vpack.c.b16 %v2797, %v2796
        %v2888 = vpack.c.b16 %v2799, %v2798
        %v2889 = vpack.c.b16 %v2801, %v2800
        %v2890 = vpack.c.b16 %v2803, %v2802
        %v2891 = vpack.c.b16 %v2805, %v2804
        %v2892 = vpack.c.b16 %v2807, %v2806
        %v2893 = vpack.c.b16 %v2809, %v2808
        %v2894 = vpack.c.b16 %v2811, %v2810
        %v2895 = vpack.c.b16 %v2813, %v2812
        %v2896 = vpack.c.b16 %v2815, %v2814
        %v2897 = vpack.c.b16 %v2817, %v2816
        %v2898 = vpack.c.b16 %v2819, %v2818
        %v2899 = vpack.c.b16 %v2821, %v2820
        %v2900 = vpack.c.b16 %v2823, %v2822
        %v2901 = vpack.c.b16 %v2825, %v2824
        %v2902 = vpack.c.b16 %v2827, %v2826
        %v2903 = vpack.c.b16 %v2829, %v2828
        %v2904 = vpack.c.b16 %v2831, %v2830
        %v2905 = vpack.c.b16 %v2833, %v2832
        %2978 = vmatprep.subr.bf16.mxu0 0
        %2979 = vmatpush1.bf16.msra.mxu0 %v2841
        %2980 = vmatprep.subr.bf16.mxu0 0
        %2981 = vmatpush1.bf16.msra.mxu0 %v2840
        %2982 = vmatprep.subr.bf16.mxu0 0
        %2983 = vmatpush1.bf16.msra.mxu0 %v2839
        %2984 = vmatprep.subr.bf16.mxu0 0
        %2985 = vmatpush1.bf16.msra.mxu0 %v2838
        %2986 = vmatprep.subr.bf16.mxu0 0
        %2987 = vmatpush1.bf16.msra.mxu0 %v2837
        %2988 = vmatprep.subr.bf16.mxu0 0
        %2989 = vmatpush1.bf16.msra.mxu0 %v2836
        %2990 = vmatprep.subr.bf16.mxu0 0
        %2991 = vmatpush1.bf16.msra.mxu0 %v2835
        %2992 = vmatprep.subr.bf16.mxu0 0
        %2993 = vmatpush1.bf16.msra.mxu0 %v2834
        %2994 = vmatprep.subr.bf16.mxu0 0
        %2995 = vmatpush2.bf16.msra.mxu0 %v2849
        %2996 = vmatprep.subr.bf16.mxu0 0
        %2997 = vmatpush2.bf16.msra.mxu0 %v2848
        %2998 = vmatprep.subr.bf16.mxu0 0
        %2999 = vmatpush2.bf16.msra.mxu0 %v2847
        %3000 = vmatprep.subr.bf16.mxu0 0
        %3001 = vmatpush2.bf16.msra.mxu0 %v2846
        %3002 = vmatprep.subr.bf16.mxu0 0
        %3003 = vmatpush2.bf16.msra.mxu0 %v2845
        %3004 = vmatprep.subr.bf16.mxu0 0
        %3005 = vmatpush2.bf16.msra.mxu0 %v2844
        %3006 = vmatprep.subr.bf16.mxu0 0
        %3007 = vmatpush2.bf16.msra.mxu0 %v2843
        %3008 = vmatprep.subr.bf16.mxu0 0
        %3009 = vmatpush2.bf16.msra.mxu0 %v2842
        %3010 = vmatprep.mubr.bf16.mxu0 %v2369
        %3011 = vmatmul.mubr.bf16.gmra.mxu0 %v2354
        %v3012 = vpop.f32.mrf.mxu0
        %v3013 = vadd.f32 0.0, %v3012
        %v3014 = vpop.f32.mrf.mxu0
        %v3015 = vpop.f32.mrf.mxu0
        %v3016 = vadd.f32 0.0, %v3015
        %v3017 = vpop.f32.mrf.mxu0
        %3018 = vmatprep.mubr.bf16.mxu0 %v2370
        %3019 = vmatmul.mubr.bf16.gmra.mxu0 %v2355
        %v3020 = vpop.f32.mrf.mxu0
        %v3021 = vadd.f32 0.0, %v3020
        %v3022 = vpop.f32.mrf.mxu0
        %v3023 = vpop.f32.mrf.mxu0
        %v3024 = vadd.f32 0.0, %v3023
        %v3025 = vpop.f32.mrf.mxu0
        %3026 = vmatprep.mubr.bf16.mxu0 %v2369
        %3027 = vmatmul.mubr.bf16.gmra.mxu0 %v2354
        %v3028 = vpop.f32.mrf.mxu0
        %v3029 = vadd.f32 0.0, %v3028
        %v3030 = vpop.f32.mrf.mxu0
        %v3031 = vpop.f32.mrf.mxu0
        %v3032 = vadd.f32 0.0, %v3031
        %v3033 = vpop.f32.mrf.mxu0
        %3034 = vmatprep.mubr.bf16.mxu0 %v2371
        %3035 = vmatmul.mubr.bf16.gmra.mxu0 %v2356
        %v3036 = vpop.f32.mrf.mxu0
        %v3037 = vadd.f32 0.0, %v3036
        %v3038 = vpop.f32.mrf.mxu0
        %v3039 = vpop.f32.mrf.mxu0
        %v3040 = vadd.f32 0.0, %v3039
        %v3041 = vpop.f32.mrf.mxu0
        %3042 = vmatprep.mubr.bf16.mxu0 %v2372
        %3043 = vmatmul.mubr.bf16.gmra.mxu0 %v2357
        %v3044 = vpop.f32.mrf.mxu0
        %v3045 = vadd.f32 0.0, %v3044
        %v3046 = vpop.f32.mrf.mxu0
        %v3047 = vpop.f32.mrf.mxu0
        %v3048 = vadd.f32 0.0, %v3047
        %v3049 = vpop.f32.mrf.mxu0
        %3050 = vmatprep.mubr.bf16.mxu0 %v2373
        %3051 = vmatmul.mubr.bf16.gmra.mxu0 %v2358
        %v3052 = vpop.f32.mrf.mxu0
        %v3053 = vadd.f32 0.0, %v3052
        %v3054 = vpop.f32.mrf.mxu0
        %v3055 = vpop.f32.mrf.mxu0
        %v3056 = vadd.f32 0.0, %v3055
        %v3057 = vpop.f32.mrf.mxu0
        %3058 = vmatprep.mubr.bf16.mxu0 %v2374
        %3059 = vmatmul.mubr.bf16.gmra.mxu0 %v2359
        %v3060 = vpop.f32.mrf.mxu0
        %v3061 = vadd.f32 0.0, %v3060
        %v3062 = vpop.f32.mrf.mxu0
        %v3063 = vpop.f32.mrf.mxu0
        %v3064 = vadd.f32 0.0, %v3063
        %v3065 = vpop.f32.mrf.mxu0
        %3066 = vmatprep.mubr.bf16.mxu0 %v2375
        %3067 = vmatmul.mubr.bf16.gmra.mxu0 %v2360
        %v3068 = vpop.f32.mrf.mxu0
        %v3069 = vadd.f32 0.0, %v3068
        %v3070 = vpop.f32.mrf.mxu0
        %v3071 = vpop.f32.mrf.mxu0
        %v3072 = vadd.f32 0.0, %v3071
        %v3073 = vpop.f32.mrf.mxu0
        %3074 = vmatprep.mubr.bf16.mxu0 %v2376
        %3075 = vmatmul.mubr.bf16.gmra.mxu0 %v2361
        %v3076 = vpop.f32.mrf.mxu0
        %v3077 = vadd.f32 0.0, %v3076
        %v3078 = vpop.f32.mrf.mxu0
        %v3079 = vpop.f32.mrf.mxu0
        %v3080 = vadd.f32 0.0, %v3079
        %v3081 = vpop.f32.mrf.mxu0
        %3082 = vmatprep.mubr.bf16.mxu0 %v2377
        %3083 = vmatmul.mubr.bf16.gmra.mxu0 %v2362
        %v3084 = vpop.f32.mrf.mxu0
        %v3085 = vadd.f32 0.0, %v3084
        %v3086 = vpop.f32.mrf.mxu0
        %v3087 = vpop.f32.mrf.mxu0
        %v3088 = vadd.f32 0.0, %v3087
        %v3089 = vpop.f32.mrf.mxu0
        %3090 = vmatprep.mubr.bf16.mxu0 %v2378
        %3091 = vmatmul.mubr.bf16.gmra.mxu0 %v2363
        %v3092 = vpop.f32.mrf.mxu0
        %v3093 = vadd.f32 0.0, %v3092
        %v3094 = vpop.f32.mrf.mxu0
        %v3095 = vpop.f32.mrf.mxu0
        %v3096 = vadd.f32 0.0, %v3095
        %v3097 = vpop.f32.mrf.mxu0
        %3098 = vmatprep.mubr.bf16.mxu0 %v2379
        %3099 = vmatmul.mubr.bf16.gmra.mxu0 %v2364
        %v3100 = vpop.f32.mrf.mxu0
        %v3101 = vadd.f32 0.0, %v3100
        %v3102 = vpop.f32.mrf.mxu0
        %v3103 = vpop.f32.mrf.mxu0
        %v3104 = vadd.f32 0.0, %v3103
        %v3105 = vpop.f32.mrf.mxu0
        %3106 = vmatprep.mubr.bf16.mxu0 %v2380
        %3107 = vmatmul.mubr.bf16.gmra.mxu0 %v2365
        %v3108 = vpop.f32.mrf.mxu0
        %v3109 = vadd.f32 0.0, %v3108
        %v3110 = vpop.f32.mrf.mxu0
        %v3111 = vpop.f32.mrf.mxu0
        %v3112 = vadd.f32 0.0, %v3111
        %v3113 = vpop.f32.mrf.mxu0
        %3114 = vmatprep.mubr.bf16.mxu0 %v2381
        %3115 = vmatmul.mubr.bf16.gmra.mxu0 %v2366
        %v3116 = vpop.f32.mrf.mxu0
        %v3117 = vadd.f32 0.0, %v3116
        %v3118 = vpop.f32.mrf.mxu0
        %v3119 = vpop.f32.mrf.mxu0
        %v3120 = vadd.f32 0.0, %v3119
        %v3121 = vpop.f32.mrf.mxu0
        %3122 = vmatprep.mubr.bf16.mxu0 %v2382
        %3123 = vmatmul.mubr.bf16.gmra.mxu0 %v2367
        %v3124 = vpop.f32.mrf.mxu0
        %v3125 = vadd.f32 0.0, %v3124
        %v3126 = vpop.f32.mrf.mxu0
        %v3127 = vpop.f32.mrf.mxu0
        %v3128 = vadd.f32 0.0, %v3127
        %v3129 = vpop.f32.mrf.mxu0
        %3130 = vmatprep.mubr.bf16.mxu0 %v2383
        %3131 = vmatmul.mubr.bf16.gmra.mxu0 %v2368
        %v3132 = vpop.f32.mrf.mxu0
        %v3133 = vadd.f32 0.0, %v3132
        %v3134 = vpop.f32.mrf.mxu0
        %v3135 = vpop.f32.mrf.mxu0
        %v3136 = vadd.f32 0.0, %v3135
        %v3137 = vpop.f32.mrf.mxu0
        %3138 = vdwg.mxu0
        %3139 = vmatprep.subr.bf16.mxu0 0
        %3140 = vmatpush1.bf16.msra.mxu0 %v2857
        %3141 = vmatprep.subr.bf16.mxu0 0
        %3142 = vmatpush1.bf16.msra.mxu0 %v2856
        %3143 = vmatprep.subr.bf16.mxu0 0
        %3144 = vmatpush1.bf16.msra.mxu0 %v2855
        %3145 = vmatprep.subr.bf16.mxu0 0
        %3146 = vmatpush1.bf16.msra.mxu0 %v2854
        %3147 = vmatprep.subr.bf16.mxu0 0
        %3148 = vmatpush1.bf16.msra.mxu0 %v2853
        %3149 = vmatprep.subr.bf16.mxu0 0
        %3150 = vmatpush1.bf16.msra.mxu0 %v2852
        %3151 = vmatprep.subr.bf16.mxu0 0
        %3152 = vmatpush1.bf16.msra.mxu0 %v2851
        %3153 = vmatprep.subr.bf16.mxu0 0
        %3154 = vmatpush1.bf16.msra.mxu0 %v2850
        %3155 = vmatprep.subr.bf16.mxu0 0
        %3156 = vmatpush2.bf16.msra.mxu0 %v2865
        %3157 = vmatprep.subr.bf16.mxu0 0
        %3158 = vmatpush2.bf16.msra.mxu0 %v2864
        %3159 = vmatprep.subr.bf16.mxu0 0
        %3160 = vmatpush2.bf16.msra.mxu0 %v2863
        %3161 = vmatprep.subr.bf16.mxu0 0
        %3162 = vmatpush2.bf16.msra.mxu0 %v2862
        %3163 = vmatprep.subr.bf16.mxu0 0
        %3164 = vmatpush2.bf16.msra.mxu0 %v2861
        %3165 = vmatprep.subr.bf16.mxu0 0
        %3166 = vmatpush2.bf16.msra.mxu0 %v2860
        %3167 = vmatprep.subr.bf16.mxu0 0
        %3168 = vmatpush2.bf16.msra.mxu0 %v2859
        %3169 = vmatprep.subr.bf16.mxu0 0
        %3170 = vmatpush2.bf16.msra.mxu0 %v2858
        %3171 = vmatprep.mubr.bf16.mxu0 %v2355
        %3172 = vmatmul.mubr.bf16.gmra.mxu0 %v2384
        %v3173 = vpop.f32.mrf.mxu0
        %v3174 = vadd.f32 %v3013, %v3173
        %v3175 = vpop.f32.mrf.mxu0
        %v3176 = vpop.f32.mrf.mxu0
        %v3177 = vadd.f32 %v3016, %v3176
        %v3178 = vpop.f32.mrf.mxu0
        %3179 = vmatprep.mubr.bf16.mxu0 %v2354
        %3180 = vmatmul.mubr.bf16.gmra.mxu0 %v2385
        %v3181 = vpop.f32.mrf.mxu0
        %v3182 = vadd.f32 %v3021, %v3181
        %v3183 = vpop.f32.mrf.mxu0
        %v3184 = vpop.f32.mrf.mxu0
        %v3185 = vadd.f32 %v3024, %v3184
        %v3186 = vpop.f32.mrf.mxu0
        %3187 = vmatprep.mubr.bf16.mxu0 %v2356
        %3188 = vmatmul.mubr.bf16.gmra.mxu0 %v2384
        %v3189 = vpop.f32.mrf.mxu0
        %v3190 = vadd.f32 %v3029, %v3189
        %v3191 = vpop.f32.mrf.mxu0
        %v3192 = vpop.f32.mrf.mxu0
        %v3193 = vadd.f32 %v3032, %v3192
        %v3194 = vpop.f32.mrf.mxu0
        %3195 = vmatprep.mubr.bf16.mxu0 %v2357
        %3196 = vmatmul.mubr.bf16.gmra.mxu0 %v2386
        %v3197 = vpop.f32.mrf.mxu0
        %v3198 = vadd.f32 %v3037, %v3197
        %v3199 = vpop.f32.mrf.mxu0
        %v3200 = vpop.f32.mrf.mxu0
        %v3201 = vadd.f32 %v3040, %v3200
        %v3202 = vpop.f32.mrf.mxu0
        %3203 = vmatprep.mubr.bf16.mxu0 %v2358
        %3204 = vmatmul.mubr.bf16.gmra.mxu0 %v2387
        %v3205 = vpop.f32.mrf.mxu0
        %v3206 = vadd.f32 %v3045, %v3205
        %v3207 = vpop.f32.mrf.mxu0
        %v3208 = vpop.f32.mrf.mxu0
        %v3209 = vadd.f32 %v3048, %v3208
        %v3210 = vpop.f32.mrf.mxu0
        %3211 = vmatprep.mubr.bf16.mxu0 %v2359
        %3212 = vmatmul.mubr.bf16.gmra.mxu0 %v2388
        %v3213 = vpop.f32.mrf.mxu0
        %v3214 = vadd.f32 %v3053, %v3213
        %v3215 = vpop.f32.mrf.mxu0
        %v3216 = vpop.f32.mrf.mxu0
        %v3217 = vadd.f32 %v3056, %v3216
        %v3218 = vpop.f32.mrf.mxu0
        %3219 = vmatprep.mubr.bf16.mxu0 %v2360
        %3220 = vmatmul.mubr.bf16.gmra.mxu0 %v2389
        %v3221 = vpop.f32.mrf.mxu0
        %v3222 = vadd.f32 %v3061, %v3221
        %v3223 = vpop.f32.mrf.mxu0
        %v3224 = vpop.f32.mrf.mxu0
        %v3225 = vadd.f32 %v3064, %v3224
        %v3226 = vpop.f32.mrf.mxu0
        %3227 = vmatprep.mubr.bf16.mxu0 %v2361
        %3228 = vmatmul.mubr.bf16.gmra.mxu0 %v2390
        %v3229 = vpop.f32.mrf.mxu0
        %v3230 = vadd.f32 %v3069, %v3229
        %v3231 = vpop.f32.mrf.mxu0
        %v3232 = vpop.f32.mrf.mxu0
        %v3233 = vadd.f32 %v3072, %v3232
        %v3234 = vpop.f32.mrf.mxu0
        %3235 = vmatprep.mubr.bf16.mxu0 %v2362
        %3236 = vmatmul.mubr.bf16.gmra.mxu0 %v2391
        %v3237 = vpop.f32.mrf.mxu0
        %v3238 = vadd.f32 %v3077, %v3237
        %v3239 = vpop.f32.mrf.mxu0
        %v3240 = vpop.f32.mrf.mxu0
        %v3241 = vadd.f32 %v3080, %v3240
        %v3242 = vpop.f32.mrf.mxu0
        %3243 = vmatprep.mubr.bf16.mxu0 %v2363
        %3244 = vmatmul.mubr.bf16.gmra.mxu0 %v2392
        %v3245 = vpop.f32.mrf.mxu0
        %v3246 = vadd.f32 %v3085, %v3245
        %v3247 = vpop.f32.mrf.mxu0
        %v3248 = vpop.f32.mrf.mxu0
        %v3249 = vadd.f32 %v3088, %v3248
        %v3250 = vpop.f32.mrf.mxu0
        %3251 = vmatprep.mubr.bf16.mxu0 %v2364
        %3252 = vmatmul.mubr.bf16.gmra.mxu0 %v2393
        %v3253 = vpop.f32.mrf.mxu0
        %v3254 = vadd.f32 %v3093, %v3253
        %v3255 = vpop.f32.mrf.mxu0
        %v3256 = vpop.f32.mrf.mxu0
        %v3257 = vadd.f32 %v3096, %v3256
        %v3258 = vpop.f32.mrf.mxu0
        %3259 = vmatprep.mubr.bf16.mxu0 %v2365
        %3260 = vmatmul.mubr.bf16.gmra.mxu0 %v2394
        %v3261 = vpop.f32.mrf.mxu0
        %v3262 = vadd.f32 %v3101, %v3261
        %v3263 = vpop.f32.mrf.mxu0
        %v3264 = vpop.f32.mrf.mxu0
        %v3265 = vadd.f32 %v3104, %v3264
        %v3266 = vpop.f32.mrf.mxu0
        %3267 = vmatprep.mubr.bf16.mxu0 %v2366
        %3268 = vmatmul.mubr.bf16.gmra.mxu0 %v2395
        %v3269 = vpop.f32.mrf.mxu0
        %v3270 = vadd.f32 %v3109, %v3269
        %v3271 = vpop.f32.mrf.mxu0
        %v3272 = vpop.f32.mrf.mxu0
        %v3273 = vadd.f32 %v3112, %v3272
        %v3274 = vpop.f32.mrf.mxu0
        %3275 = vmatprep.mubr.bf16.mxu0 %v2367
        %3276 = vmatmul.mubr.bf16.gmra.mxu0 %v2396
        %v3277 = vpop.f32.mrf.mxu0
        %v3278 = vadd.f32 %v3117, %v3277
        %v3279 = vpop.f32.mrf.mxu0
        %v3280 = vpop.f32.mrf.mxu0
        %v3281 = vadd.f32 %v3120, %v3280
        %v3282 = vpop.f32.mrf.mxu0
        %3283 = vmatprep.mubr.bf16.mxu0 %v2368
        %3284 = vmatmul.mubr.bf16.gmra.mxu0 %v2397
        %v3285 = vpop.f32.mrf.mxu0
        %v3286 = vadd.f32 %v3125, %v3285
        %v3287 = vpop.f32.mrf.mxu0
        %v3288 = vpop.f32.mrf.mxu0
        %v3289 = vadd.f32 %v3128, %v3288
        %v3290 = vpop.f32.mrf.mxu0
        %3291 = vmatprep.mubr.bf16.mxu0 %v2399
        %3292 = vmatmul.mubr.bf16.gmra.mxu0 %v2398
        %v3293 = vpop.f32.mrf.mxu0
        %v3294 = vadd.f32 %v3133, %v3293
        %v3295 = vpop.f32.mrf.mxu0
        %v3296 = vpop.f32.mrf.mxu0
        %v3297 = vadd.f32 %v3136, %v3296
        %v3298 = vpop.f32.mrf.mxu0
        %3299 = vdwg.mxu0
        %3300 = vmatprep.subr.bf16.mxu0 0
        %3301 = vmatpush1.bf16.msra.mxu0 %v2873
        %3302 = vmatprep.subr.bf16.mxu0 0
        %3303 = vmatpush1.bf16.msra.mxu0 %v2872
        %3304 = vmatprep.subr.bf16.mxu0 0
        %3305 = vmatpush1.bf16.msra.mxu0 %v2871
        %3306 = vmatprep.subr.bf16.mxu0 0
        %3307 = vmatpush1.bf16.msra.mxu0 %v2870
        %3308 = vmatprep.subr.bf16.mxu0 0
        %3309 = vmatpush1.bf16.msra.mxu0 %v2869
        %3310 = vmatprep.subr.bf16.mxu0 0
        %3311 = vmatpush1.bf16.msra.mxu0 %v2868
        %3312 = vmatprep.subr.bf16.mxu0 0
        %3313 = vmatpush1.bf16.msra.mxu0 %v2867
        %3314 = vmatprep.subr.bf16.mxu0 0
        %3315 = vmatpush1.bf16.msra.mxu0 %v2866
        %3316 = vmatprep.subr.bf16.mxu0 0
        %3317 = vmatpush2.bf16.msra.mxu0 %v2881
        %3318 = vmatprep.subr.bf16.mxu0 0
        %3319 = vmatpush2.bf16.msra.mxu0 %v2880
        %3320 = vmatprep.subr.bf16.mxu0 0
        %3321 = vmatpush2.bf16.msra.mxu0 %v2879
        %3322 = vmatprep.subr.bf16.mxu0 0
        %3323 = vmatpush2.bf16.msra.mxu0 %v2878
        %3324 = vmatprep.subr.bf16.mxu0 0
        %3325 = vmatpush2.bf16.msra.mxu0 %v2877
        %3326 = vmatprep.subr.bf16.mxu0 0
        %3327 = vmatpush2.bf16.msra.mxu0 %v2876
        %3328 = vmatprep.subr.bf16.mxu0 0
        %3329 = vmatpush2.bf16.msra.mxu0 %v2875
        %3330 = vmatprep.subr.bf16.mxu0 0
        %3331 = vmatpush2.bf16.msra.mxu0 %v2874
        %3332 = vmatprep.mubr.bf16.mxu0 %v2385
        %3333 = vmatmul.mubr.bf16.gmra.mxu0 %v2370
        %v3334 = vpop.f32.mrf.mxu0
        %v3335 = vadd.f32 %v3174, %v3334
        %v3336 = vpop.f32.mrf.mxu0
        %v3337 = vpop.f32.mrf.mxu0
        %v3338 = vadd.f32 %v3177, %v3337
        %v3339 = vpop.f32.mrf.mxu0
        %3340 = vmatprep.mubr.bf16.mxu0 %v2384
        %3341 = vmatmul.mubr.bf16.gmra.mxu0 %v2369
        %v3342 = vpop.f32.mrf.mxu0
        %v3343 = vadd.f32 %v3182, %v3342
        %v3344 = vpop.f32.mrf.mxu0
        %v3345 = vpop.f32.mrf.mxu0
        %v3346 = vadd.f32 %v3185, %v3345
        %v3347 = vpop.f32.mrf.mxu0
        %3348 = vmatprep.mubr.bf16.mxu0 %v2386
        %3349 = vmatmul.mubr.bf16.gmra.mxu0 %v2371
        %v3350 = vpop.f32.mrf.mxu0
        %v3351 = vadd.f32 %v3190, %v3350
        %v3352 = vpop.f32.mrf.mxu0
        %v3353 = vpop.f32.mrf.mxu0
        %v3354 = vadd.f32 %v3193, %v3353
        %v3355 = vpop.f32.mrf.mxu0
        %3356 = vmatprep.mubr.bf16.mxu0 %v2387
        %3357 = vmatmul.mubr.bf16.gmra.mxu0 %v2372
        %v3358 = vpop.f32.mrf.mxu0
        %v3359 = vadd.f32 %v3198, %v3358
        %v3360 = vpop.f32.mrf.mxu0
        %v3361 = vpop.f32.mrf.mxu0
        %v3362 = vadd.f32 %v3201, %v3361
        %v3363 = vpop.f32.mrf.mxu0
        %3364 = vmatprep.mubr.bf16.mxu0 %v2388
        %3365 = vmatmul.mubr.bf16.gmra.mxu0 %v2373
        %v3366 = vpop.f32.mrf.mxu0
        %v3367 = vadd.f32 %v3206, %v3366
        %v3368 = vpop.f32.mrf.mxu0
        %v3369 = vpop.f32.mrf.mxu0
        %v3370 = vadd.f32 %v3209, %v3369
        %v3371 = vpop.f32.mrf.mxu0
        %3372 = vmatprep.mubr.bf16.mxu0 %v2389
        %3373 = vmatmul.mubr.bf16.gmra.mxu0 %v2374
        %v3374 = vpop.f32.mrf.mxu0
        %v3375 = vadd.f32 %v3214, %v3374
        %v3376 = vpop.f32.mrf.mxu0
        %v3377 = vpop.f32.mrf.mxu0
        %v3378 = vadd.f32 %v3217, %v3377
        %v3379 = vpop.f32.mrf.mxu0
        %3380 = vmatprep.mubr.bf16.mxu0 %v2390
        %3381 = vmatmul.mubr.bf16.gmra.mxu0 %v2375
        %v3382 = vpop.f32.mrf.mxu0
        %v3383 = vadd.f32 %v3222, %v3382
        %v3384 = vpop.f32.mrf.mxu0
        %v3385 = vpop.f32.mrf.mxu0
        %v3386 = vadd.f32 %v3225, %v3385
        %v3387 = vpop.f32.mrf.mxu0
        %3388 = vmatprep.mubr.bf16.mxu0 %v2391
        %3389 = vmatmul.mubr.bf16.gmra.mxu0 %v2376
        %v3390 = vpop.f32.mrf.mxu0
        %v3391 = vadd.f32 %v3230, %v3390
        %v3392 = vpop.f32.mrf.mxu0
        %v3393 = vpop.f32.mrf.mxu0
        %v3394 = vadd.f32 %v3233, %v3393
        %v3395 = vpop.f32.mrf.mxu0
        %3396 = vmatprep.mubr.bf16.mxu0 %v2392
        %3397 = vmatmul.mubr.bf16.gmra.mxu0 %v2377
        %v3398 = vpop.f32.mrf.mxu0
        %v3399 = vadd.f32 %v3238, %v3398
        %v3400 = vpop.f32.mrf.mxu0
        %v3401 = vpop.f32.mrf.mxu0
        %v3402 = vadd.f32 %v3241, %v3401
        %v3403 = vpop.f32.mrf.mxu0
        %3404 = vmatprep.mubr.bf16.mxu0 %v2393
        %3405 = vmatmul.mubr.bf16.gmra.mxu0 %v2378
        %v3406 = vpop.f32.mrf.mxu0
        %v3407 = vadd.f32 %v3246, %v3406
        %v3408 = vpop.f32.mrf.mxu0
        %v3409 = vpop.f32.mrf.mxu0
        %v3410 = vadd.f32 %v3249, %v3409
        %v3411 = vpop.f32.mrf.mxu0
        %3412 = vmatprep.mubr.bf16.mxu0 %v2394
        %3413 = vmatmul.mubr.bf16.gmra.mxu0 %v2379
        %v3414 = vpop.f32.mrf.mxu0
        %v3415 = vadd.f32 %v3254, %v3414
        %v3416 = vpop.f32.mrf.mxu0
        %v3417 = vpop.f32.mrf.mxu0
        %v3418 = vadd.f32 %v3257, %v3417
        %v3419 = vpop.f32.mrf.mxu0
        %3420 = vmatprep.mubr.bf16.mxu0 %v2395
        %3421 = vmatmul.mubr.bf16.gmra.mxu0 %v2380
        %v3422 = vpop.f32.mrf.mxu0
        %v3423 = vadd.f32 %v3262, %v3422
        %v3424 = vpop.f32.mrf.mxu0
        %v3425 = vpop.f32.mrf.mxu0
        %v3426 = vadd.f32 %v3265, %v3425
        %v3427 = vpop.f32.mrf.mxu0
        %3428 = vmatprep.mubr.bf16.mxu0 %v2396
        %3429 = vmatmul.mubr.bf16.gmra.mxu0 %v2381
        %v3430 = vpop.f32.mrf.mxu0
        %v3431 = vadd.f32 %v3270, %v3430
        %v3432 = vpop.f32.mrf.mxu0
        %v3433 = vpop.f32.mrf.mxu0
        %v3434 = vadd.f32 %v3273, %v3433
        %v3435 = vpop.f32.mrf.mxu0
        %3436 = vmatprep.mubr.bf16.mxu0 %v2397
        %3437 = vmatmul.mubr.bf16.gmra.mxu0 %v2382
        %v3438 = vpop.f32.mrf.mxu0
        %v3439 = vadd.f32 %v3278, %v3438
        %v3440 = vpop.f32.mrf.mxu0
        %v3441 = vpop.f32.mrf.mxu0
        %v3442 = vadd.f32 %v3281, %v3441
        %v3443 = vpop.f32.mrf.mxu0
        %3444 = vmatprep.mubr.bf16.mxu0 %v2398
        %3445 = vmatmul.mubr.bf16.gmra.mxu0 %v2383
        %v3446 = vpop.f32.mrf.mxu0
        %v3447 = vadd.f32 %v3286, %v3446
        %v3448 = vpop.f32.mrf.mxu0
        %v3449 = vpop.f32.mrf.mxu0
        %v3450 = vadd.f32 %v3289, %v3449
        %v3451 = vpop.f32.mrf.mxu0
        %3452 = vmatprep.mubr.bf16.mxu0 %v2401
        %3453 = vmatmul.mubr.bf16.gmra.mxu0 %v2400
        %v3454 = vpop.f32.mrf.mxu0
        %v3455 = vadd.f32 %v3294, %v3454
        %v3456 = vpop.f32.mrf.mxu0
        %v3457 = vpop.f32.mrf.mxu0
        %v3458 = vadd.f32 %v3297, %v3457
        %v3459 = vpop.f32.mrf.mxu0
        %3460 = vdwg.mxu0
        %3461 = vmatprep.subr.bf16.mxu0 0
        %3462 = vmatpush1.bf16.msra.mxu0 %v2889
        %3463 = vmatprep.subr.bf16.mxu0 0
        %3464 = vmatpush1.bf16.msra.mxu0 %v2888
        %3465 = vmatprep.subr.bf16.mxu0 0
        %3466 = vmatpush1.bf16.msra.mxu0 %v2887
        %3467 = vmatprep.subr.bf16.mxu0 0
        %3468 = vmatpush1.bf16.msra.mxu0 %v2886
        %3469 = vmatprep.subr.bf16.mxu0 0
        %3470 = vmatpush1.bf16.msra.mxu0 %v2885
        %3471 = vmatprep.subr.bf16.mxu0 0
        %3472 = vmatpush1.bf16.msra.mxu0 %v2884
        %3473 = vmatprep.subr.bf16.mxu0 0
        %3474 = vmatpush1.bf16.msra.mxu0 %v2883
        %3475 = vmatprep.subr.bf16.mxu0 0
        %3476 = vmatpush1.bf16.msra.mxu0 %v2882
        %3477 = vmatprep.subr.bf16.mxu0 0
        %3478 = vmatpush2.bf16.msra.mxu0 %v2897
        %3479 = vmatprep.subr.bf16.mxu0 0
        %3480 = vmatpush2.bf16.msra.mxu0 %v2896
        %3481 = vmatprep.subr.bf16.mxu0 0
        %3482 = vmatpush2.bf16.msra.mxu0 %v2895
        %3483 = vmatprep.subr.bf16.mxu0 0
        %3484 = vmatpush2.bf16.msra.mxu0 %v2894
        %3485 = vmatprep.subr.bf16.mxu0 0
        %3486 = vmatpush2.bf16.msra.mxu0 %v2893
        %3487 = vmatprep.subr.bf16.mxu0 0
        %3488 = vmatpush2.bf16.msra.mxu0 %v2892
        %3489 = vmatprep.subr.bf16.mxu0 0
        %3490 = vmatpush2.bf16.msra.mxu0 %v2891
        %3491 = vmatprep.subr.bf16.mxu0 0
        %3492 = vmatpush2.bf16.msra.mxu0 %v2890
        %3493 = vmatprep.mubr.bf16.mxu0 %v2369
        %3494 = vmatmul.mubr.bf16.gmra.mxu0 %v2354
        %v3495 = vpop.f32.mrf.mxu0
        %v3496 = vadd.f32 %v3335, %v3495
        %v3497 = vpop.f32.mrf.mxu0
        %v3498 = vpop.f32.mrf.mxu0
        %v3499 = vadd.f32 %v3338, %v3498
        %v3500 = vpop.f32.mrf.mxu0
        %3501 = vmatprep.mubr.bf16.mxu0 %v2371
        %3502 = vmatmul.mubr.bf16.gmra.mxu0 %v2356
        %v3503 = vpop.f32.mrf.mxu0
        %v3504 = vadd.f32 %v3343, %v3503
        %v3505 = vpop.f32.mrf.mxu0
        %v3506 = vpop.f32.mrf.mxu0
        %v3507 = vadd.f32 %v3346, %v3506
        %v3508 = vpop.f32.mrf.mxu0
        %3509 = vmatprep.mubr.bf16.mxu0 %v2372
        %3510 = vmatmul.mubr.bf16.gmra.mxu0 %v2357
        %v3511 = vpop.f32.mrf.mxu0
        %v3512 = vadd.f32 %v3351, %v3511
        %v3513 = vpop.f32.mrf.mxu0
        %v3514 = vpop.f32.mrf.mxu0
        %v3515 = vadd.f32 %v3354, %v3514
        %v3516 = vpop.f32.mrf.mxu0
        %3517 = vmatprep.mubr.bf16.mxu0 %v2373
        %3518 = vmatmul.mubr.bf16.gmra.mxu0 %v2358
        %v3519 = vpop.f32.mrf.mxu0
        %v3520 = vadd.f32 %v3359, %v3519
        %v3521 = vpop.f32.mrf.mxu0
        %v3522 = vpop.f32.mrf.mxu0
        %v3523 = vadd.f32 %v3362, %v3522
        %v3524 = vpop.f32.mrf.mxu0
        %3525 = vmatprep.mubr.bf16.mxu0 %v2374
        %3526 = vmatmul.mubr.bf16.gmra.mxu0 %v2359
        %v3527 = vpop.f32.mrf.mxu0
        %v3528 = vadd.f32 %v3367, %v3527
        %v3529 = vpop.f32.mrf.mxu0
        %v3530 = vpop.f32.mrf.mxu0
        %v3531 = vadd.f32 %v3370, %v3530
        %v3532 = vpop.f32.mrf.mxu0
        %3533 = vmatprep.mubr.bf16.mxu0 %v2375
        %3534 = vmatmul.mubr.bf16.gmra.mxu0 %v2360
        %v3535 = vpop.f32.mrf.mxu0
        %v3536 = vadd.f32 %v3375, %v3535
        %v3537 = vpop.f32.mrf.mxu0
        %v3538 = vpop.f32.mrf.mxu0
        %v3539 = vadd.f32 %v3378, %v3538
        %v3540 = vpop.f32.mrf.mxu0
        %3541 = vmatprep.mubr.bf16.mxu0 %v2376
        %3542 = vmatmul.mubr.bf16.gmra.mxu0 %v2361
        %v3543 = vpop.f32.mrf.mxu0
        %v3544 = vadd.f32 %v3383, %v3543
        %v3545 = vpop.f32.mrf.mxu0
        %v3546 = vpop.f32.mrf.mxu0
        %v3547 = vadd.f32 %v3386, %v3546
        %v3548 = vpop.f32.mrf.mxu0
        %3549 = vmatprep.mubr.bf16.mxu0 %v2377
        %3550 = vmatmul.mubr.bf16.gmra.mxu0 %v2362
        %v3551 = vpop.f32.mrf.mxu0
        %v3552 = vadd.f32 %v3391, %v3551
        %v3553 = vpop.f32.mrf.mxu0
        %v3554 = vpop.f32.mrf.mxu0
        %v3555 = vadd.f32 %v3394, %v3554
        %v3556 = vpop.f32.mrf.mxu0
        %3557 = vmatprep.mubr.bf16.mxu0 %v2378
        %3558 = vmatmul.mubr.bf16.gmra.mxu0 %v2363
        %v3559 = vpop.f32.mrf.mxu0
        %v3560 = vadd.f32 %v3399, %v3559
        %v3561 = vpop.f32.mrf.mxu0
        %v3562 = vpop.f32.mrf.mxu0
        %v3563 = vadd.f32 %v3402, %v3562
        %v3564 = vpop.f32.mrf.mxu0
        %3565 = vmatprep.mubr.bf16.mxu0 %v2379
        %3566 = vmatmul.mubr.bf16.gmra.mxu0 %v2364
        %v3567 = vpop.f32.mrf.mxu0
        %v3568 = vadd.f32 %v3407, %v3567
        %v3569 = vpop.f32.mrf.mxu0
        %v3570 = vpop.f32.mrf.mxu0
        %v3571 = vadd.f32 %v3410, %v3570
        %v3572 = vpop.f32.mrf.mxu0
        %3573 = vmatprep.mubr.bf16.mxu0 %v2380
        %3574 = vmatmul.mubr.bf16.gmra.mxu0 %v2365
        %v3575 = vpop.f32.mrf.mxu0
        %v3576 = vadd.f32 %v3415, %v3575
        %v3577 = vpop.f32.mrf.mxu0
        %v3578 = vpop.f32.mrf.mxu0
        %v3579 = vadd.f32 %v3418, %v3578
        %v3580 = vpop.f32.mrf.mxu0
        %3581 = vmatprep.mubr.bf16.mxu0 %v2381
        %3582 = vmatmul.mubr.bf16.gmra.mxu0 %v2366
        %v3583 = vpop.f32.mrf.mxu0
        %v3584 = vadd.f32 %v3423, %v3583
        %v3585 = vpop.f32.mrf.mxu0
        %v3586 = vpop.f32.mrf.mxu0
        %v3587 = vadd.f32 %v3426, %v3586
        %v3588 = vpop.f32.mrf.mxu0
        %3589 = vmatprep.mubr.bf16.mxu0 %v2382
        %3590 = vmatmul.mubr.bf16.gmra.mxu0 %v2367
        %v3591 = vpop.f32.mrf.mxu0
        %v3592 = vadd.f32 %v3431, %v3591
        %v3593 = vpop.f32.mrf.mxu0
        %v3594 = vpop.f32.mrf.mxu0
        %v3595 = vadd.f32 %v3434, %v3594
        %v3596 = vpop.f32.mrf.mxu0
        %3597 = vmatprep.mubr.bf16.mxu0 %v2383
        %3598 = vmatmul.mubr.bf16.gmra.mxu0 %v2368
        %v3599 = vpop.f32.mrf.mxu0
        %v3600 = vadd.f32 %v3439, %v3599
        %v3601 = vpop.f32.mrf.mxu0
        %v3602 = vpop.f32.mrf.mxu0
        %v3603 = vadd.f32 %v3442, %v3602
        %v3604 = vpop.f32.mrf.mxu0
        %3605 = vmatprep.mubr.bf16.mxu0 %v2400
        %3606 = vmatmul.mubr.bf16.gmra.mxu0 %v2399
        %v3607 = vpop.f32.mrf.mxu0
        %v3608 = vadd.f32 %v3447, %v3607
        %v3609 = vpop.f32.mrf.mxu0
        %v3610 = vpop.f32.mrf.mxu0
        %v3611 = vadd.f32 %v3450, %v3610
        %v3612 = vpop.f32.mrf.mxu0
        %3613 = vmatprep.mubr.bf16.mxu0 %v2383
        %3614 = vmatmul.mubr.bf16.gmra.mxu0 %v2368
        %v3615 = vpop.f32.mrf.mxu0
        %v3616 = vadd.f32 %v3455, %v3615
        %v3617 = vpop.f32.mrf.mxu0
        %v3618 = vpop.f32.mrf.mxu0
        %v3619 = vadd.f32 %v3458, %v3618
        %v3620 = vpop.f32.mrf.mxu0
        %3621 = vdwg.mxu0
        %3622 = vmatprep.subr.bf16.mxu0 0
        %3623 = vmatpush1.bf16.msra.mxu0 %v2905
        %3624 = vmatprep.subr.bf16.mxu0 0
        %3625 = vmatpush1.bf16.msra.mxu0 %v2904
        %3626 = vmatprep.subr.bf16.mxu0 0
        %3627 = vmatpush1.bf16.msra.mxu0 %v2903
        %3628 = vmatprep.subr.bf16.mxu0 0
        %3629 = vmatpush1.bf16.msra.mxu0 %v2902
        %3630 = vmatprep.subr.bf16.mxu0 0
        %3631 = vmatpush1.bf16.msra.mxu0 %v2901
        %3632 = vmatprep.subr.bf16.mxu0 0
        %3633 = vmatpush1.bf16.msra.mxu0 %v2900
        %3634 = vmatprep.subr.bf16.mxu0 0
        %3635 = vmatpush1.bf16.msra.mxu0 %v2899
        %3636 = vmatprep.subr.bf16.mxu0 0
        %3637 = vmatpush1.bf16.msra.mxu0 %v2898
        %3638 = vmatprep.subr.bf16.mxu0 0
        %3639 = vmatpush2.bf16.msra.mxu0 0
        %3640 = vmatprep.subr.bf16.mxu0 0
        %3641 = vmatpush2.bf16.msra.mxu0 0
        %3642 = vmatprep.subr.bf16.mxu0 0
        %3643 = vmatpush2.bf16.msra.mxu0 0
        %3644 = vmatprep.subr.bf16.mxu0 0
        %3645 = vmatpush2.bf16.msra.mxu0 0
        %3646 = vmatprep.subr.bf16.mxu0 0
        %3647 = vmatpush2.bf16.msra.mxu0 0
        %3648 = vmatprep.subr.bf16.mxu0 0
        %3649 = vmatpush2.bf16.msra.mxu0 0
        %3650 = vmatprep.subr.bf16.mxu0 0
        %3651 = vmatpush2.bf16.msra.mxu0 0
        %3652 = vmatprep.subr.bf16.mxu0 0
        %3653 = vmatpush2.bf16.msra.mxu0 0
        %3654 = vmatprep.mubr.bf16.mxu0 0
        %3655 = vmatmul.mubr.bf16.gmra.mxu0 %v2384
        %v3656 = vpop.f32.mrf.mxu0
        %v3657 = vadd.f32 %v3496, %v3656
        %v3658 = vpop.f32.mrf.mxu0
        %v3659 = vpop.f32.mrf.mxu0
        %v3660 = vadd.f32 %v3499, %v3659
        %v3661 = vpop.f32.mrf.mxu0
        %3662 = vmatprep.mubr.bf16.mxu0 0
        %3663 = vmatmul.mubr.bf16.gmra.mxu0 %v2386
        %v3664 = vpop.f32.mrf.mxu0
        %v3665 = vadd.f32 %v3504, %v3664
        %v3666 = vpop.f32.mrf.mxu0
        %v3667 = vpop.f32.mrf.mxu0
        %v3668 = vadd.f32 %v3507, %v3667
        %v3669 = vpop.f32.mrf.mxu0
        %3670 = vmatprep.mubr.bf16.mxu0 0
        %3671 = vmatmul.mubr.bf16.gmra.mxu0 %v2387
        %v3672 = vpop.f32.mrf.mxu0
        %v3673 = vadd.f32 %v3512, %v3672
        %v3674 = vpop.f32.mrf.mxu0
        %v3675 = vpop.f32.mrf.mxu0
        %v3676 = vadd.f32 %v3515, %v3675
        %v3677 = vpop.f32.mrf.mxu0
        %3678 = vmatprep.mubr.bf16.mxu0 0
        %3679 = vmatmul.mubr.bf16.gmra.mxu0 %v2388
        %v3680 = vpop.f32.mrf.mxu0
        %v3681 = vadd.f32 %v3520, %v3680
        %v3682 = vpop.f32.mrf.mxu0
        %v3683 = vpop.f32.mrf.mxu0
        %v3684 = vadd.f32 %v3523, %v3683
        %v3685 = vpop.f32.mrf.mxu0
        %3686 = vmatprep.mubr.bf16.mxu0 0
        %3687 = vmatmul.mubr.bf16.gmra.mxu0 %v2389
        %v3688 = vpop.f32.mrf.mxu0
        %v3689 = vadd.f32 %v3528, %v3688
        %v3690 = vpop.f32.mrf.mxu0
        %v3691 = vpop.f32.mrf.mxu0
        %v3692 = vadd.f32 %v3531, %v3691
        %v3693 = vpop.f32.mrf.mxu0
        %3694 = vmatprep.mubr.bf16.mxu0 0
        %3695 = vmatmul.mubr.bf16.gmra.mxu0 %v2390
        %v3696 = vpop.f32.mrf.mxu0
        %v3697 = vadd.f32 %v3536, %v3696
        %v3698 = vpop.f32.mrf.mxu0
        %v3699 = vpop.f32.mrf.mxu0
        %v3700 = vadd.f32 %v3539, %v3699
        %v3701 = vpop.f32.mrf.mxu0
        %3702 = vmatprep.mubr.bf16.mxu0 0
        %3703 = vmatmul.mubr.bf16.gmra.mxu0 %v2391
        %v3704 = vpop.f32.mrf.mxu0
        %v3705 = vadd.f32 %v3544, %v3704
        %v3706 = vpop.f32.mrf.mxu0
        %v3707 = vpop.f32.mrf.mxu0
        %v3708 = vadd.f32 %v3547, %v3707
        %v3709 = vpop.f32.mrf.mxu0
        %3710 = vmatprep.mubr.bf16.mxu0 0
        %3711 = vmatmul.mubr.bf16.gmra.mxu0 %v2392
        %v3712 = vpop.f32.mrf.mxu0
        %v3713 = vadd.f32 %v3552, %v3712
        %v3714 = vpop.f32.mrf.mxu0
        %v3715 = vpop.f32.mrf.mxu0
        %v3716 = vadd.f32 %v3555, %v3715
        %v3717 = vpop.f32.mrf.mxu0
        %3718 = vmatprep.mubr.bf16.mxu0 0
        %3719 = vmatmul.mubr.bf16.gmra.mxu0 %v2393
        %v3720 = vpop.f32.mrf.mxu0
        %v3721 = vadd.f32 %v3560, %v3720
        %v3722 = vpop.f32.mrf.mxu0
        %v3723 = vpop.f32.mrf.mxu0
        %v3724 = vadd.f32 %v3563, %v3723
        %v3725 = vpop.f32.mrf.mxu0
        %3726 = vmatprep.mubr.bf16.mxu0 0
        %3727 = vmatmul.mubr.bf16.gmra.mxu0 %v2394
        %v3728 = vpop.f32.mrf.mxu0
        %v3729 = vadd.f32 %v3568, %v3728
        %v3730 = vpop.f32.mrf.mxu0
        %v3731 = vpop.f32.mrf.mxu0
        %v3732 = vadd.f32 %v3571, %v3731
        %v3733 = vpop.f32.mrf.mxu0
        %3734 = vmatprep.mubr.bf16.mxu0 0
        %3735 = vmatmul.mubr.bf16.gmra.mxu0 %v2395
        %v3736 = vpop.f32.mrf.mxu0
        %v3737 = vadd.f32 %v3576, %v3736
        %v3738 = vpop.f32.mrf.mxu0
        %v3739 = vpop.f32.mrf.mxu0
        %v3740 = vadd.f32 %v3579, %v3739
        %v3741 = vpop.f32.mrf.mxu0
        %3742 = vmatprep.mubr.bf16.mxu0 0
        %3743 = vmatmul.mubr.bf16.gmra.mxu0 %v2396
        %v3744 = vpop.f32.mrf.mxu0
        %v3745 = vadd.f32 %v3584, %v3744
        %v3746 = vpop.f32.mrf.mxu0
        %v3747 = vpop.f32.mrf.mxu0
        %v3748 = vadd.f32 %v3587, %v3747
        %v3749 = vpop.f32.mrf.mxu0
        %3750 = vmatprep.mubr.bf16.mxu0 0
        %3751 = vmatmul.mubr.bf16.gmra.mxu0 %v2397
        %v3752 = vpop.f32.mrf.mxu0
        %v3753 = vadd.f32 %v3592, %v3752
        %v3754 = vpop.f32.mrf.mxu0
        %v3755 = vpop.f32.mrf.mxu0
        %v3756 = vadd.f32 %v3595, %v3755
        %v3757 = vpop.f32.mrf.mxu0
        %3758 = vmatprep.mubr.bf16.mxu0 0
        %3759 = vmatmul.mubr.bf16.gmra.mxu0 %v2398
        %v3760 = vpop.f32.mrf.mxu0
        %v3761 = vadd.f32 %v3600, %v3760
        %v3762 = vpop.f32.mrf.mxu0
        %v3763 = vpop.f32.mrf.mxu0
        %v3764 = vadd.f32 %v3603, %v3763
        %v3765 = vpop.f32.mrf.mxu0
        %3766 = vmatprep.mubr.bf16.mxu0 0
        %3767 = vmatmul.mubr.bf16.gmra.mxu0 %v2401
        %v3768 = vpop.f32.mrf.mxu0
        %v3769 = vadd.f32 %v3608, %v3768
        %v3770 = vpop.f32.mrf.mxu0
        %v3771 = vpop.f32.mrf.mxu0
        %v3772 = vadd.f32 %v3611, %v3771
        %v3773 = vpop.f32.mrf.mxu0
        %3774 = vmatprep.mubr.bf16.mxu0 0
        %3775 = vmatmul.mubr.bf16.gmra.mxu0 %v2398
        %v3776 = vpop.f32.mrf.mxu0
        %v3777 = vadd.f32 %v3616, %v3776
        %v3778 = vpop.f32.mrf.mxu0
        %v3779 = vpop.f32.mrf.mxu0
        %v3780 = vadd.f32 %v3619, %v3779
        %v3781 = vpop.f32.mrf.mxu0
        %3782 = vdwg.mxu0
        %v3783 = vadd.f32 %v3657, %v3660
        %v3784 = vadd.f32 %v3783, %v3665
        %v3785 = vadd.f32 %v3784, %v3668
        %v3786 = vadd.f32 %v3785, %v3673
        %v3787 = vadd.f32 %v3786, %v3676
        %v3788 = vadd.f32 %v3787, %v3681
        %v3789 = vadd.f32 %v3788, %v3684
        %v3790 = vadd.f32 %v3789, %v3689
        %v3791 = vadd.f32 %v3790, %v3692
        %v3792 = vadd.f32 %v3791, %v3697
        %v3793 = vadd.f32 %v3792, %v3700
        %v3794 = vadd.f32 %v3793, %v3705
        %v3795 = vadd.f32 %v3794, %v3708
        %v3796 = vadd.f32 %v3795, %v3713
        %v3797 = vadd.f32 %v3796, %v3716
        %v3798 = vadd.f32 %v3797, %v3721
        %v3799 = vadd.f32 %v3798, %v3724
        %v3800 = vadd.f32 %v3799, %v3729
        %v3801 = vadd.f32 %v3800, %v3732
        %v3802 = vadd.f32 %v3801, %v3737
        %v3803 = vadd.f32 %v3802, %v3740
        %v3804 = vadd.f32 %v3803, %v3745
        %v3805 = vadd.f32 %v3804, %v3748
        %v3806 = vadd.f32 %v3805, %v3753
        %v3807 = vadd.f32 %v3806, %v3756
        %v3808 = vadd.f32 %v3807, %v3761
        %v3809 = vadd.f32 %v3808, %v3764
        %v3810 = vadd.f32 %v3809, %v3769
        %v3811 = vadd.f32 %v3810, %v3772
        %v3812 = vadd.f32 %v3811, %v3777
        %v3813 = vadd.f32 %v3812, %v3780
        %v3814 = vrot.slane %v3813, 4
        %v3815 = vadd.f32 %v3813, %v3814
        %v3816 = vrot.slane %v3815, 2
        %v3817 = vadd.f32 %v3815, %v3816
        %v3818 = vrot.slane %v3817, 1
        %v3819 = vadd.f32 %v3817, %v3818
        %v3820 = vmul.f32 %v3819, %v1926
        %v3821 = vmul.f32 %v3657, %v3657
        %v3822 = vmul.f32 %v3660, %v3660
        %v3823 = vmul.f32 %v3665, %v3665
        %v3824 = vmul.f32 %v3668, %v3668
        %v3825 = vmul.f32 %v3673, %v3673
        %v3826 = vmul.f32 %v3676, %v3676
        %v3827 = vmul.f32 %v3681, %v3681
        %v3828 = vmul.f32 %v3684, %v3684
        %v3829 = vmul.f32 %v3689, %v3689
        %v3830 = vmul.f32 %v3692, %v3692
        %v3831 = vmul.f32 %v3697, %v3697
        %v3832 = vmul.f32 %v3700, %v3700
        %v3833 = vmul.f32 %v3705, %v3705
        %v3834 = vmul.f32 %v3708, %v3708
        %v3835 = vmul.f32 %v3713, %v3713
        %v3836 = vmul.f32 %v3716, %v3716
        %v3837 = vmul.f32 %v3721, %v3721
        %v3838 = vmul.f32 %v3724, %v3724
        %v3839 = vmul.f32 %v3729, %v3729
        %v3840 = vmul.f32 %v3732, %v3732
        %v3841 = vmul.f32 %v3737, %v3737
        %v3842 = vmul.f32 %v3740, %v3740
        %v3843 = vmul.f32 %v3745, %v3745
        %v3844 = vmul.f32 %v3748, %v3748
        %v3845 = vmul.f32 %v3753, %v3753
        %v3846 = vmul.f32 %v3756, %v3756
        %v3847 = vmul.f32 %v3761, %v3761
        %v3848 = vmul.f32 %v3764, %v3764
        %v3849 = vmul.f32 %v3769, %v3769
        %v3850 = vmul.f32 %v3772, %v3772
        %v3851 = vmul.f32 %v3777, %v3777
        %v3852 = vmul.f32 %v3780, %v3780
        %v3853 = vadd.f32 %v3821, %v3822
        %v3854 = vadd.f32 %v3853, %v3823
        %v3855 = vadd.f32 %v3854, %v3824
        %v3856 = vadd.f32 %v3855, %v3825
        %v3857 = vadd.f32 %v3856, %v3826
        %v3858 = vadd.f32 %v3857, %v3827
        %v3859 = vadd.f32 %v3858, %v3828
        %v3860 = vadd.f32 %v3859, %v3829
        %v3861 = vadd.f32 %v3860, %v3830
        %v3862 = vadd.f32 %v3861, %v3831
        %v3863 = vadd.f32 %v3862, %v3832
        %v3864 = vadd.f32 %v3863, %v3833
        %v3865 = vadd.f32 %v3864, %v3834
        %v3866 = vadd.f32 %v3865, %v3835
        %v3867 = vadd.f32 %v3866, %v3836
        %v3868 = vadd.f32 %v3867, %v3837
        %v3869 = vadd.f32 %v3868, %v3838
        %v3870 = vadd.f32 %v3869, %v3839
        %v3871 = vadd.f32 %v3870, %v3840
        %v3872 = vadd.f32 %v3871, %v3841
        %v3873 = vadd.f32 %v3872, %v3842
        %v3874 = vadd.f32 %v3873, %v3843
        %v3875 = vadd.f32 %v3874, %v3844
        %v3876 = vadd.f32 %v3875, %v3845
        %v3877 = vadd.f32 %v3876, %v3846
        %v3878 = vadd.f32 %v3877, %v3847
        %v3879 = vadd.f32 %v3878, %v3848
        %v3880 = vadd.f32 %v3879, %v3849
        %v3881 = vadd.f32 %v3880, %v3850
        %v3882 = vadd.f32 %v3881, %v3851
        %v3883 = vadd.f32 %v3882, %v3852
        %v3884 = vrot.slane %v3883, 4
        %v3885 = vadd.f32 %v3883, %v3884
        %v3886 = vrot.slane %v3885, 2
        %v3887 = vadd.f32 %v3885, %v3886
        %v3888 = vrot.slane %v3887, 1
        %v3889 = vadd.f32 %v3887, %v3888
        %v3890 = vmul.f32 %v3889, %v1926
        %v3891 = vsub.f32 %v3657, %v3820
        %v3892 = vsub.f32 %v3660, %v3820
        %v3893 = vsub.f32 %v3665, %v3820
        %v3894 = vsub.f32 %v3668, %v3820
        %v3895 = vsub.f32 %v3673, %v3820
        %v3896 = vsub.f32 %v3676, %v3820
        %v3897 = vsub.f32 %v3681, %v3820
        %v3898 = vsub.f32 %v3684, %v3820
        %v3899 = vsub.f32 %v3689, %v3820
        %v3900 = vsub.f32 %v3692, %v3820
        %v3901 = vsub.f32 %v3697, %v3820
        %v3902 = vsub.f32 %v3700, %v3820
        %v3903 = vsub.f32 %v3705, %v3820
        %v3904 = vsub.f32 %v3708, %v3820
        %v3905 = vsub.f32 %v3713, %v3820
        %v3906 = vsub.f32 %v3716, %v3820
        %v3907 = vsub.f32 %v3721, %v3820
        %v3908 = vsub.f32 %v3724, %v3820
        %v3909 = vsub.f32 %v3729, %v3820
        %v3910 = vsub.f32 %v3732, %v3820
        %v3911 = vsub.f32 %v3737, %v3820
        %v3912 = vsub.f32 %v3740, %v3820
        %v3913 = vsub.f32 %v3745, %v3820
        %v3914 = vsub.f32 %v3748, %v3820
        %v3915 = vsub.f32 %v3753, %v3820
        %v3916 = vsub.f32 %v3756, %v3820
        %v3917 = vsub.f32 %v3761, %v3820
        %v3918 = vsub.f32 %v3764, %v3820
        %v3919 = vsub.f32 %v3769, %v3820
        %v3920 = vsub.f32 %v3772, %v3820
        %v3921 = vsub.f32 %v3777, %v3820
        %v3922 = vsub.f32 %v3780, %v3820
        %v3923 = vmul.f32 %v3820, %v3820
        %v3924 = vsub.f32 %v3890, %v3923
        %v3925 = vadd.f32 %v3924, 1e-05
        %v3926 = vrsqrt.pop %v3925
        %v3927 = vmul.f32 %v3891, %v3926
        %v3928 = vmul.f32 %v3892, %v3926
        %v3929 = vmul.f32 %v3893, %v3926
        %v3930 = vmul.f32 %v3894, %v3926
        %v3931 = vmul.f32 %v3895, %v3926
        %v3932 = vmul.f32 %v3896, %v3926
        %v3933 = vmul.f32 %v3897, %v3926
        %v3934 = vmul.f32 %v3898, %v3926
        %v3935 = vmul.f32 %v3899, %v3926
        %v3936 = vmul.f32 %v3900, %v3926
        %v3937 = vmul.f32 %v3901, %v3926
        %v3938 = vmul.f32 %v3902, %v3926
        %v3939 = vmul.f32 %v3903, %v3926
        %v3940 = vmul.f32 %v3904, %v3926
        %v3941 = vmul.f32 %v3905, %v3926
        %v3942 = vmul.f32 %v3906, %v3926
        %v3943 = vmul.f32 %v3907, %v3926
        %v3944 = vmul.f32 %v3908, %v3926
        %v3945 = vmul.f32 %v3909, %v3926
        %v3946 = vmul.f32 %v3910, %v3926
        %v3947 = vmul.f32 %v3911, %v3926
        %v3948 = vmul.f32 %v3912, %v3926
        %v3949 = vmul.f32 %v3913, %v3926
        %v3950 = vmul.f32 %v3914, %v3926
        %v3951 = vmul.f32 %v3915, %v3926
        %v3952 = vmul.f32 %v3916, %v3926
        %v3953 = vmul.f32 %v3917, %v3926
        %v3954 = vmul.f32 %v3918, %v3926
        %v3955 = vmul.f32 %v3919, %v3926
        %v3956 = vmul.f32 %v3920, %v3926
        %v3957 = vmul.f32 %v3921, %v3926
        %v3958 = vmul.f32 %v3922, %v3926
        %v3959 = vadd.f32 %v3927, %v170
        %v3960 = vadd.f32 %v3928, %v171
        %v3961 = vadd.f32 %v3929, %v172
        %v3962 = vadd.f32 %v3930, %v173
        %v3963 = vadd.f32 %v3931, %v174
        %v3964 = vadd.f32 %v3932, %v175
        %v3965 = vadd.f32 %v3933, %v176
        %v3966 = vadd.f32 %v3934, %v177
        %v3967 = vadd.f32 %v3935, %v178
        %v3968 = vadd.f32 %v3936, %v179
        %v3969 = vadd.f32 %v3937, %v180
        %v3970 = vadd.f32 %v3938, %v181
        %v3971 = vadd.f32 %v3939, %v182
        %v3972 = vadd.f32 %v3940, %v183
        %v3973 = vadd.f32 %v3941, %v184
        %v3974 = vadd.f32 %v3942, %v185
        %v3975 = vadd.f32 %v3943, %v186
        %v3976 = vadd.f32 %v3944, %v187
        %v3977 = vadd.f32 %v3945, %v188
        %v3978 = vadd.f32 %v3946, %v189
        %v3979 = vadd.f32 %v3947, %v190
        %v3980 = vadd.f32 %v3948, %v191
        %v3981 = vadd.f32 %v3949, %v192
        %v3982 = vadd.f32 %v3950, %v193
        %v3983 = vadd.f32 %v3951, %v194
        %v3984 = vadd.f32 %v3952, %v195
        %v3985 = vadd.f32 %v3953, %v196
        %v3986 = vadd.f32 %v3954, %v197
        %v3987 = vadd.f32 %v3955, %v198
        %v3988 = vadd.f32 %v3956, %v199
        %v3989 = vadd.f32 %v3957, %v200
        %v3990 = vadd.f32 %v3958, %v201
        %v3991 = vmax.f32 %v3959, 0.0
        %v3992 = vmax.f32 %v3960, 0.0
        %v3993 = vmax.f32 %v3961, 0.0
        %v3994 = vmax.f32 %v3962, 0.0
        %v3995 = vmax.f32 %v3963, 0.0
        %v3996 = vmax.f32 %v3964, 0.0
        %v3997 = vmax.f32 %v3965, 0.0
        %v3998 = vmax.f32 %v3966, 0.0
        %v3999 = vmax.f32 %v3967, 0.0
        %v4000 = vmax.f32 %v3968, 0.0
        %v4001 = vmax.f32 %v3969, 0.0
        %v4002 = vmax.f32 %v3970, 0.0
        %v4003 = vmax.f32 %v3971, 0.0
        %v4004 = vmax.f32 %v3972, 0.0
        %v4005 = vmax.f32 %v3973, 0.0
        %v4006 = vmax.f32 %v3974, 0.0
        %v4007 = vmax.f32 %v3975, 0.0
        %v4008 = vmax.f32 %v3976, 0.0
        %v4009 = vmax.f32 %v3977, 0.0
        %v4010 = vmax.f32 %v3978, 0.0
        %v4011 = vmax.f32 %v3979, 0.0
        %v4012 = vmax.f32 %v3980, 0.0
        %v4013 = vmax.f32 %v3981, 0.0
        %v4014 = vmax.f32 %v3982, 0.0
        %v4015 = vmax.f32 %v3983, 0.0
        %v4016 = vmax.f32 %v3984, 0.0
        %v4017 = vmax.f32 %v3985, 0.0
        %v4018 = vmax.f32 %v3986, 0.0
        %v4019 = vmax.f32 %v3987, 0.0
        %v4020 = vmax.f32 %v3988, 0.0
        %v4021 = vmax.f32 %v3989, 0.0
        %v4022 = vmax.f32 %v3990, 0.0
        %4023 = vst [vmem:[%s163] sm:$0xff] %v3991
        %4024 = vst [vmem:[%s163 + $0x8] sm:$0xff] %v3992
        %4025 = vst [vmem:[%s163 + $0x10] sm:$0xff] %v3993
        %4026 = vst [vmem:[%s163 + $0x18] sm:$0xff] %v3994
        %4027 = vst [vmem:[%s163 + $0x20] sm:$0xff] %v3995
        %4028 = vst [vmem:[%s163 + $0x28] sm:$0xff] %v3996
        %4029 = vst [vmem:[%s163 + $0x30] sm:$0xff] %v3997
        %4030 = vst [vmem:[%s163 + $0x38] sm:$0xff] %v3998
        %4031 = vst [vmem:[%s163 + $0x40] sm:$0xff] %v3999
        %4032 = vst [vmem:[%s163 + $0x48] sm:$0xff] %v4000
        %4033 = vst [vmem:[%s163 + $0x50] sm:$0xff] %v4001
        %4034 = vst [vmem:[%s163 + $0x58] sm:$0xff] %v4002
        %4035 = vst [vmem:[%s163 + $0x60] sm:$0xff] %v4003
        %4036 = vst [vmem:[%s163 + $0x68] sm:$0xff] %v4004
        %4037 = vst [vmem:[%s163 + $0x70] sm:$0xff] %v4005
        %4038 = vst [vmem:[%s163 + $0x78] sm:$0xff] %v4006
        %4039 = vst [vmem:[%s163 + $0x80] sm:$0xff] %v4007
        %4040 = vst [vmem:[%s163 + $0x88] sm:$0xff] %v4008
        %4041 = vst [vmem:[%s163 + $0x90] sm:$0xff] %v4009
        %4042 = vst [vmem:[%s163 + $0x98] sm:$0xff] %v4010
        %4043 = vst [vmem:[%s163 + $0xa0] sm:$0xff] %v4011
        %4044 = vst [vmem:[%s163 + $0xa8] sm:$0xff] %v4012
        %4045 = vst [vmem:[%s163 + $0xb0] sm:$0xff] %v4013
        %4046 = vst [vmem:[%s163 + $0xb8] sm:$0xff] %v4014
        %4047 = vst [vmem:[%s163 + $0xc0] sm:$0xff] %v4015
        %4048 = vst [vmem:[%s163 + $0xc8] sm:$0xff] %v4016
        %4049 = vst [vmem:[%s163 + $0xd0] sm:$0xff] %v4017
        %4050 = vst [vmem:[%s163 + $0xd8] sm:$0xff] %v4018
        %4051 = vst [vmem:[%s163 + $0xe0] sm:$0xff] %v4019
        %4052 = vst [vmem:[%s163 + $0xe8] sm:$0xff] %v4020
        %4053 = vst [vmem:[%s163 + $0xf0] sm:$0xff] %v4021
        %4054 = vst [vmem:[%s163 + $0xf8] sm:$0xff] %v4022
        %s4055 = sand.u32 %s93, 1
        %s4056 = scalar_lea.sflag [#allocation3], %s4055
        %s4057 = sand.u32 %s93, 1
        %s4058 = smul.addr %s4057, 256
        %s4059 = scalar_lea.vmem [#allocation2], %s4058
        // Predicated region
        $region33: #{basic_block_forward.1} parent=31 // pred_check
          %p4060 = pneg %p103
        $region34: #{basic_block_forward.1} parent=31 // pred_check_branch
          %4062 = sbr.rel (%p4060) target = $region36
        $region35: #{basic_block_forward.1} parent=31 // pred_region
          %s4064 = ssub.s32 4096, 4096
          %4065 = vsyncadd %s4056, %s4064
          %s4066 = smul.addr %s17, 32
          %s4067 = smul.addr %s4066, 128
          %s4068 = scalar_lea.hbm %s3, %s4067
          %s4069 = sshll.u32 %s4059, 4
          %s4070 = int_to_ptr.vmem [resolvable:$true] %s4069
          %4075 = dma.vmem_to_hbm [thread:$0]  %s4070, 4096, %s4068, %s4056, 128, 128, 8
        $region36: #{basic_block_forward.1} parent=31 // pred_fallthru
          _
      $region32: #{basic_block_forward.1} parent=5 // pred_fallthru
        _
      %p4076 = scmp.le.s32.totalorder 2, %s12
      // Predicated region
      $region37: #{basic_block_forward.1} parent=5 // pred_check
        %p4077 = pneg %p4076
      $region38: #{basic_block_forward.1} parent=5 // pred_check_branch
        %4079 = sbr.rel (%p4077) target = $region40
      $region39: #{basic_block_forward.1} parent=5 // pred_region
        %s4080 = ssub.s32 %s12, 2
        // Predicated region
        $region41: #{basic_block_forward.1} parent=39 // pred_check
          %p4081 = pneg %p109
        $region42: #{basic_block_forward.1} parent=39 // pred_check_branch
          %4083 = sbr.rel (%p4081) target = $region44
        $region43: #{basic_block_forward.1} parent=39 // pred_region
          %s4084 = sand.u32 %s94, 1
          %s4085 = scalar_lea.sflag [#allocation3], %s4084
          %s4086 = sand.u32 %s94, 1
          %s4087 = smul.addr %s4086, 256
          %s4088 = scalar_lea.vmem [#allocation2], %s4087
          %4089 = dma.done %s4085, 4096
        $region44: #{basic_block_forward.1} parent=39 // pred_fallthru
          _
      $region40: #{basic_block_forward.1} parent=5 // pred_fallthru
        _
    $region6: #{basic_block_forward.1} parent=1 // loop_footer
      %s16 = sadd.s32 1, %s12
    $region7: #{basic_block_forward.1} parent=1 // loop_footer_branch
      %11 = sbr.rel target = $region3
    $region8: #{basic_block_forward.1} parent=1 // loop_exit
      _
    %4090 = vsyncpa [#allocation3], 1
    %s4091 = scalar_lea.sflag [#allocation3], 1
    %4092 = vsyncpa %s4091, 1

</llo_original>
